<compile_context>
chip_gen: v6e
topology: v6e:2x2x1
jax: 0.10.0
libtpu: 0.0.40
codegen_flags: <defaults>
</compile_context>

<pallas_src>
import jax
import jax.numpy as jnp
from jax.experimental import pallas as pl
from jax.experimental.pallas import tpu as pltpu

_BN_EPS = 1e-5
_VMEM_LIMIT = 48 * 1024 * 1024      # < 64 MiB physical on v7x; >32 MiB for v5e/v6e


def _cparams(*sem):
    return pltpu.CompilerParams(dimension_semantics=sem,
                                vmem_limit_bytes=_VMEM_LIMIT)


def _sigmoid(z):
    return 1.0 / (1.0 + jnp.exp(-z))


def _round_up(x, m):
    return ((x + m - 1) // m) * m


def _pick_div(n, candidates):
    for t in candidates:
        if n % t == 0:
            return t
    return n


_ROW_TILES = (16384, 8192, 4096, 2048, 1024, 512, 256, 128, 64, 32, 16, 8)


# ---------------------------------------------------------------------------
# Shared conv body: 3x3x3 "same" conv of one zero-padded batch element.
#   x_ref : (1, W+2, D+2, H+2, Cin)  bf16 channels-last
#   w_ref : (3, 9*Cin, Cout)         bf16; row index = kd*3*Cin + kh*Cin + cin
# kh and kd are folded into the contraction (K = 9*Cin), built ONCE per batch
# element, so the MXU sees 3 deep matmuls instead of 27 shallow ones.
# ---------------------------------------------------------------------------
def _conv3x3x3(x_ref, w_ref):
    _, Wp, Dp, Hp, Cin = x_ref.shape
    W, D, H = Wp - 2, Dp - 2, Hp - 2
    M = W * D * H
    K = 9 * Cin
    x = x_ref[0]                                                  # (W+2, D+2, H+2, Cin)
    # fold kh (hoisted out of the tap loop)
    xh = jnp.concatenate([x[:, :, 0:H, :],
                          x[:, :, 1:H + 1, :],
                          x[:, :, 2:H + 2, :]], axis=-1)          # (W+2, D+2, H, 3*Cin)
    # fold kd
    xhd = jnp.concatenate([xh[:, 0:D, :, :],
                           xh[:, 1:D + 1, :, :],
                           xh[:, 2:D + 2, :, :]], axis=-1)        # (W+2, D, H, 9*Cin)
    acc = jnp.dot(xhd[0:W].reshape(M, K), w_ref[0],
                  preferred_element_type=jnp.float32)
    acc = acc + jnp.dot(xhd[1:W + 1].reshape(M, K), w_ref[1],
                        preferred_element_type=jnp.float32)
    acc = acc + jnp.dot(xhd[2:W + 2].reshape(M, K), w_ref[2],
                        preferred_element_type=jnp.float32)
    return acc                                                     # (M, Cout) f32


# ---------------------------------------------------------------------------
# Kernel 1: neck conv — Conv3d(k=3,pad=1) + per-batch sum/sumsq for BatchNorm.
# Activation written back bf16, stats f32.
# ---------------------------------------------------------------------------
def _neck_conv_stats_kernel(x_ref, w_ref, b_ref, o_ref, s_ref):
    conv = _conv3x3x3(x_ref, w_ref) + b_ref[...]                  # (M, Cout) f32
    o_ref[0, :, :] = conv.astype(o_ref.dtype)
    s_ref[0, 0:1, :] = jnp.sum(conv, axis=0, keepdims=True)
    s_ref[0, 1:2, :] = jnp.sum(conv * conv, axis=0, keepdims=True)


def neck_conv_stats(xp, w3, b):
    B, Wp, Dp, Hp, Cin = xp.shape
    W, D, H = Wp - 2, Dp - 2, Hp - 2
    M = W * D * H
    Cout = w3.shape[-1]
    conv, stats = pl.pallas_call(
        _neck_conv_stats_kernel,
        grid=(B,),
        in_specs=[
            pl.BlockSpec((1, Wp, Dp, Hp, Cin), lambda bb: (bb, 0, 0, 0, 0)),
            pl.BlockSpec((3, 9 * Cin, Cout), lambda bb: (0, 0, 0)),
            pl.BlockSpec((1, Cout), lambda bb: (0, 0)),
        ],
        out_specs=[
            pl.BlockSpec((1, M, Cout), lambda bb: (bb, 0, 0)),
            pl.BlockSpec((1, 2, Cout), lambda bb: (bb, 0, 0)),
        ],
        out_shape=[
            jax.ShapeDtypeStruct((B, M, Cout), jnp.bfloat16),
            jax.ShapeDtypeStruct((B, 2, Cout), jnp.float32),
        ],
        compiler_params=_cparams("parallel"),
    )(xp, w3, b)
    return conv, stats


# ---------------------------------------------------------------------------
# Kernel 2: BatchNorm (precomputed scale/shift) + ReLU.
# Lane-dense path views (N, C) as (N*C/128, 128) with scale/shift tiled across
# the 128 lanes (needs C | 128); otherwise falls back to channel-minor blocks.
# ---------------------------------------------------------------------------
def _bn_relu_kernel(x_ref, scale_ref, shift_ref, o_ref):
    y = x_ref[...].astype(jnp.float32) * scale_ref[...] + shift_ref[...]
    o_ref[...] = jnp.maximum(y, 0.0).astype(o_ref.dtype)


def _bn_relu_call(x2, s2, t2, tm):
    rows, lanes = x2.shape
    return pl.pallas_call(
        _bn_relu_kernel,
        grid=(rows // tm,),
        in_specs=[
            pl.BlockSpec((tm, lanes), lambda i: (i, 0)),
            pl.BlockSpec((1, lanes), lambda i: (0, 0)),
            pl.BlockSpec((1, lanes), lambda i: (0, 0)),
        ],
        out_specs=pl.BlockSpec((tm, lanes), lambda i: (i, 0)),
        out_shape=jax.ShapeDtypeStruct((rows, lanes), jnp.bfloat16),
        compiler_params=_cparams("parallel"),
    )(x2, s2, t2)


def bn_relu(conv_flat, scale, shift):
    N, Cout = conv_flat.shape
    if 128 % Cout == 0 and (N * Cout) % 128 == 0:
        rep = 128 // Cout
        rows = (N * Cout) // 128
        x2 = conv_flat.reshape(rows, 128)                # free relayout on HBM array
        out = _bn_relu_call(x2, jnp.tile(scale, (1, rep)), jnp.tile(shift, (1, rep)),
                            _pick_div(rows, _ROW_TILES))
        return out.reshape(N, Cout)
    return _bn_relu_call(conv_flat, scale, shift, _pick_div(N, _ROW_TILES))


# ---------------------------------------------------------------------------
# Kernel 3: position head — Conv3d(Cout=1) + sigmoid + mask + (-inf) + softmax
# fused per batch element (whole spatial row resident).
# ---------------------------------------------------------------------------
def _pos_head_kernel(x_ref, w_ref, b_ref, mask_ref, o_ref):
    z = _conv3x3x3(x_ref, w_ref) + b_ref[...]                     # (M, 1) f32
    mask_i = mask_ref[0].astype(jnp.int32).astype(jnp.float32)    # pos_mask.type(int64)
    y = _sigmoid(z) * mask_i
    y = jnp.where(y == 0.0, -jnp.inf, y)                          # x[x == 0] = -inf
    m = jnp.max(y, axis=0, keepdims=True)
    e = jnp.exp(y - m)
    s = jnp.sum(e, axis=0, keepdims=True)
    o_ref[0, :, :] = e * pl.reciprocal(s, approx=True)


def pos_head_softmax(xp, w3, b, mask_col):
    B, Wp, Dp, Hp, Cin = xp.shape
    W, D, H = Wp - 2, Dp - 2, Hp - 2
    M = W * D * H
    return pl.pallas_call(
        _pos_head_kernel,
        grid=(B,),
        in_specs=[
            pl.BlockSpec((1, Wp, Dp, Hp, Cin), lambda bb: (bb, 0, 0, 0, 0)),
            pl.BlockSpec((3, 9 * Cin, 1), lambda bb: (0, 0, 0)),
            pl.BlockSpec((1, 1), lambda bb: (0, 0)),
            pl.BlockSpec((1, M, 1), lambda bb: (bb, 0, 0)),
        ],
        out_specs=pl.BlockSpec((1, M, 1), lambda bb: (bb, 0, 0)),
        out_shape=jax.ShapeDtypeStruct((B, M, 1), jnp.float32),
        compiler_params=_cparams("parallel"),
    )(xp, w3, b, mask_col)


# ---------------------------------------------------------------------------
# Kernel 4: params head conv — Conv3d + separable AdaptiveMaxPool3d((A,A,A)).
# Pool order: W, then D (VPU max across vregs), H (cross-sublane XLU) last.
# ---------------------------------------------------------------------------
def _params_conv_pool_kernel(x_ref, w_ref, b_ref, o_ref, pw_ref, pd_ref):
    _, Wp, Dp, Hp, Cin = x_ref.shape
    W, D, H = Wp - 2, Dp - 2, Hp - 2
    Cout = o_ref.shape[-1]
    A = o_ref.shape[1]
    conv = (_conv3x3x3(x_ref, w_ref) + b_ref[...]).reshape(W, D, H, Cout)
    # exact PyTorch floor/ceil adaptive bin boundaries
    for iw in range(A):
        w0, w1 = (iw * W) // A, -((-(iw + 1) * W) // A)
        pw_ref[iw, :, :, :] = jnp.max(conv[w0:w1], axis=0)        # (D, H, Cout)
    pw = pw_ref[...]                                              # (A, D, H, Cout)
    for idd in range(A):
        d0, d1 = (idd * D) // A, -((-(idd + 1) * D) // A)
        pd_ref[:, idd, :, :] = jnp.max(pw[:, d0:d1], axis=1)      # (A, H, Cout)
    pd = pd_ref[...]                                              # (A, A, H, Cout)
    for ih in range(A):
        h0, h1 = (ih * H) // A, -((-(ih + 1) * H) // A)
        o_ref[0, :, :, ih, :] = jnp.max(pd[:, :, h0:h1, :], axis=2)


def params_conv_pool(xp, w3, b, A):
    B, Wp, Dp, Hp, Cin = xp.shape
    W, D, H = Wp - 2, Dp - 2, Hp - 2
    Cout = w3.shape[-1]
    return pl.pallas_call(
        _params_conv_pool_kernel,
        grid=(B,),
        in_specs=[
            pl.BlockSpec((1, Wp, Dp, Hp, Cin), lambda bb: (bb, 0, 0, 0, 0)),
            pl.BlockSpec((3, 9 * Cin, Cout), lambda bb: (0, 0, 0)),
            pl.BlockSpec((1, Cout), lambda bb: (0, 0)),
        ],
        out_specs=pl.BlockSpec((1, A, A, A, Cout), lambda bb: (bb, 0, 0, 0, 0)),
        out_shape=jax.ShapeDtypeStruct((B, A, A, A, Cout), jnp.float32),
        scratch_shapes=[
            pltpu.VMEM((A, D, H, Cout), jnp.float32),
            pltpu.VMEM((A, A, H, Cout), jnp.float32),
        ],
        compiler_params=_cparams("parallel"),
    )(xp, w3, b)


# ---------------------------------------------------------------------------
# Kernel 5: Linear + sigmoid + batchwise softmax numerator.
#   softmax(sigmoid(z)) == exp(sigmoid(z) - 1) / sum(exp(sigmoid(z) - 1))
# x is fully VMEM-resident; grid only over output-column tiles (full-K weight
# tiles); padded output columns are zeroed with a validity mask input.
# ---------------------------------------------------------------------------
def _fc_sigmoid_exp_kernel(x_ref, w_ref, b_ref, valid_ref, e_ref):
    z = jnp.dot(x_ref[...], w_ref[...],
                preferred_element_type=jnp.float32) + b_ref[...]
    y = _sigmoid(z)
    e_ref[...] = jnp.exp(y - 1.0) * valid_ref[...]


def _scale_cols_kernel(e_ref, inv_ref, o_ref):
    o_ref[...] = e_ref[...] * inv_ref[...]


def linear_sigmoid_softmax(x, w_pad, b_pad, valid, fout):
    B, fin_p = x.shape
    fout_p = w_pad.shape[-1]
    # full-K weight tiles, each <= ~8 MiB bf16 (double-buffered by the pipeline)
    budget = 8 * 1024 * 1024
    tn = fout_p
    for cand in (4096, 2048, 1024, 512, 256, 128):
        if fout_p % cand == 0 and fin_p * cand * 2 <= budget:
            tn = cand
            break
    e = pl.pallas_call(
        _fc_sigmoid_exp_kernel,
        grid=(fout_p // tn,),
        in_specs=[
            pl.BlockSpec((B, fin_p), lambda j: (0, 0)),      # x fully resident
            pl.BlockSpec((fin_p, tn), lambda j: (0, j)),
            pl.BlockSpec((1, tn), lambda j: (0, j)),
            pl.BlockSpec((1, tn), lambda j: (0, j)),
        ],
        out_specs=pl.BlockSpec((B, tn), lambda j: (0, j)),
        out_shape=jax.ShapeDtypeStruct((B, fout_p), jnp.float32),
        compiler_params=_cparams("parallel"),
    )(x, w_pad, b_pad, valid)
    inv = 1.0 / jnp.sum(e, axis=1, keepdims=True)            # tiny (B,1) exact finalize
    out = pl.pallas_call(
        _scale_cols_kernel,
        grid=(fout_p // tn,),
        in_specs=[
            pl.BlockSpec((B, tn), lambda j: (0, j)),
            pl.BlockSpec((B, 1), lambda j: (0, 0)),
        ],
        out_specs=pl.BlockSpec((B, tn), lambda j: (0, j)),
        out_shape=jax.ShapeDtypeStruct((B, fout_p), jnp.float32),
        compiler_params=_cparams("parallel"),
    )(e, inv)
    return out[:, :fout]


# ---------------------------------------------------------------------------
# Parameter initialization (mirrors the PyTorch inits, deterministic).
# ---------------------------------------------------------------------------
def _init_conv3d_kaiming(key, cin, cout):
    # kaiming_normal_(mode='fan_out', nonlinearity='relu'): std = sqrt(2 / (cout*27))
    std = (2.0 / (cout * 27)) ** 0.5
    w = jax.random.normal(key, (3, 3, 3, cin, cout), jnp.float32) * std
    # pack: per-kw tile, contraction row = kd*3*cin + kh*cin + cin_idx
    w3 = w.reshape(3, 9 * cin, cout).astype(jnp.bfloat16)
    return w3, jnp.zeros((1, cout), jnp.float32)


def _init_linear_xavier(key, fin, fout):
    a = (6.0 / (fin + fout)) ** 0.5
    w = jax.random.uniform(key, (fin, fout), jnp.float32, minval=-a, maxval=a)
    return w, jnp.zeros((fout,), jnp.float32)


class OCPPPOPolicyNetPallas:
    def __init__(self, key, hidden_dim, action_dim, cam_types, neck_layers,
                 neck_out_use_num, pan_section_num=360, tilt_section_num=180,
                 adaptive_pooling_dim=10):
        assert neck_out_use_num <= neck_layers
        self.cam_types = cam_types
        self.action_dim = action_dim          # unused in forward (kept for parity)
        self.neck_out_use_num = neck_out_use_num
        self.adaptive_pooling_dim = adaptive_pooling_dim

        keys = jax.random.split(key, neck_layers + 3)
        self.neck = []
        for layer in range(neck_layers):
            cin = 2 if layer == 0 else hidden_dim // 2 ** (layer - 1)
            cout = hidden_dim // 2 ** layer
            w3, b = _init_conv3d_kaiming(keys[layer], cin, cout)
            self.neck.append(dict(w=w3, b=b,
                                  gamma=jnp.ones((1, cout), jnp.float32),
                                  beta=jnp.zeros((1, cout), jnp.float32)))

        cat_dim = hidden_dim * (2 ** neck_out_use_num - 1) // 2 ** (neck_layers - 1)
        self.pos_w, self.pos_b = _init_conv3d_kaiming(keys[neck_layers], cat_dim, 1)

        pconv_out = (cat_dim + 1) // 2
        self.par_conv_w, self.par_conv_b = _init_conv3d_kaiming(
            keys[neck_layers + 1], cat_dim + 1, pconv_out)

        out_features = (pan_section_num * (tilt_section_num - 1) + 1) * cam_types
        fin = pconv_out * adaptive_pooling_dim ** 3
        fc_w, fc_b = _init_linear_xavier(keys[neck_layers + 2], fin, out_features)
        fin_p, fout_p = _round_up(fin, 128), _round_up(out_features, 128)
        self.fc_w = (jnp.zeros((fin_p, fout_p), jnp.float32)
                     .at[:fin, :out_features].set(fc_w).astype(jnp.bfloat16))
        self.fc_b = jnp.zeros((1, fout_p), jnp.float32).at[0, :out_features].set(fc_b)
        self.fc_valid = (jnp.zeros((1, fout_p), jnp.float32)
                         .at[0, :out_features].set(1.0))
        self.fin, self.fin_p = fin, fin_p
        self.out_features = out_features

    def __call__(self, input_ncdhw, pos_mask_ncdhw):
        assert input_ncdhw.ndim == 5, "Input should be shaped [B, 1, W, D, H]."
        B, _, W, D, H = input_ncdhw.shape
        A = self.adaptive_pooling_dim
        M = W * D * H

        # NCDHW -> channels-last
        x = jnp.transpose(input_ncdhw, (0, 2, 3, 4, 1)).astype(jnp.float32)
        mask = jnp.transpose(pos_mask_ncdhw, (0, 2, 3, 4, 1)).astype(jnp.float32)

        cur = jnp.concatenate([x, mask], axis=-1).astype(jnp.bfloat16)  # cat(input, mask)
        neck_out = [cur]
        for p in self.neck:
            cout = p['w'].shape[-1]
            xp = jnp.pad(cur, ((0, 0), (1, 1), (1, 1), (1, 1), (0, 0)))
            conv, stats = neck_conv_stats(xp, p['w'], p['b'])            # bf16 / f32
            # BatchNorm3d (training-mode biased batch stats), finalized on (B,2,C).
            cnt = float(B * M)
            ssum = jnp.sum(stats[:, 0, :], axis=0, keepdims=True)
            ssq = jnp.sum(stats[:, 1, :], axis=0, keepdims=True)
            mean = ssum / cnt
            var = jnp.maximum(ssq / cnt - mean * mean, 0.0)
            scale = p['gamma'] * jax.lax.rsqrt(var + _BN_EPS)
            shift = p['beta'] - mean * scale
            act = bn_relu(conv.reshape(B * M, cout), scale, shift)       # bf16
            cur = act.reshape(B, W, D, H, cout)
            neck_out.append(cur)

        head_input = jnp.concatenate(neck_out[-self.neck_out_use_num:], axis=-1)

        # position head: Conv3d(Cout=1) + sigmoid + mask/-inf + batchwise softmax
        # fused in one kernel.
        hp = jnp.pad(head_input, ((0, 0), (1, 1), (1, 1), (1, 1), (0, 0)))
        pos = pos_head_softmax(hp, self.pos_w, self.pos_b,
                               mask.reshape(B, M, 1))                    # (B, M, 1)
        pos_dist = pos.reshape(B, M)

        # params head: concat pos_dist as extra channel, conv + adaptive max pool.
        pos_sp = pos.reshape(B, W, D, H, 1).astype(jnp.bfloat16)
        xcat = jnp.concatenate([head_input, pos_sp], axis=-1)
        xcp = jnp.pad(xcat, ((0, 0), (1, 1), (1, 1), (1, 1), (0, 0)))
        pooled = params_conv_pool(xcp, self.par_conv_w, self.par_conv_b, A)
        # flatten in torch NCDHW order: (C, A, A, A)
        feat = jnp.transpose(pooled, (0, 4, 1, 2, 3)).reshape(B, self.fin)
        feat_p = jnp.pad(feat, ((0, 0), (0, self.fin_p - self.fin))).astype(jnp.bfloat16)
        param_dist = linear_sigmoid_softmax(feat_p, self.fc_w, self.fc_b,
                                            self.fc_valid, self.out_features)
        return pos_dist, param_dist


if __name__ == "__main__":
    key = jax.random.PRNGKey(0)
    k_param, k_in, k_mask = jax.random.split(key, 3)

    B, W, D, H = 2, 8, 8, 8
    net = OCPPPOPolicyNetPallas(
        k_param, hidden_dim=32, action_dim=5, cam_types=2,
        neck_layers=2, neck_out_use_num=2,
        pan_section_num=8, tilt_section_num=4, adaptive_pooling_dim=4)

    # input: 0 invisible / 1 blocked / 2 visible ; pos_mask: {0, 1}
    inp = jax.random.randint(k_in, (B, 1, W, D, H), 0, 3).astype(jnp.float32)
    mask = (jax.random.uniform(k_mask, (B, 1, W, D, H)) < 0.5).astype(jnp.float32)
    mask = mask.at[:, 0, 0, 0, 0].set(1.0)   # ensure >=1 valid position per batch row

    pos_dist, param_dist = net(inp, mask)
    jax.block_until_ready((pos_dist, param_dist))

    assert pos_dist.shape == (B, W * D * H)
    assert param_dist.shape == (B, (8 * (4 - 1) + 1) * 2)
    assert bool(jnp.all(jnp.isfinite(pos_dist)))
    assert bool(jnp.all(jnp.isfinite(param_dist)))
    assert bool(jnp.all(jnp.abs(jnp.sum(pos_dist, axis=1) - 1.0) < 5e-2))
    assert bool(jnp.all(jnp.abs(jnp.sum(param_dist, axis=1) - 1.0) < 5e-2))
    print("KERNEL_OK")
</pallas_src>

<mosaic_0001>
module attributes {stable_mosaic.version = 11 : i64} {
  func.func @_neck_conv_stats_kernel(%arg0: i32, %arg1: memref<1x10x10x10x2xbf16, #tpu.memory_space<vmem>>, %arg2: memref<3x18x32xbf16, #tpu.memory_space<vmem>>, %arg3: memref<1x32xf32, #tpu.memory_space<vmem>>, %arg4: memref<1x512x32xbf16, #tpu.memory_space<vmem>>, %arg5: memref<1x2x32xf32, #tpu.memory_space<vmem>>) attributes {dimension_semantics = [#tpu.dimension_semantics<parallel>], iteration_bounds = array<i64: 2>, scalar_prefetch = 0 : i64, scratch_operands = 0 : i64, tpu.core_type = #tpu.core_type<tc>, window_params = [{transform_indices = @transform_0, window_bounds = array<i64: 1, 10, 10, 10, 2>}, {pipeline_mode = #tpu.pipeline_mode<synchronous>, transform_indices = @transform_1, window_bounds = array<i64: 3, 18, 32>}, {pipeline_mode = #tpu.pipeline_mode<synchronous>, transform_indices = @transform_2, window_bounds = array<i64: 1, 32>}, {transform_indices = @transform_3, window_bounds = array<i64: 1, 512, 32>}, {transform_indices = @transform_4, window_bounds = array<i64: 1, 2, 32>}]} {
    %c0 = arith.constant 0 : index
    %c0_0 = arith.constant 0 : index
    %c0_1 = arith.constant 0 : index
    %c0_2 = arith.constant 0 : index
    %c0_3 = arith.constant 0 : index
    %0 = vector.load %arg1[%c0, %c0_0, %c0_1, %c0_2, %c0_3] : memref<1x10x10x10x2xbf16, #tpu.memory_space<vmem>>, vector<1x10x10x10x2xbf16>
    %1 = vector.shape_cast %0 : vector<1x10x10x10x2xbf16> to vector<10x10x10x2xbf16>
    %2 = vector.extract_strided_slice %1 {offsets = [0, 0, 0, 0], sizes = [10, 10, 8, 2], strides = [1, 1, 1, 1]} : vector<10x10x10x2xbf16> to vector<10x10x8x2xbf16>
    %3 = vector.extract_strided_slice %1 {offsets = [0, 0, 1, 0], sizes = [10, 10, 8, 2], strides = [1, 1, 1, 1]} : vector<10x10x10x2xbf16> to vector<10x10x8x2xbf16>
    %4 = vector.extract_strided_slice %1 {offsets = [0, 0, 2, 0], sizes = [10, 10, 8, 2], strides = [1, 1, 1, 1]} : vector<10x10x10x2xbf16> to vector<10x10x8x2xbf16>
    %5 = tpu.concatenate %2, %3, %4 in 3 : vector<10x10x8x2xbf16>, vector<10x10x8x2xbf16>, vector<10x10x8x2xbf16> -> vector<10x10x8x6xbf16>
    %6 = vector.extract_strided_slice %5 {offsets = [0, 0, 0, 0], sizes = [10, 8, 8, 6], strides = [1, 1, 1, 1]} : vector<10x10x8x6xbf16> to vector<10x8x8x6xbf16>
    %7 = vector.extract_strided_slice %5 {offsets = [0, 1, 0, 0], sizes = [10, 8, 8, 6], strides = [1, 1, 1, 1]} : vector<10x10x8x6xbf16> to vector<10x8x8x6xbf16>
    %8 = vector.extract_strided_slice %5 {offsets = [0, 2, 0, 0], sizes = [10, 8, 8, 6], strides = [1, 1, 1, 1]} : vector<10x10x8x6xbf16> to vector<10x8x8x6xbf16>
    %9 = tpu.concatenate %6, %7, %8 in 3 : vector<10x8x8x6xbf16>, vector<10x8x8x6xbf16>, vector<10x8x8x6xbf16> -> vector<10x8x8x18xbf16>
    %10 = vector.extract_strided_slice %9 {offsets = [0, 0, 0, 0], sizes = [8, 8, 8, 18], strides = [1, 1, 1, 1]} : vector<10x8x8x18xbf16> to vector<8x8x8x18xbf16>
    %11 = vector.shape_cast %10 : vector<8x8x8x18xbf16> to vector<512x18xbf16>
    %c0_4 = arith.constant 0 : index
    %c0_5 = arith.constant 0 : index
    %c0_6 = arith.constant 0 : index
    %12 = vector.load %arg2[%c0_4, %c0_5, %c0_6] : memref<3x18x32xbf16, #tpu.memory_space<vmem>>, vector<1x18x32xbf16>
    %13 = vector.shape_cast %12 : vector<1x18x32xbf16> to vector<18x32xbf16>
    %cst = arith.constant dense<0.000000e+00> : vector<512x32xf32>
    %14 = tpu.matmul %11, %13, %cst {dimension_numbers = #tpu.dot_dimension_numbers<[1], [0], [0], [1], [0, 0, 1, 1], [], []>} : vector<512x18xbf16>, vector<18x32xbf16>, vector<512x32xf32> -> vector<512x32xf32>
    %15 = vector.extract_strided_slice %9 {offsets = [1, 0, 0, 0], sizes = [8, 8, 8, 18], strides = [1, 1, 1, 1]} : vector<10x8x8x18xbf16> to vector<8x8x8x18xbf16>
    %16 = vector.shape_cast %15 : vector<8x8x8x18xbf16> to vector<512x18xbf16>
    %c1 = arith.constant 1 : index
    %c0_7 = arith.constant 0 : index
    %c0_8 = arith.constant 0 : index
    %17 = vector.load %arg2[%c1, %c0_7, %c0_8] : memref<3x18x32xbf16, #tpu.memory_space<vmem>>, vector<1x18x32xbf16>
    %18 = vector.shape_cast %17 : vector<1x18x32xbf16> to vector<18x32xbf16>
    %cst_9 = arith.constant dense<0.000000e+00> : vector<512x32xf32>
    %19 = tpu.matmul %16, %18, %cst_9 {dimension_numbers = #tpu.dot_dimension_numbers<[1], [0], [0], [1], [0, 0, 1, 1], [], []>} : vector<512x18xbf16>, vector<18x32xbf16>, vector<512x32xf32> -> vector<512x32xf32>
    %20 = arith.addf %14, %19 : vector<512x32xf32>
    %21 = vector.extract_strided_slice %9 {offsets = [2, 0, 0, 0], sizes = [8, 8, 8, 18], strides = [1, 1, 1, 1]} : vector<10x8x8x18xbf16> to vector<8x8x8x18xbf16>
    %22 = vector.shape_cast %21 : vector<8x8x8x18xbf16> to vector<512x18xbf16>
    %c2 = arith.constant 2 : index
    %c0_10 = arith.constant 0 : index
    %c0_11 = arith.constant 0 : index
    %23 = vector.load %arg2[%c2, %c0_10, %c0_11] : memref<3x18x32xbf16, #tpu.memory_space<vmem>>, vector<1x18x32xbf16>
    %24 = vector.shape_cast %23 : vector<1x18x32xbf16> to vector<18x32xbf16>
    %cst_12 = arith.constant dense<0.000000e+00> : vector<512x32xf32>
    %25 = tpu.matmul %22, %24, %cst_12 {dimension_numbers = #tpu.dot_dimension_numbers<[1], [0], [0], [1], [0, 0, 1, 1], [], []>} : vector<512x18xbf16>, vector<18x32xbf16>, vector<512x32xf32> -> vector<512x32xf32>
    %26 = arith.addf %20, %25 : vector<512x32xf32>
    %c0_13 = arith.constant 0 : index
    %c0_14 = arith.constant 0 : index
    %27 = vector.load %arg3[%c0_13, %c0_14] : memref<1x32xf32, #tpu.memory_space<vmem>>, vector<1x32xf32>
    %28 = vector.broadcast %27 : vector<1x32xf32> to vector<512x32xf32>
    %29 = arith.addf %26, %28 : vector<512x32xf32>
    %30 = arith.truncf %29 : vector<512x32xf32> to vector<512x32xbf16>
    %c0_15 = arith.constant 0 : index
    %c0_16 = arith.constant 0 : index
    %c0_17 = arith.constant 0 : index
    %31 = vector.load %arg4[%c0_15, %c0_16, %c0_17] : memref<1x512x32xbf16, #tpu.memory_space<vmem>>, vector<1x512x32xbf16>
    %32 = vector.shape_cast %31 : vector<1x512x32xbf16> to vector<512x32xbf16>
    %33 = vector.shape_cast %30 : vector<512x32xbf16> to vector<1x512x32xbf16>
    tpu.vector_store %arg4[%c0_15, %c0_16, %c0_17], %33 {strides = array<i32>} : memref<1x512x32xbf16, #tpu.memory_space<vmem>>, vector<1x512x32xbf16>,
    %cst_18 = arith.constant dense<0.000000e+00> : vector<32xf32>
    %34 = vector.multi_reduction <add>, %29, %cst_18 [0] : vector<512x32xf32> to vector<32xf32>
    %35 = vector.shape_cast %34 : vector<32xf32> to vector<1x32xf32>
    %c0_19 = arith.constant 0 : index
    %c0_20 = arith.constant 0 : index
    %c0_21 = arith.constant 0 : index
    %36 = vector.load %arg5[%c0_19, %c0_20, %c0_21] : memref<1x2x32xf32, #tpu.memory_space<vmem>>, vector<1x1x32xf32>
    %37 = vector.shape_cast %36 : vector<1x1x32xf32> to vector<1x32xf32>
    %38 = vector.shape_cast %35 : vector<1x32xf32> to vector<1x1x32xf32>
    tpu.vector_store %arg5[%c0_19, %c0_20, %c0_21], %38 {strides = array<i32>} : memref<1x2x32xf32, #tpu.memory_space<vmem>>, vector<1x1x32xf32>,
    %39 = arith.mulf %29, %29 : vector<512x32xf32>
    %cst_22 = arith.constant dense<0.000000e+00> : vector<32xf32>
    %40 = vector.multi_reduction <add>, %39, %cst_22 [0] : vector<512x32xf32> to vector<32xf32>
    %41 = vector.shape_cast %40 : vector<32xf32> to vector<1x32xf32>
    %c0_23 = arith.constant 0 : index
    %c1_24 = arith.constant 1 : index
    %c0_25 = arith.constant 0 : index
    %42 = vector.load %arg5[%c0_23, %c1_24, %c0_25] : memref<1x2x32xf32, #tpu.memory_space<vmem>>, vector<1x1x32xf32>
    %43 = vector.shape_cast %42 : vector<1x1x32xf32> to vector<1x32xf32>
    %44 = vector.shape_cast %41 : vector<1x32xf32> to vector<1x1x32xf32>
    tpu.vector_store %arg5[%c0_23, %c1_24, %c0_25], %44 {strides = array<i32>} : memref<1x2x32xf32, #tpu.memory_space<vmem>>, vector<1x1x32xf32>,
    return
  }
  func.func @transform_0(%arg0: i32) -> (i32, i32, i32, i32, i32) {
    %c0_i32 = arith.constant 0 : i32
    %c0_i32_0 = arith.constant 0 : i32
    %c0_i32_1 = arith.constant 0 : i32
    %c0_i32_2 = arith.constant 0 : i32
    %c0_i32_3 = arith.constant 0 : i32
    return %arg0, %c0_i32, %c0_i32_0, %c0_i32_1, %c0_i32_2 : i32, i32, i32, i32, i32
  }
  func.func @transform_1(%arg0: i32) -> (i32, i32, i32) {
    %c0_i32 = arith.constant 0 : i32
    %c0_i32_0 = arith.constant 0 : i32
    %c0_i32_1 = arith.constant 0 : i32
    %c0_i32_2 = arith.constant 0 : i32
    return %c0_i32, %c0_i32_0, %c0_i32_1 : i32, i32, i32
  }
  func.func @transform_2(%arg0: i32) -> (i32, i32) {
    %c0_i32 = arith.constant 0 : i32
    %c0_i32_0 = arith.constant 0 : i32
    %c0_i32_1 = arith.constant 0 : i32
    return %c0_i32, %c0_i32_0 : i32, i32
  }
  func.func @transform_3(%arg0: i32) -> (i32, i32, i32) {
    %c0_i32 = arith.constant 0 : i32
    %c0_i32_0 = arith.constant 0 : i32
    %c0_i32_1 = arith.constant 0 : i32
    return %arg0, %c0_i32, %c0_i32_0 : i32, i32, i32
  }
  func.func @transform_4(%arg0: i32) -> (i32, i32, i32) {
    %c0_i32 = arith.constant 0 : i32
    %c0_i32_0 = arith.constant 0 : i32
    %c0_i32_1 = arith.constant 0 : i32
    return %arg0, %c0_i32, %c0_i32_0 : i32, i32, i32
  }
}

</mosaic_0001>

<llo_original>
// kernel: tpu_custom_call.1
$region0: #{tpu_custom_call.1}
  #allocation0 [shape = 'u32[]', space=smem, size = 0x4, offset = 0x4, fixed_abs, tag = 'smem constant byte address 0x4 - core index']
  #allocation1 [shape = 'u32[144,128]{1,0:T(1,128)}', space=vmem, size = 0x12000, scoped, tag = 'internal scratch']
  %s0 = inlined_call_operand.vmem [shape: bf16[2,10,10,10,2], index: 0, kind: input, shape index: {}]
  %s1 = inlined_call_operand.vmem [shape: bf16[3,18,32], index: 1, kind: input, shape index: {}]
  %s2 = inlined_call_operand.vmem [shape: f32[1,32], index: 2, kind: input, shape index: {}]
  %s3 = inlined_call_operand.vmem [shape: bf16[2,512,32], index: 3, kind: output, shape index: {0}]
  %s4 = inlined_call_operand.hbm [shape: f32[2,2,32], index: 4, kind: output, shape index: {1}]
  %5 = xla_tuple %s3, %s4
  %s6 = sld [smem:[#allocation0]]
  $region53: #{tpu_custom_call.1} parent=0
    _
  %s8 = ssub.s32 1, %s6
  %s9 = scalar_select 0, %s8, %s6
  $region1: #{tpu_custom_call.1} parent=0
    #allocation2 [shape = 'u8[2048]{0}', space=vmem, size = 0x800, scoped, tag = 'output window, operand 1']
    #allocation3 [shape = 's32[2]{0}', space=sflag, size = 0x8, scoped, tag = 'scoped memory for tpu_custom_call.1']
    %10 = vsyncpa [#allocation3], 0
    %s11 = scalar_lea.sflag [#allocation3], 1
    %12 = vsyncpa %s11, 0
    loop: start=0, step=1, limit=4
    $region2: #{tpu_custom_call.1} parent=1 // loop_pre_header
      _
    $region3: #{tpu_custom_call.1} parent=1 // loop_header
      %s14 = sphi 0, %s18
      %p15 = scmp.ge.s32.totalorder %s14, 4
      %s24 = sphi 0, %s26
      %s27 = sphi 0, %s24
      %s28 = sphi 0, %s27
      %s44 = sphi 0, %s28
      %s48 = sphi 0, %s48
      %s50 = sphi 0, %s48
      %s51 = sphi 0, %s50
      %s65 = sphi 0, %s51
      %s69 = sphi 0, %s69
      %s71 = sphi 0, %s69
      %s72 = sphi 0, %s71
      %s86 = sphi 0, %s72
      %s92 = sphi 0, %s94
      %s95 = sphi 0, %s92
      %s96 = sphi 0, %s95
      %s112 = sphi 0, %s96
      %s118 = sphi 0, %s120
      %s121 = sphi 0, %s118
      %s122 = sphi 0, %s121
      %s138 = sphi 0, %s122
    $region4: #{tpu_custom_call.1} parent=1 // loop_header_branch
      %17 = sbr.rel (%p15) target = $region8
    $region5: #{tpu_custom_call.1} parent=1 // loop_body
      %s19 = ssub.s32 %s14, 1
      %s20 = ssub.s32 %s14, 2
      %s21 = sadd.s32 %s14, 1
      %s22 = ssub.s32 %s14, %s21
      %p23 = scmp.eq.s32.totalorder %s22, 0
      %s25 = sadd.s32 %s24, 1
      %s26 = scalar_select %p23, %s24, %s25
      %p29 = pneg %p23
      %p30 = scmp.eq.s32.totalorder %s14, 1
      %p31 = por %p29, %p30
      %p32 = scmp.ne.s32.totalorder %s24, %s27
      %p33 = scmp.eq.s32.totalorder %s14, 0
      %p34 = por %p32, %p33
      %p35 = scmp.ne.s32.totalorder %s24, %s27
      %p36 = scmp.eq.s32.totalorder %s19, 1
      %p37 = por %p35, %p36
      %p38 = scmp.ne.s32.totalorder %s27, %s28
      %p39 = scmp.eq.s32.totalorder %s19, 0
      %p40 = por %p38, %p39
      %p41 = scmp.ne.s32.totalorder %s27, %s28
      %p42 = scmp.eq.s32.totalorder %s20, 1
      %p43 = por %p41, %p42
      %p45 = scmp.ne.s32.totalorder %s28, %s44
      %p46 = scmp.eq.s32.totalorder %s20, 0
      %p47 = por %p45, %p46
      %s49 = sadd.s32 %s48, 1
      %p52 = scmp.eq.s32.totalorder %s14, 1
      %p53 = scmp.ne.s32.totalorder %s48, %s50
      %p54 = scmp.eq.s32.totalorder %s14, 0
      %p55 = por %p53, %p54
      %p56 = scmp.ne.s32.totalorder %s48, %s50
      %p57 = scmp.eq.s32.totalorder %s19, 1
      %p58 = por %p56, %p57
      %p59 = scmp.ne.s32.totalorder %s50, %s51
      %p60 = scmp.eq.s32.totalorder %s19, 0
      %p61 = por %p59, %p60
      %p62 = scmp.ne.s32.totalorder %s50, %s51
      %p63 = scmp.eq.s32.totalorder %s20, 1
      %p64 = por %p62, %p63
      %p66 = scmp.ne.s32.totalorder %s51, %s65
      %p67 = scmp.eq.s32.totalorder %s20, 0
      %p68 = por %p66, %p67
      %s70 = sadd.s32 %s69, 1
      %p73 = scmp.eq.s32.totalorder %s14, 1
      %p74 = scmp.ne.s32.totalorder %s69, %s71
      %p75 = scmp.eq.s32.totalorder %s14, 0
      %p76 = por %p74, %p75
      %p77 = scmp.ne.s32.totalorder %s69, %s71
      %p78 = scmp.eq.s32.totalorder %s19, 1
      %p79 = por %p77, %p78
      %p80 = scmp.ne.s32.totalorder %s71, %s72
      %p81 = scmp.eq.s32.totalorder %s19, 0
      %p82 = por %p80, %p81
      %p83 = scmp.ne.s32.totalorder %s71, %s72
      %p84 = scmp.eq.s32.totalorder %s20, 1
      %p85 = por %p83, %p84
      %p87 = scmp.ne.s32.totalorder %s72, %s86
      %p88 = scmp.eq.s32.totalorder %s20, 0
      %p89 = por %p87, %p88
      %s90 = ssub.s32 %s14, %s21
      %p91 = scmp.eq.s32.totalorder %s90, 0
      %s93 = sadd.s32 %s92, 1
      %s94 = scalar_select %p91, %s92, %s93
      %p97 = pneg %p91
      %p98 = scmp.eq.s32.totalorder %s14, 1
      %p99 = por %p97, %p98
      %p100 = scmp.ne.s32.totalorder %s92, %s95
      %p101 = scmp.eq.s32.totalorder %s14, 0
      %p102 = por %p100, %p101
      %p103 = scmp.ne.s32.totalorder %s92, %s95
      %p104 = scmp.eq.s32.totalorder %s19, 1
      %p105 = por %p103, %p104
      %p106 = scmp.ne.s32.totalorder %s95, %s96
      %p107 = scmp.eq.s32.totalorder %s19, 0
      %p108 = por %p106, %p107
      %p109 = scmp.ne.s32.totalorder %s95, %s96
      %p110 = scmp.eq.s32.totalorder %s20, 1
      %p111 = por %p109, %p110
      %p113 = scmp.ne.s32.totalorder %s96, %s112
      %p114 = scmp.eq.s32.totalorder %s20, 0
      %p115 = por %p113, %p114
      %s116 = ssub.s32 %s14, %s21
      %p117 = scmp.eq.s32.totalorder %s116, 0
      %s119 = sadd.s32 %s118, 1
      %s120 = scalar_select %p117, %s118, %s119
      %p123 = pneg %p117
      %p124 = scmp.eq.s32.totalorder %s14, 1
      %p125 = por %p123, %p124
      %p126 = scmp.ne.s32.totalorder %s118, %s121
      %p127 = scmp.eq.s32.totalorder %s14, 0
      %p128 = por %p126, %p127
      %p129 = scmp.ne.s32.totalorder %s118, %s121
      %p130 = scmp.eq.s32.totalorder %s19, 1
      %p131 = por %p129, %p130
      %p132 = scmp.ne.s32.totalorder %s121, %s122
      %p133 = scmp.eq.s32.totalorder %s19, 0
      %p134 = por %p132, %p133
      %p135 = scmp.ne.s32.totalorder %s121, %s122
      %p136 = scmp.eq.s32.totalorder %s20, 1
      %p137 = por %p135, %p136
      %p139 = scmp.ne.s32.totalorder %s122, %s138
      %p140 = scmp.eq.s32.totalorder %s20, 0
      %p141 = por %p139, %p140
      %p142 = scmp.le.s32.totalorder 1, %s14
      %p143 = scmp.lt.s32.totalorder %s14, 3
      %p144 = pnand %p142, %p143
      %p145 = pneg %p144
      // Predicated region
      $region9: #{tpu_custom_call.1} parent=5 // pred_check
        _
      $region10: #{tpu_custom_call.1} parent=5 // pred_check_branch
        %147 = sbr.rel (%p144) target = $region12
      $region11: #{tpu_custom_call.1} parent=5 // pred_region
        %s148 = ssub.s32 %s14, 1
        // Predicated region
        $region13: #{tpu_custom_call.1} parent=11 // pred_check
          %p149 = pneg %p61
        $region14: #{tpu_custom_call.1} parent=11 // pred_check_branch
          %151 = sbr.rel (%p149) target = $region16
        $region15: #{tpu_custom_call.1} parent=11 // pred_region
          _
        $region16: #{tpu_custom_call.1} parent=11 // pred_fallthru
          _
        // Predicated region
        $region17: #{tpu_custom_call.1} parent=11 // pred_check
          %p152 = pneg %p82
        $region18: #{tpu_custom_call.1} parent=11 // pred_check_branch
          %154 = sbr.rel (%p152) target = $region20
        $region19: #{tpu_custom_call.1} parent=11 // pred_region
          _
        $region20: #{tpu_custom_call.1} parent=11 // pred_fallthru
          _
      $region12: #{tpu_custom_call.1} parent=5 // pred_fallthru
        _
      %p155 = scmp.lt.s32.totalorder %s14, 2
      // Predicated region
      $region21: #{tpu_custom_call.1} parent=5 // pred_check
        %p156 = pneg %p155
      $region22: #{tpu_custom_call.1} parent=5 // pred_check_branch
        %158 = sbr.rel (%p156) target = $region24
      $region23: #{tpu_custom_call.1} parent=5 // pred_region
        // Predicated region
        $region25: #{tpu_custom_call.1} parent=23 // pred_check
          %p159 = pneg %p34
        $region26: #{tpu_custom_call.1} parent=23 // pred_check_branch
          %161 = sbr.rel (%p159) target = $region28
        $region27: #{tpu_custom_call.1} parent=23 // pred_region
          %p162 = scmp.lt.s32.totalorder %s14, 1
          %s163 = scalar_select %p162, %s14, 1
          %s164 = smul.addr %s163, 200
          %s165 = smul.addr %s164, 4
          %s166 = scalar_lea.vmem %s0, %s165
        $region28: #{tpu_custom_call.1} parent=23 // pred_fallthru
          _
      $region24: #{tpu_custom_call.1} parent=5 // pred_fallthru
        _
      %p167 = scmp.le.s32.totalorder 1, %s14
      %p168 = scmp.lt.s32.totalorder %s14, 3
      %p169 = pnand %p167, %p168
      %p170 = pneg %p169
      // Predicated region
      $region29: #{tpu_custom_call.1} parent=5 // pred_check
        _
      $region30: #{tpu_custom_call.1} parent=5 // pred_check_branch
        %172 = sbr.rel (%p169) target = $region32
      $region31: #{tpu_custom_call.1} parent=5 // pred_region
        %s173 = ssub.s32 %s14, 1
        %p174 = scmp.lt.s32.totalorder %s19, 1
        %s175 = scalar_select %p174, %s19, 1
        %s176 = smul.addr %s175, 200
        %s177 = smul.addr %s176, 4
        %s178 = scalar_lea.vmem %s0, %s177
        %p179 = pneg %p40
        %p180 = pneg %p37
        %p181 = pneg %p61
        %p182 = pneg %p58
        %p183 = pneg %p82
        %p184 = pneg %p79
        %p185 = pneg %p108
        %p186 = pneg %p105
        %p187 = scmp.lt.s32.totalorder %s19, 1
        %s188 = scalar_select %p187, %s19, 1
        %s189 = smul.addr %s188, 64
        %s190 = smul.addr %s189, 4
        %s191 = scalar_lea.vmem %s3, %s190
        %p192 = pneg %p134
        %p193 = pneg %p131
        %s194 = sand.u32 %s121, 1
        %s195 = scalar_lea.sflag [#allocation3], %s194
        %s196 = sand.u32 %s121, 1
        %s197 = smul.addr %s196, 2
        %s198 = scalar_lea.vmem [#allocation2], %s197
        %p199 = scmp.lt.s32.totalorder %s19, 1
        %s200 = scalar_select %p199, %s19, 1
        %s201 = smul.addr %s200, 200
        %s202 = smul.addr %s201, 4
        %s203 = scalar_lea.vmem %s0, %s202
        %p204 = scmp.lt.s32.totalorder %s19, 1
        %s205 = scalar_select %p204, %s19, 1
        %s206 = smul.addr %s205, 64
        %s207 = smul.addr %s206, 4
        %s208 = scalar_lea.vmem %s3, %s207
        %v210 = vld [vmem:[%s203] sm:$0xf]
        %v211 = vld [vmem:[%s203 + $0x4] sm:$0x1]
        %v212 = vld [vmem:[%s203 + $0x8] sm:$0xf]
        %v213 = vld [vmem:[%s203 + $0xc] sm:$0x1]
        %v214 = vld [vmem:[%s203 + $0x10] sm:$0xf]
        %v215 = vld [vmem:[%s203 + $0x14] sm:$0x1]
        %v216 = vld [vmem:[%s203 + $0x18] sm:$0xf]
        %v217 = vld [vmem:[%s203 + $0x1c] sm:$0x1]
        %v218 = vld [vmem:[%s203 + $0x20] sm:$0xf]
        %v219 = vld [vmem:[%s203 + $0x24] sm:$0x1]
        %v220 = vld [vmem:[%s203 + $0x28] sm:$0xf]
        %v221 = vld [vmem:[%s203 + $0x2c] sm:$0x1]
        %v222 = vld [vmem:[%s203 + $0x30] sm:$0xf]
        %v223 = vld [vmem:[%s203 + $0x34] sm:$0x1]
        %v224 = vld [vmem:[%s203 + $0x38] sm:$0xf]
        %v225 = vld [vmem:[%s203 + $0x3c] sm:$0x1]
        %v226 = vld [vmem:[%s203 + $0x40] sm:$0xf]
        %v227 = vld [vmem:[%s203 + $0x44] sm:$0x1]
        %v228 = vld [vmem:[%s203 + $0x48] sm:$0xf]
        %v229 = vld [vmem:[%s203 + $0x4c] sm:$0x1]
        %v230 = vld [vmem:[%s203 + $0x50] sm:$0xf]
        %v231 = vld [vmem:[%s203 + $0x54] sm:$0x1]
        %v232 = vld [vmem:[%s203 + $0x58] sm:$0xf]
        %v233 = vld [vmem:[%s203 + $0x5c] sm:$0x1]
        %v234 = vld [vmem:[%s203 + $0x60] sm:$0xf]
        %v235 = vld [vmem:[%s203 + $0x64] sm:$0x1]
        %v236 = vld [vmem:[%s203 + $0x68] sm:$0xf]
        %v237 = vld [vmem:[%s203 + $0x6c] sm:$0x1]
        %v238 = vld [vmem:[%s203 + $0x70] sm:$0xf]
        %v239 = vld [vmem:[%s203 + $0x74] sm:$0x1]
        %v240 = vld [vmem:[%s203 + $0x78] sm:$0xf]
        %v241 = vld [vmem:[%s203 + $0x7c] sm:$0x1]
        %v242 = vld [vmem:[%s203 + $0x80] sm:$0xf]
        %v243 = vld [vmem:[%s203 + $0x84] sm:$0x1]
        %v244 = vld [vmem:[%s203 + $0x88] sm:$0xf]
        %v245 = vld [vmem:[%s203 + $0x8c] sm:$0x1]
        %v246 = vld [vmem:[%s203 + $0x90] sm:$0xf]
        %v247 = vld [vmem:[%s203 + $0x94] sm:$0x1]
        %v248 = vld [vmem:[%s203 + $0x98] sm:$0xf]
        %v249 = vld [vmem:[%s203 + $0x9c] sm:$0x1]
        %v250 = vld [vmem:[%s203 + $0xa0] sm:$0xf]
        %v251 = vld [vmem:[%s203 + $0xa4] sm:$0x1]
        %v252 = vld [vmem:[%s203 + $0xa8] sm:$0xf]
        %v253 = vld [vmem:[%s203 + $0xac] sm:$0x1]
        %v254 = vld [vmem:[%s203 + $0xb0] sm:$0xf]
        %v255 = vld [vmem:[%s203 + $0xb4] sm:$0x1]
        %v256 = vld [vmem:[%s203 + $0xb8] sm:$0xf]
        %v257 = vld [vmem:[%s203 + $0xbc] sm:$0x1]
        %v258 = vld [vmem:[%s203 + $0xc0] sm:$0xf]
        %v259 = vld [vmem:[%s203 + $0xc4] sm:$0x1]
        %v260 = vld [vmem:[%s203 + $0xc8] sm:$0xf]
        %v261 = vld [vmem:[%s203 + $0xcc] sm:$0x1]
        %v262 = vld [vmem:[%s203 + $0xd0] sm:$0xf]
        %v263 = vld [vmem:[%s203 + $0xd4] sm:$0x1]
        %v264 = vld [vmem:[%s203 + $0xd8] sm:$0xf]
        %v265 = vld [vmem:[%s203 + $0xdc] sm:$0x1]
        %v266 = vld [vmem:[%s203 + $0xe0] sm:$0xf]
        %v267 = vld [vmem:[%s203 + $0xe4] sm:$0x1]
        %v268 = vld [vmem:[%s203 + $0xe8] sm:$0xf]
        %v269 = vld [vmem:[%s203 + $0xec] sm:$0x1]
        %v270 = vld [vmem:[%s203 + $0xf0] sm:$0xf]
        %v271 = vld [vmem:[%s203 + $0xf4] sm:$0x1]
        %v272 = vld [vmem:[%s203 + $0xf8] sm:$0xf]
        %v273 = vld [vmem:[%s203 + $0xfc] sm:$0x1]
        %v274 = vld [vmem:[%s203 + $0x100] sm:$0xf]
        %v275 = vld [vmem:[%s203 + $0x104] sm:$0x1]
        %v276 = vld [vmem:[%s203 + $0x108] sm:$0xf]
        %v277 = vld [vmem:[%s203 + $0x10c] sm:$0x1]
        %v278 = vld [vmem:[%s203 + $0x110] sm:$0xf]
        %v279 = vld [vmem:[%s203 + $0x114] sm:$0x1]
        %v280 = vld [vmem:[%s203 + $0x118] sm:$0xf]
        %v281 = vld [vmem:[%s203 + $0x11c] sm:$0x1]
        %v282 = vld [vmem:[%s203 + $0x120] sm:$0xf]
        %v283 = vld [vmem:[%s203 + $0x124] sm:$0x1]
        %v284 = vld [vmem:[%s203 + $0x128] sm:$0xf]
        %v285 = vld [vmem:[%s203 + $0x12c] sm:$0x1]
        %v286 = vld [vmem:[%s203 + $0x130] sm:$0xf]
        %v287 = vld [vmem:[%s203 + $0x134] sm:$0x1]
        %v288 = vld [vmem:[%s203 + $0x138] sm:$0xf]
        %v289 = vld [vmem:[%s203 + $0x13c] sm:$0x1]
        %v290 = vld [vmem:[%s203 + $0x140] sm:$0xf]
        %v291 = vld [vmem:[%s203 + $0x144] sm:$0x1]
        %v292 = vld [vmem:[%s203 + $0x148] sm:$0xf]
        %v293 = vld [vmem:[%s203 + $0x14c] sm:$0x1]
        %v294 = vld [vmem:[%s203 + $0x150] sm:$0xf]
        %v295 = vld [vmem:[%s203 + $0x154] sm:$0x1]
        %v296 = vld [vmem:[%s203 + $0x158] sm:$0xf]
        %v297 = vld [vmem:[%s203 + $0x15c] sm:$0x1]
        %v298 = vld [vmem:[%s203 + $0x160] sm:$0xf]
        %v299 = vld [vmem:[%s203 + $0x164] sm:$0x1]
        %v300 = vld [vmem:[%s203 + $0x168] sm:$0xf]
        %v301 = vld [vmem:[%s203 + $0x16c] sm:$0x1]
        %v302 = vld [vmem:[%s203 + $0x170] sm:$0xf]
        %v303 = vld [vmem:[%s203 + $0x174] sm:$0x1]
        %v304 = vld [vmem:[%s203 + $0x178] sm:$0xf]
        %v305 = vld [vmem:[%s203 + $0x17c] sm:$0x1]
        %v306 = vld [vmem:[%s203 + $0x180] sm:$0xf]
        %v307 = vld [vmem:[%s203 + $0x184] sm:$0x1]
        %v308 = vld [vmem:[%s203 + $0x188] sm:$0xf]
        %v309 = vld [vmem:[%s203 + $0x18c] sm:$0x1]
        %v310 = vld [vmem:[%s203 + $0x190] sm:$0xf]
        %v311 = vld [vmem:[%s203 + $0x194] sm:$0x1]
        %v312 = vld [vmem:[%s203 + $0x198] sm:$0xf]
        %v313 = vld [vmem:[%s203 + $0x19c] sm:$0x1]
        %v314 = vld [vmem:[%s203 + $0x1a0] sm:$0xf]
        %v315 = vld [vmem:[%s203 + $0x1a4] sm:$0x1]
        %v316 = vld [vmem:[%s203 + $0x1a8] sm:$0xf]
        %v317 = vld [vmem:[%s203 + $0x1ac] sm:$0x1]
        %v318 = vld [vmem:[%s203 + $0x1b0] sm:$0xf]
        %v319 = vld [vmem:[%s203 + $0x1b4] sm:$0x1]
        %v320 = vld [vmem:[%s203 + $0x1b8] sm:$0xf]
        %v321 = vld [vmem:[%s203 + $0x1bc] sm:$0x1]
        %v322 = vld [vmem:[%s203 + $0x1c0] sm:$0xf]
        %v323 = vld [vmem:[%s203 + $0x1c4] sm:$0x1]
        %v324 = vld [vmem:[%s203 + $0x1c8] sm:$0xf]
        %v325 = vld [vmem:[%s203 + $0x1cc] sm:$0x1]
        %v326 = vld [vmem:[%s203 + $0x1d0] sm:$0xf]
        %v327 = vld [vmem:[%s203 + $0x1d4] sm:$0x1]
        %v328 = vld [vmem:[%s203 + $0x1d8] sm:$0xf]
        %v329 = vld [vmem:[%s203 + $0x1dc] sm:$0x1]
        %v330 = vld [vmem:[%s203 + $0x1e0] sm:$0xf]
        %v331 = vld [vmem:[%s203 + $0x1e4] sm:$0x1]
        %v332 = vld [vmem:[%s203 + $0x1e8] sm:$0xf]
        %v333 = vld [vmem:[%s203 + $0x1ec] sm:$0x1]
        %v334 = vld [vmem:[%s203 + $0x1f0] sm:$0xf]
        %v335 = vld [vmem:[%s203 + $0x1f4] sm:$0x1]
        %v336 = vld [vmem:[%s203 + $0x1f8] sm:$0xf]
        %v337 = vld [vmem:[%s203 + $0x1fc] sm:$0x1]
        %v338 = vld [vmem:[%s203 + $0x200] sm:$0xf]
        %v339 = vld [vmem:[%s203 + $0x204] sm:$0x1]
        %v340 = vld [vmem:[%s203 + $0x208] sm:$0xf]
        %v341 = vld [vmem:[%s203 + $0x20c] sm:$0x1]
        %v342 = vld [vmem:[%s203 + $0x210] sm:$0xf]
        %v343 = vld [vmem:[%s203 + $0x214] sm:$0x1]
        %v344 = vld [vmem:[%s203 + $0x218] sm:$0xf]
        %v345 = vld [vmem:[%s203 + $0x21c] sm:$0x1]
        %v346 = vld [vmem:[%s203 + $0x220] sm:$0xf]
        %v347 = vld [vmem:[%s203 + $0x224] sm:$0x1]
        %v348 = vld [vmem:[%s203 + $0x228] sm:$0xf]
        %v349 = vld [vmem:[%s203 + $0x22c] sm:$0x1]
        %v350 = vld [vmem:[%s203 + $0x230] sm:$0xf]
        %v351 = vld [vmem:[%s203 + $0x234] sm:$0x1]
        %v352 = vld [vmem:[%s203 + $0x238] sm:$0xf]
        %v353 = vld [vmem:[%s203 + $0x23c] sm:$0x1]
        %v354 = vld [vmem:[%s203 + $0x240] sm:$0xf]
        %v355 = vld [vmem:[%s203 + $0x244] sm:$0x1]
        %v356 = vld [vmem:[%s203 + $0x248] sm:$0xf]
        %v357 = vld [vmem:[%s203 + $0x24c] sm:$0x1]
        %v358 = vld [vmem:[%s203 + $0x250] sm:$0xf]
        %v359 = vld [vmem:[%s203 + $0x254] sm:$0x1]
        %v360 = vld [vmem:[%s203 + $0x258] sm:$0xf]
        %v361 = vld [vmem:[%s203 + $0x25c] sm:$0x1]
        %v362 = vld [vmem:[%s203 + $0x260] sm:$0xf]
        %v363 = vld [vmem:[%s203 + $0x264] sm:$0x1]
        %v364 = vld [vmem:[%s203 + $0x268] sm:$0xf]
        %v365 = vld [vmem:[%s203 + $0x26c] sm:$0x1]
        %v366 = vld [vmem:[%s203 + $0x270] sm:$0xf]
        %v367 = vld [vmem:[%s203 + $0x274] sm:$0x1]
        %v368 = vld [vmem:[%s203 + $0x278] sm:$0xf]
        %v369 = vld [vmem:[%s203 + $0x27c] sm:$0x1]
        %v370 = vld [vmem:[%s203 + $0x280] sm:$0xf]
        %v371 = vld [vmem:[%s203 + $0x284] sm:$0x1]
        %v372 = vld [vmem:[%s203 + $0x288] sm:$0xf]
        %v373 = vld [vmem:[%s203 + $0x28c] sm:$0x1]
        %v374 = vld [vmem:[%s203 + $0x290] sm:$0xf]
        %v375 = vld [vmem:[%s203 + $0x294] sm:$0x1]
        %v376 = vld [vmem:[%s203 + $0x298] sm:$0xf]
        %v377 = vld [vmem:[%s203 + $0x29c] sm:$0x1]
        %v378 = vld [vmem:[%s203 + $0x2a0] sm:$0xf]
        %v379 = vld [vmem:[%s203 + $0x2a4] sm:$0x1]
        %v380 = vld [vmem:[%s203 + $0x2a8] sm:$0xf]
        %v381 = vld [vmem:[%s203 + $0x2ac] sm:$0x1]
        %v382 = vld [vmem:[%s203 + $0x2b0] sm:$0xf]
        %v383 = vld [vmem:[%s203 + $0x2b4] sm:$0x1]
        %v384 = vld [vmem:[%s203 + $0x2b8] sm:$0xf]
        %v385 = vld [vmem:[%s203 + $0x2bc] sm:$0x1]
        %v386 = vld [vmem:[%s203 + $0x2c0] sm:$0xf]
        %v387 = vld [vmem:[%s203 + $0x2c4] sm:$0x1]
        %v388 = vld [vmem:[%s203 + $0x2c8] sm:$0xf]
        %v389 = vld [vmem:[%s203 + $0x2cc] sm:$0x1]
        %v390 = vld [vmem:[%s203 + $0x2d0] sm:$0xf]
        %v391 = vld [vmem:[%s203 + $0x2d4] sm:$0x1]
        %v392 = vld [vmem:[%s203 + $0x2d8] sm:$0xf]
        %v393 = vld [vmem:[%s203 + $0x2dc] sm:$0x1]
        %v394 = vld [vmem:[%s203 + $0x2e0] sm:$0xf]
        %v395 = vld [vmem:[%s203 + $0x2e4] sm:$0x1]
        %v396 = vld [vmem:[%s203 + $0x2e8] sm:$0xf]
        %v397 = vld [vmem:[%s203 + $0x2ec] sm:$0x1]
        %v398 = vld [vmem:[%s203 + $0x2f0] sm:$0xf]
        %v399 = vld [vmem:[%s203 + $0x2f4] sm:$0x1]
        %v400 = vld [vmem:[%s203 + $0x2f8] sm:$0xf]
        %v401 = vld [vmem:[%s203 + $0x2fc] sm:$0x1]
        %v402 = vld [vmem:[%s203 + $0x300] sm:$0xf]
        %v403 = vld [vmem:[%s203 + $0x304] sm:$0x1]
        %v404 = vld [vmem:[%s203 + $0x308] sm:$0xf]
        %v405 = vld [vmem:[%s203 + $0x30c] sm:$0x1]
        %v406 = vld [vmem:[%s203 + $0x310] sm:$0xf]
        %v407 = vld [vmem:[%s203 + $0x314] sm:$0x1]
        %v408 = vld [vmem:[%s203 + $0x318] sm:$0xf]
        %v409 = vld [vmem:[%s203 + $0x31c] sm:$0x1]
        %v610 = vunpack.c.l.b16 %v210
        %v611 = vunpack.c.l.b16 %v211
        %v612 = vunpack.c.l.b16 %v212
        %v613 = vunpack.c.l.b16 %v213
        %v614 = vunpack.c.l.b16 %v214
        %v615 = vunpack.c.l.b16 %v215
        %v616 = vunpack.c.l.b16 %v216
        %v617 = vunpack.c.l.b16 %v217
        %v618 = vunpack.c.l.b16 %v218
        %v619 = vunpack.c.l.b16 %v219
        %v620 = vunpack.c.l.b16 %v220
        %v621 = vunpack.c.l.b16 %v221
        %v622 = vunpack.c.l.b16 %v222
        %v623 = vunpack.c.l.b16 %v223
        %v624 = vunpack.c.l.b16 %v224
        %v625 = vunpack.c.l.b16 %v225
        %v626 = vunpack.c.l.b16 %v226
        %v627 = vunpack.c.l.b16 %v227
        %v628 = vunpack.c.l.b16 %v228
        %v629 = vunpack.c.l.b16 %v229
        %v630 = vunpack.c.l.b16 %v230
        %v631 = vunpack.c.l.b16 %v231
        %v632 = vunpack.c.l.b16 %v232
        %v633 = vunpack.c.l.b16 %v233
        %v634 = vunpack.c.l.b16 %v234
        %v635 = vunpack.c.l.b16 %v235
        %v636 = vunpack.c.l.b16 %v236
        %v637 = vunpack.c.l.b16 %v237
        %v638 = vunpack.c.l.b16 %v238
        %v639 = vunpack.c.l.b16 %v239
        %v640 = vunpack.c.l.b16 %v240
        %v641 = vunpack.c.l.b16 %v241
        %v642 = vunpack.c.l.b16 %v242
        %v643 = vunpack.c.l.b16 %v243
        %v644 = vunpack.c.l.b16 %v244
        %v645 = vunpack.c.l.b16 %v245
        %v646 = vunpack.c.l.b16 %v246
        %v647 = vunpack.c.l.b16 %v247
        %v648 = vunpack.c.l.b16 %v248
        %v649 = vunpack.c.l.b16 %v249
        %v650 = vunpack.c.l.b16 %v250
        %v651 = vunpack.c.l.b16 %v251
        %v652 = vunpack.c.l.b16 %v252
        %v653 = vunpack.c.l.b16 %v253
        %v654 = vunpack.c.l.b16 %v254
        %v655 = vunpack.c.l.b16 %v255
        %v656 = vunpack.c.l.b16 %v256
        %v657 = vunpack.c.l.b16 %v257
        %v658 = vunpack.c.l.b16 %v258
        %v659 = vunpack.c.l.b16 %v259
        %v660 = vunpack.c.l.b16 %v260
        %v661 = vunpack.c.l.b16 %v261
        %v662 = vunpack.c.l.b16 %v262
        %v663 = vunpack.c.l.b16 %v263
        %v664 = vunpack.c.l.b16 %v264
        %v665 = vunpack.c.l.b16 %v265
        %v666 = vunpack.c.l.b16 %v266
        %v667 = vunpack.c.l.b16 %v267
        %v668 = vunpack.c.l.b16 %v268
        %v669 = vunpack.c.l.b16 %v269
        %v670 = vunpack.c.l.b16 %v270
        %v671 = vunpack.c.l.b16 %v271
        %v672 = vunpack.c.l.b16 %v272
        %v673 = vunpack.c.l.b16 %v273
        %v674 = vunpack.c.l.b16 %v274
        %v675 = vunpack.c.l.b16 %v275
        %v676 = vunpack.c.l.b16 %v276
        %v677 = vunpack.c.l.b16 %v277
        %v678 = vunpack.c.l.b16 %v278
        %v679 = vunpack.c.l.b16 %v279
        %v680 = vunpack.c.l.b16 %v280
        %v681 = vunpack.c.l.b16 %v281
        %v682 = vunpack.c.l.b16 %v282
        %v683 = vunpack.c.l.b16 %v283
        %v684 = vunpack.c.l.b16 %v284
        %v685 = vunpack.c.l.b16 %v285
        %v686 = vunpack.c.l.b16 %v286
        %v687 = vunpack.c.l.b16 %v287
        %v688 = vunpack.c.l.b16 %v288
        %v689 = vunpack.c.l.b16 %v289
        %v690 = vunpack.c.l.b16 %v290
        %v691 = vunpack.c.l.b16 %v291
        %v692 = vunpack.c.l.b16 %v292
        %v693 = vunpack.c.l.b16 %v293
        %v694 = vunpack.c.l.b16 %v294
        %v695 = vunpack.c.l.b16 %v295
        %v696 = vunpack.c.l.b16 %v296
        %v697 = vunpack.c.l.b16 %v297
        %v698 = vunpack.c.l.b16 %v298
        %v699 = vunpack.c.l.b16 %v299
        %v700 = vunpack.c.l.b16 %v300
        %v701 = vunpack.c.l.b16 %v301
        %v702 = vunpack.c.l.b16 %v302
        %v703 = vunpack.c.l.b16 %v303
        %v704 = vunpack.c.l.b16 %v304
        %v705 = vunpack.c.l.b16 %v305
        %v706 = vunpack.c.l.b16 %v306
        %v707 = vunpack.c.l.b16 %v307
        %v708 = vunpack.c.l.b16 %v308
        %v709 = vunpack.c.l.b16 %v309
        %v710 = vunpack.c.l.b16 %v310
        %v711 = vunpack.c.l.b16 %v311
        %v712 = vunpack.c.l.b16 %v312
        %v713 = vunpack.c.l.b16 %v313
        %v714 = vunpack.c.l.b16 %v314
        %v715 = vunpack.c.l.b16 %v315
        %v716 = vunpack.c.l.b16 %v316
        %v717 = vunpack.c.l.b16 %v317
        %v718 = vunpack.c.l.b16 %v318
        %v719 = vunpack.c.l.b16 %v319
        %v720 = vunpack.c.l.b16 %v320
        %v721 = vunpack.c.l.b16 %v321
        %v722 = vunpack.c.l.b16 %v322
        %v723 = vunpack.c.l.b16 %v323
        %v724 = vunpack.c.l.b16 %v324
        %v725 = vunpack.c.l.b16 %v325
        %v726 = vunpack.c.l.b16 %v326
        %v727 = vunpack.c.l.b16 %v327
        %v728 = vunpack.c.l.b16 %v328
        %v729 = vunpack.c.l.b16 %v329
        %v730 = vunpack.c.l.b16 %v330
        %v731 = vunpack.c.l.b16 %v331
        %v732 = vunpack.c.l.b16 %v332
        %v733 = vunpack.c.l.b16 %v333
        %v734 = vunpack.c.l.b16 %v334
        %v735 = vunpack.c.l.b16 %v335
        %v736 = vunpack.c.l.b16 %v336
        %v737 = vunpack.c.l.b16 %v337
        %v738 = vunpack.c.l.b16 %v338
        %v739 = vunpack.c.l.b16 %v339
        %v740 = vunpack.c.l.b16 %v340
        %v741 = vunpack.c.l.b16 %v341
        %v742 = vunpack.c.l.b16 %v342
        %v743 = vunpack.c.l.b16 %v343
        %v744 = vunpack.c.l.b16 %v344
        %v745 = vunpack.c.l.b16 %v345
        %v746 = vunpack.c.l.b16 %v346
        %v747 = vunpack.c.l.b16 %v347
        %v748 = vunpack.c.l.b16 %v348
        %v749 = vunpack.c.l.b16 %v349
        %v750 = vunpack.c.l.b16 %v350
        %v751 = vunpack.c.l.b16 %v351
        %v752 = vunpack.c.l.b16 %v352
        %v753 = vunpack.c.l.b16 %v353
        %v754 = vunpack.c.l.b16 %v354
        %v755 = vunpack.c.l.b16 %v355
        %v756 = vunpack.c.l.b16 %v356
        %v757 = vunpack.c.l.b16 %v357
        %v758 = vunpack.c.l.b16 %v358
        %v759 = vunpack.c.l.b16 %v359
        %v760 = vunpack.c.l.b16 %v360
        %v761 = vunpack.c.l.b16 %v361
        %v762 = vunpack.c.l.b16 %v362
        %v763 = vunpack.c.l.b16 %v363
        %v764 = vunpack.c.l.b16 %v364
        %v765 = vunpack.c.l.b16 %v365
        %v766 = vunpack.c.l.b16 %v366
        %v767 = vunpack.c.l.b16 %v367
        %v768 = vunpack.c.l.b16 %v368
        %v769 = vunpack.c.l.b16 %v369
        %v770 = vunpack.c.l.b16 %v370
        %v771 = vunpack.c.l.b16 %v371
        %v772 = vunpack.c.l.b16 %v372
        %v773 = vunpack.c.l.b16 %v373
        %v774 = vunpack.c.l.b16 %v374
        %v775 = vunpack.c.l.b16 %v375
        %v776 = vunpack.c.l.b16 %v376
        %v777 = vunpack.c.l.b16 %v377
        %v778 = vunpack.c.l.b16 %v378
        %v779 = vunpack.c.l.b16 %v379
        %v780 = vunpack.c.l.b16 %v380
        %v781 = vunpack.c.l.b16 %v381
        %v782 = vunpack.c.l.b16 %v382
        %v783 = vunpack.c.l.b16 %v383
        %v784 = vunpack.c.l.b16 %v384
        %v785 = vunpack.c.l.b16 %v385
        %v786 = vunpack.c.l.b16 %v386
        %v787 = vunpack.c.l.b16 %v387
        %v788 = vunpack.c.l.b16 %v388
        %v789 = vunpack.c.l.b16 %v389
        %v790 = vunpack.c.l.b16 %v390
        %v791 = vunpack.c.l.b16 %v391
        %v792 = vunpack.c.l.b16 %v392
        %v793 = vunpack.c.l.b16 %v393
        %v794 = vunpack.c.l.b16 %v394
        %v795 = vunpack.c.l.b16 %v395
        %v796 = vunpack.c.l.b16 %v396
        %v797 = vunpack.c.l.b16 %v397
        %v798 = vunpack.c.l.b16 %v398
        %v799 = vunpack.c.l.b16 %v399
        %v800 = vunpack.c.l.b16 %v400
        %v801 = vunpack.c.l.b16 %v401
        %v802 = vunpack.c.l.b16 %v402
        %v803 = vunpack.c.l.b16 %v403
        %v804 = vunpack.c.l.b16 %v404
        %v805 = vunpack.c.l.b16 %v405
        %v806 = vunpack.c.l.b16 %v406
        %v807 = vunpack.c.l.b16 %v407
        %v808 = vunpack.c.l.b16 %v408
        %v809 = vunpack.c.l.b16 %v409
        %v810 = vpack.c.b16 %v611, %v610
        %v811 = vpack.c.b16 %v613, %v612
        %v812 = vpack.c.b16 %v615, %v614
        %v813 = vpack.c.b16 %v617, %v616
        %v814 = vpack.c.b16 %v619, %v618
        %v815 = vpack.c.b16 %v621, %v620
        %v816 = vpack.c.b16 %v623, %v622
        %v817 = vpack.c.b16 %v625, %v624
        %v818 = vpack.c.b16 %v627, %v626
        %v819 = vpack.c.b16 %v629, %v628
        %v820 = vpack.c.b16 %v631, %v630
        %v821 = vpack.c.b16 %v633, %v632
        %v822 = vpack.c.b16 %v635, %v634
        %v823 = vpack.c.b16 %v637, %v636
        %v824 = vpack.c.b16 %v639, %v638
        %v825 = vpack.c.b16 %v641, %v640
        %v826 = vpack.c.b16 %v643, %v642
        %v827 = vpack.c.b16 %v645, %v644
        %v828 = vpack.c.b16 %v647, %v646
        %v829 = vpack.c.b16 %v649, %v648
        %v830 = vpack.c.b16 %v651, %v650
        %v831 = vpack.c.b16 %v653, %v652
        %v832 = vpack.c.b16 %v655, %v654
        %v833 = vpack.c.b16 %v657, %v656
        %v834 = vpack.c.b16 %v659, %v658
        %v835 = vpack.c.b16 %v661, %v660
        %v836 = vpack.c.b16 %v663, %v662
        %v837 = vpack.c.b16 %v665, %v664
        %v838 = vpack.c.b16 %v667, %v666
        %v839 = vpack.c.b16 %v669, %v668
        %v840 = vpack.c.b16 %v671, %v670
        %v841 = vpack.c.b16 %v673, %v672
        %v842 = vpack.c.b16 %v675, %v674
        %v843 = vpack.c.b16 %v677, %v676
        %v844 = vpack.c.b16 %v679, %v678
        %v845 = vpack.c.b16 %v681, %v680
        %v846 = vpack.c.b16 %v683, %v682
        %v847 = vpack.c.b16 %v685, %v684
        %v848 = vpack.c.b16 %v687, %v686
        %v849 = vpack.c.b16 %v689, %v688
        %v850 = vpack.c.b16 %v691, %v690
        %v851 = vpack.c.b16 %v693, %v692
        %v852 = vpack.c.b16 %v695, %v694
        %v853 = vpack.c.b16 %v697, %v696
        %v854 = vpack.c.b16 %v699, %v698
        %v855 = vpack.c.b16 %v701, %v700
        %v856 = vpack.c.b16 %v703, %v702
        %v857 = vpack.c.b16 %v705, %v704
        %v858 = vpack.c.b16 %v707, %v706
        %v859 = vpack.c.b16 %v709, %v708
        %v860 = vpack.c.b16 %v711, %v710
        %v861 = vpack.c.b16 %v713, %v712
        %v862 = vpack.c.b16 %v715, %v714
        %v863 = vpack.c.b16 %v717, %v716
        %v864 = vpack.c.b16 %v719, %v718
        %v865 = vpack.c.b16 %v721, %v720
        %v866 = vpack.c.b16 %v723, %v722
        %v867 = vpack.c.b16 %v725, %v724
        %v868 = vpack.c.b16 %v727, %v726
        %v869 = vpack.c.b16 %v729, %v728
        %v870 = vpack.c.b16 %v731, %v730
        %v871 = vpack.c.b16 %v733, %v732
        %v872 = vpack.c.b16 %v735, %v734
        %v873 = vpack.c.b16 %v737, %v736
        %v874 = vpack.c.b16 %v739, %v738
        %v875 = vpack.c.b16 %v741, %v740
        %v876 = vpack.c.b16 %v743, %v742
        %v877 = vpack.c.b16 %v745, %v744
        %v878 = vpack.c.b16 %v747, %v746
        %v879 = vpack.c.b16 %v749, %v748
        %v880 = vpack.c.b16 %v751, %v750
        %v881 = vpack.c.b16 %v753, %v752
        %v882 = vpack.c.b16 %v755, %v754
        %v883 = vpack.c.b16 %v757, %v756
        %v884 = vpack.c.b16 %v759, %v758
        %v885 = vpack.c.b16 %v761, %v760
        %v886 = vpack.c.b16 %v763, %v762
        %v887 = vpack.c.b16 %v765, %v764
        %v888 = vpack.c.b16 %v767, %v766
        %v889 = vpack.c.b16 %v769, %v768
        %v890 = vpack.c.b16 %v771, %v770
        %v891 = vpack.c.b16 %v773, %v772
        %v892 = vpack.c.b16 %v775, %v774
        %v893 = vpack.c.b16 %v777, %v776
        %v894 = vpack.c.b16 %v779, %v778
        %v895 = vpack.c.b16 %v781, %v780
        %v896 = vpack.c.b16 %v783, %v782
        %v897 = vpack.c.b16 %v785, %v784
        %v898 = vpack.c.b16 %v787, %v786
        %v899 = vpack.c.b16 %v789, %v788
        %v900 = vpack.c.b16 %v791, %v790
        %v901 = vpack.c.b16 %v793, %v792
        %v902 = vpack.c.b16 %v795, %v794
        %v903 = vpack.c.b16 %v797, %v796
        %v904 = vpack.c.b16 %v799, %v798
        %v905 = vpack.c.b16 %v801, %v800
        %v906 = vpack.c.b16 %v803, %v802
        %v907 = vpack.c.b16 %v805, %v804
        %v908 = vpack.c.b16 %v807, %v806
        %v909 = vpack.c.b16 %v809, %v808
        %v911 = vshrl.u32 %v810, 16
        %v913 = vshll.u32 %v810, 16
        %v915 = vrot.slane %v913, 1
        %v916 = vor.u32 %v911, %v915
        %v918 = vshrl.u32 %v811, 16
        %v920 = vshll.u32 %v811, 16
        %v922 = vrot.slane %v920, 1
        %v923 = vor.u32 %v918, %v922
        %v925 = vshrl.u32 %v812, 16
        %v927 = vshll.u32 %v812, 16
        %v929 = vrot.slane %v927, 1
        %v930 = vor.u32 %v925, %v929
        %v932 = vshrl.u32 %v813, 16
        %v934 = vshll.u32 %v813, 16
        %v936 = vrot.slane %v934, 1
        %v937 = vor.u32 %v932, %v936
        %v939 = vshrl.u32 %v814, 16
        %v941 = vshll.u32 %v814, 16
        %v943 = vrot.slane %v941, 1
        %v944 = vor.u32 %v939, %v943
        %v946 = vshrl.u32 %v815, 16
        %v948 = vshll.u32 %v815, 16
        %v950 = vrot.slane %v948, 1
        %v951 = vor.u32 %v946, %v950
        %v953 = vshrl.u32 %v816, 16
        %v955 = vshll.u32 %v816, 16
        %v957 = vrot.slane %v955, 1
        %v958 = vor.u32 %v953, %v957
        %v960 = vshrl.u32 %v817, 16
        %v962 = vshll.u32 %v817, 16
        %v964 = vrot.slane %v962, 1
        %v965 = vor.u32 %v960, %v964
        %v967 = vshrl.u32 %v818, 16
        %v969 = vshll.u32 %v818, 16
        %v971 = vrot.slane %v969, 1
        %v972 = vor.u32 %v967, %v971
        %v974 = vshrl.u32 %v819, 16
        %v976 = vshll.u32 %v819, 16
        %v978 = vrot.slane %v976, 1
        %v979 = vor.u32 %v974, %v978
        %v981 = vshrl.u32 %v820, 16
        %v983 = vshll.u32 %v820, 16
        %v985 = vrot.slane %v983, 1
        %v986 = vor.u32 %v981, %v985
        %v988 = vshrl.u32 %v821, 16
        %v990 = vshll.u32 %v821, 16
        %v992 = vrot.slane %v990, 1
        %v993 = vor.u32 %v988, %v992
        %v995 = vshrl.u32 %v822, 16
        %v997 = vshll.u32 %v822, 16
        %v999 = vrot.slane %v997, 1
        %v1000 = vor.u32 %v995, %v999
        %v1002 = vshrl.u32 %v823, 16
        %v1004 = vshll.u32 %v823, 16
        %v1006 = vrot.slane %v1004, 1
        %v1007 = vor.u32 %v1002, %v1006
        %v1009 = vshrl.u32 %v824, 16
        %v1011 = vshll.u32 %v824, 16
        %v1013 = vrot.slane %v1011, 1
        %v1014 = vor.u32 %v1009, %v1013
        %v1016 = vshrl.u32 %v825, 16
        %v1018 = vshll.u32 %v825, 16
        %v1020 = vrot.slane %v1018, 1
        %v1021 = vor.u32 %v1016, %v1020
        %v1023 = vshrl.u32 %v826, 16
        %v1025 = vshll.u32 %v826, 16
        %v1027 = vrot.slane %v1025, 1
        %v1028 = vor.u32 %v1023, %v1027
        %v1030 = vshrl.u32 %v827, 16
        %v1032 = vshll.u32 %v827, 16
        %v1034 = vrot.slane %v1032, 1
        %v1035 = vor.u32 %v1030, %v1034
        %v1037 = vshrl.u32 %v828, 16
        %v1039 = vshll.u32 %v828, 16
        %v1041 = vrot.slane %v1039, 1
        %v1042 = vor.u32 %v1037, %v1041
        %v1044 = vshrl.u32 %v829, 16
        %v1046 = vshll.u32 %v829, 16
        %v1048 = vrot.slane %v1046, 1
        %v1049 = vor.u32 %v1044, %v1048
        %v1051 = vshrl.u32 %v830, 16
        %v1053 = vshll.u32 %v830, 16
        %v1055 = vrot.slane %v1053, 1
        %v1056 = vor.u32 %v1051, %v1055
        %v1058 = vshrl.u32 %v831, 16
        %v1060 = vshll.u32 %v831, 16
        %v1062 = vrot.slane %v1060, 1
        %v1063 = vor.u32 %v1058, %v1062
        %v1065 = vshrl.u32 %v832, 16
        %v1067 = vshll.u32 %v832, 16
        %v1069 = vrot.slane %v1067, 1
        %v1070 = vor.u32 %v1065, %v1069
        %v1072 = vshrl.u32 %v833, 16
        %v1074 = vshll.u32 %v833, 16
        %v1076 = vrot.slane %v1074, 1
        %v1077 = vor.u32 %v1072, %v1076
        %v1079 = vshrl.u32 %v834, 16
        %v1081 = vshll.u32 %v834, 16
        %v1083 = vrot.slane %v1081, 1
        %v1084 = vor.u32 %v1079, %v1083
        %v1086 = vshrl.u32 %v835, 16
        %v1088 = vshll.u32 %v835, 16
        %v1090 = vrot.slane %v1088, 1
        %v1091 = vor.u32 %v1086, %v1090
        %v1093 = vshrl.u32 %v836, 16
        %v1095 = vshll.u32 %v836, 16
        %v1097 = vrot.slane %v1095, 1
        %v1098 = vor.u32 %v1093, %v1097
        %v1100 = vshrl.u32 %v837, 16
        %v1102 = vshll.u32 %v837, 16
        %v1104 = vrot.slane %v1102, 1
        %v1105 = vor.u32 %v1100, %v1104
        %v1107 = vshrl.u32 %v838, 16
        %v1109 = vshll.u32 %v838, 16
        %v1111 = vrot.slane %v1109, 1
        %v1112 = vor.u32 %v1107, %v1111
        %v1114 = vshrl.u32 %v839, 16
        %v1116 = vshll.u32 %v839, 16
        %v1118 = vrot.slane %v1116, 1
        %v1119 = vor.u32 %v1114, %v1118
        %v1121 = vshrl.u32 %v840, 16
        %v1123 = vshll.u32 %v840, 16
        %v1125 = vrot.slane %v1123, 1
        %v1126 = vor.u32 %v1121, %v1125
        %v1128 = vshrl.u32 %v841, 16
        %v1130 = vshll.u32 %v841, 16
        %v1132 = vrot.slane %v1130, 1
        %v1133 = vor.u32 %v1128, %v1132
        %v1135 = vshrl.u32 %v842, 16
        %v1137 = vshll.u32 %v842, 16
        %v1139 = vrot.slane %v1137, 1
        %v1140 = vor.u32 %v1135, %v1139
        %v1142 = vshrl.u32 %v843, 16
        %v1144 = vshll.u32 %v843, 16
        %v1146 = vrot.slane %v1144, 1
        %v1147 = vor.u32 %v1142, %v1146
        %v1149 = vshrl.u32 %v844, 16
        %v1151 = vshll.u32 %v844, 16
        %v1153 = vrot.slane %v1151, 1
        %v1154 = vor.u32 %v1149, %v1153
        %v1156 = vshrl.u32 %v845, 16
        %v1158 = vshll.u32 %v845, 16
        %v1160 = vrot.slane %v1158, 1
        %v1161 = vor.u32 %v1156, %v1160
        %v1163 = vshrl.u32 %v846, 16
        %v1165 = vshll.u32 %v846, 16
        %v1167 = vrot.slane %v1165, 1
        %v1168 = vor.u32 %v1163, %v1167
        %v1170 = vshrl.u32 %v847, 16
        %v1172 = vshll.u32 %v847, 16
        %v1174 = vrot.slane %v1172, 1
        %v1175 = vor.u32 %v1170, %v1174
        %v1177 = vshrl.u32 %v848, 16
        %v1179 = vshll.u32 %v848, 16
        %v1181 = vrot.slane %v1179, 1
        %v1182 = vor.u32 %v1177, %v1181
        %v1184 = vshrl.u32 %v849, 16
        %v1186 = vshll.u32 %v849, 16
        %v1188 = vrot.slane %v1186, 1
        %v1189 = vor.u32 %v1184, %v1188
        %v1191 = vshrl.u32 %v850, 16
        %v1193 = vshll.u32 %v850, 16
        %v1195 = vrot.slane %v1193, 1
        %v1196 = vor.u32 %v1191, %v1195
        %v1198 = vshrl.u32 %v851, 16
        %v1200 = vshll.u32 %v851, 16
        %v1202 = vrot.slane %v1200, 1
        %v1203 = vor.u32 %v1198, %v1202
        %v1205 = vshrl.u32 %v852, 16
        %v1207 = vshll.u32 %v852, 16
        %v1209 = vrot.slane %v1207, 1
        %v1210 = vor.u32 %v1205, %v1209
        %v1212 = vshrl.u32 %v853, 16
        %v1214 = vshll.u32 %v853, 16
        %v1216 = vrot.slane %v1214, 1
        %v1217 = vor.u32 %v1212, %v1216
        %v1219 = vshrl.u32 %v854, 16
        %v1221 = vshll.u32 %v854, 16
        %v1223 = vrot.slane %v1221, 1
        %v1224 = vor.u32 %v1219, %v1223
        %v1226 = vshrl.u32 %v855, 16
        %v1228 = vshll.u32 %v855, 16
        %v1230 = vrot.slane %v1228, 1
        %v1231 = vor.u32 %v1226, %v1230
        %v1233 = vshrl.u32 %v856, 16
        %v1235 = vshll.u32 %v856, 16
        %v1237 = vrot.slane %v1235, 1
        %v1238 = vor.u32 %v1233, %v1237
        %v1240 = vshrl.u32 %v857, 16
        %v1242 = vshll.u32 %v857, 16
        %v1244 = vrot.slane %v1242, 1
        %v1245 = vor.u32 %v1240, %v1244
        %v1247 = vshrl.u32 %v858, 16
        %v1249 = vshll.u32 %v858, 16
        %v1251 = vrot.slane %v1249, 1
        %v1252 = vor.u32 %v1247, %v1251
        %v1254 = vshrl.u32 %v859, 16
        %v1256 = vshll.u32 %v859, 16
        %v1258 = vrot.slane %v1256, 1
        %v1259 = vor.u32 %v1254, %v1258
        %v1261 = vshrl.u32 %v860, 16
        %v1263 = vshll.u32 %v860, 16
        %v1265 = vrot.slane %v1263, 1
        %v1266 = vor.u32 %v1261, %v1265
        %v1268 = vshrl.u32 %v861, 16
        %v1270 = vshll.u32 %v861, 16
        %v1272 = vrot.slane %v1270, 1
        %v1273 = vor.u32 %v1268, %v1272
        %v1275 = vshrl.u32 %v862, 16
        %v1277 = vshll.u32 %v862, 16
        %v1279 = vrot.slane %v1277, 1
        %v1280 = vor.u32 %v1275, %v1279
        %v1282 = vshrl.u32 %v863, 16
        %v1284 = vshll.u32 %v863, 16
        %v1286 = vrot.slane %v1284, 1
        %v1287 = vor.u32 %v1282, %v1286
        %v1289 = vshrl.u32 %v864, 16
        %v1291 = vshll.u32 %v864, 16
        %v1293 = vrot.slane %v1291, 1
        %v1294 = vor.u32 %v1289, %v1293
        %v1296 = vshrl.u32 %v865, 16
        %v1298 = vshll.u32 %v865, 16
        %v1300 = vrot.slane %v1298, 1
        %v1301 = vor.u32 %v1296, %v1300
        %v1303 = vshrl.u32 %v866, 16
        %v1305 = vshll.u32 %v866, 16
        %v1307 = vrot.slane %v1305, 1
        %v1308 = vor.u32 %v1303, %v1307
        %v1310 = vshrl.u32 %v867, 16
        %v1312 = vshll.u32 %v867, 16
        %v1314 = vrot.slane %v1312, 1
        %v1315 = vor.u32 %v1310, %v1314
        %v1317 = vshrl.u32 %v868, 16
        %v1319 = vshll.u32 %v868, 16
        %v1321 = vrot.slane %v1319, 1
        %v1322 = vor.u32 %v1317, %v1321
        %v1324 = vshrl.u32 %v869, 16
        %v1326 = vshll.u32 %v869, 16
        %v1328 = vrot.slane %v1326, 1
        %v1329 = vor.u32 %v1324, %v1328
        %v1331 = vshrl.u32 %v870, 16
        %v1333 = vshll.u32 %v870, 16
        %v1335 = vrot.slane %v1333, 1
        %v1336 = vor.u32 %v1331, %v1335
        %v1338 = vshrl.u32 %v871, 16
        %v1340 = vshll.u32 %v871, 16
        %v1342 = vrot.slane %v1340, 1
        %v1343 = vor.u32 %v1338, %v1342
        %v1345 = vshrl.u32 %v872, 16
        %v1347 = vshll.u32 %v872, 16
        %v1349 = vrot.slane %v1347, 1
        %v1350 = vor.u32 %v1345, %v1349
        %v1352 = vshrl.u32 %v873, 16
        %v1354 = vshll.u32 %v873, 16
        %v1356 = vrot.slane %v1354, 1
        %v1357 = vor.u32 %v1352, %v1356
        %v1359 = vshrl.u32 %v874, 16
        %v1361 = vshll.u32 %v874, 16
        %v1363 = vrot.slane %v1361, 1
        %v1364 = vor.u32 %v1359, %v1363
        %v1366 = vshrl.u32 %v875, 16
        %v1368 = vshll.u32 %v875, 16
        %v1370 = vrot.slane %v1368, 1
        %v1371 = vor.u32 %v1366, %v1370
        %v1373 = vshrl.u32 %v876, 16
        %v1375 = vshll.u32 %v876, 16
        %v1377 = vrot.slane %v1375, 1
        %v1378 = vor.u32 %v1373, %v1377
        %v1380 = vshrl.u32 %v877, 16
        %v1382 = vshll.u32 %v877, 16
        %v1384 = vrot.slane %v1382, 1
        %v1385 = vor.u32 %v1380, %v1384
        %v1387 = vshrl.u32 %v878, 16
        %v1389 = vshll.u32 %v878, 16
        %v1391 = vrot.slane %v1389, 1
        %v1392 = vor.u32 %v1387, %v1391
        %v1394 = vshrl.u32 %v879, 16
        %v1396 = vshll.u32 %v879, 16
        %v1398 = vrot.slane %v1396, 1
        %v1399 = vor.u32 %v1394, %v1398
        %v1401 = vshrl.u32 %v880, 16
        %v1403 = vshll.u32 %v880, 16
        %v1405 = vrot.slane %v1403, 1
        %v1406 = vor.u32 %v1401, %v1405
        %v1408 = vshrl.u32 %v881, 16
        %v1410 = vshll.u32 %v881, 16
        %v1412 = vrot.slane %v1410, 1
        %v1413 = vor.u32 %v1408, %v1412
        %v1415 = vshrl.u32 %v882, 16
        %v1417 = vshll.u32 %v882, 16
        %v1419 = vrot.slane %v1417, 1
        %v1420 = vor.u32 %v1415, %v1419
        %v1422 = vshrl.u32 %v883, 16
        %v1424 = vshll.u32 %v883, 16
        %v1426 = vrot.slane %v1424, 1
        %v1427 = vor.u32 %v1422, %v1426
        %v1429 = vshrl.u32 %v884, 16
        %v1431 = vshll.u32 %v884, 16
        %v1433 = vrot.slane %v1431, 1
        %v1434 = vor.u32 %v1429, %v1433
        %v1436 = vshrl.u32 %v885, 16
        %v1438 = vshll.u32 %v885, 16
        %v1440 = vrot.slane %v1438, 1
        %v1441 = vor.u32 %v1436, %v1440
        %v1443 = vshrl.u32 %v886, 16
        %v1445 = vshll.u32 %v886, 16
        %v1447 = vrot.slane %v1445, 1
        %v1448 = vor.u32 %v1443, %v1447
        %v1450 = vshrl.u32 %v887, 16
        %v1452 = vshll.u32 %v887, 16
        %v1454 = vrot.slane %v1452, 1
        %v1455 = vor.u32 %v1450, %v1454
        %v1457 = vshrl.u32 %v888, 16
        %v1459 = vshll.u32 %v888, 16
        %v1461 = vrot.slane %v1459, 1
        %v1462 = vor.u32 %v1457, %v1461
        %v1464 = vshrl.u32 %v889, 16
        %v1466 = vshll.u32 %v889, 16
        %v1468 = vrot.slane %v1466, 1
        %v1469 = vor.u32 %v1464, %v1468
        %v1471 = vshrl.u32 %v890, 16
        %v1473 = vshll.u32 %v890, 16
        %v1475 = vrot.slane %v1473, 1
        %v1476 = vor.u32 %v1471, %v1475
        %v1478 = vshrl.u32 %v891, 16
        %v1480 = vshll.u32 %v891, 16
        %v1482 = vrot.slane %v1480, 1
        %v1483 = vor.u32 %v1478, %v1482
        %v1485 = vshrl.u32 %v892, 16
        %v1487 = vshll.u32 %v892, 16
        %v1489 = vrot.slane %v1487, 1
        %v1490 = vor.u32 %v1485, %v1489
        %v1492 = vshrl.u32 %v893, 16
        %v1494 = vshll.u32 %v893, 16
        %v1496 = vrot.slane %v1494, 1
        %v1497 = vor.u32 %v1492, %v1496
        %v1499 = vshrl.u32 %v894, 16
        %v1501 = vshll.u32 %v894, 16
        %v1503 = vrot.slane %v1501, 1
        %v1504 = vor.u32 %v1499, %v1503
        %v1506 = vshrl.u32 %v895, 16
        %v1508 = vshll.u32 %v895, 16
        %v1510 = vrot.slane %v1508, 1
        %v1511 = vor.u32 %v1506, %v1510
        %v1513 = vshrl.u32 %v896, 16
        %v1515 = vshll.u32 %v896, 16
        %v1517 = vrot.slane %v1515, 1
        %v1518 = vor.u32 %v1513, %v1517
        %v1520 = vshrl.u32 %v897, 16
        %v1522 = vshll.u32 %v897, 16
        %v1524 = vrot.slane %v1522, 1
        %v1525 = vor.u32 %v1520, %v1524
        %v1527 = vshrl.u32 %v898, 16
        %v1529 = vshll.u32 %v898, 16
        %v1531 = vrot.slane %v1529, 1
        %v1532 = vor.u32 %v1527, %v1531
        %v1534 = vshrl.u32 %v899, 16
        %v1536 = vshll.u32 %v899, 16
        %v1538 = vrot.slane %v1536, 1
        %v1539 = vor.u32 %v1534, %v1538
        %v1541 = vshrl.u32 %v900, 16
        %v1543 = vshll.u32 %v900, 16
        %v1545 = vrot.slane %v1543, 1
        %v1546 = vor.u32 %v1541, %v1545
        %v1548 = vshrl.u32 %v901, 16
        %v1550 = vshll.u32 %v901, 16
        %v1552 = vrot.slane %v1550, 1
        %v1553 = vor.u32 %v1548, %v1552
        %v1555 = vshrl.u32 %v902, 16
        %v1557 = vshll.u32 %v902, 16
        %v1559 = vrot.slane %v1557, 1
        %v1560 = vor.u32 %v1555, %v1559
        %v1562 = vshrl.u32 %v903, 16
        %v1564 = vshll.u32 %v903, 16
        %v1566 = vrot.slane %v1564, 1
        %v1567 = vor.u32 %v1562, %v1566
        %v1569 = vshrl.u32 %v904, 16
        %v1571 = vshll.u32 %v904, 16
        %v1573 = vrot.slane %v1571, 1
        %v1574 = vor.u32 %v1569, %v1573
        %v1576 = vshrl.u32 %v905, 16
        %v1578 = vshll.u32 %v905, 16
        %v1580 = vrot.slane %v1578, 1
        %v1581 = vor.u32 %v1576, %v1580
        %v1583 = vshrl.u32 %v906, 16
        %v1585 = vshll.u32 %v906, 16
        %v1587 = vrot.slane %v1585, 1
        %v1588 = vor.u32 %v1583, %v1587
        %v1590 = vshrl.u32 %v907, 16
        %v1592 = vshll.u32 %v907, 16
        %v1594 = vrot.slane %v1592, 1
        %v1595 = vor.u32 %v1590, %v1594
        %v1597 = vshrl.u32 %v908, 16
        %v1599 = vshll.u32 %v908, 16
        %v1601 = vrot.slane %v1599, 1
        %v1602 = vor.u32 %v1597, %v1601
        %v1604 = vshrl.u32 %v909, 16
        %v1606 = vshll.u32 %v909, 16
        %v1608 = vrot.slane %v1606, 1
        %v1609 = vor.u32 %v1604, %v1608
        %1610 = vrot.lane.b32.xlu0 %v916, 2
        %v1611 = vpop.permute.xlu0 %1610
        %1612 = vrot.lane.b32.xlu0 %v923, 2
        %v1613 = vpop.permute.xlu0 %1612
        %1614 = vrot.lane.b32.xlu0 %v930, 2
        %v1615 = vpop.permute.xlu0 %1614
        %1616 = vrot.lane.b32.xlu0 %v937, 2
        %v1617 = vpop.permute.xlu0 %1616
        %1618 = vrot.lane.b32.xlu0 %v944, 2
        %v1619 = vpop.permute.xlu0 %1618
        %1620 = vrot.lane.b32.xlu0 %v951, 2
        %v1621 = vpop.permute.xlu0 %1620
        %1622 = vrot.lane.b32.xlu0 %v958, 2
        %v1623 = vpop.permute.xlu0 %1622
        %1624 = vrot.lane.b32.xlu0 %v965, 2
        %v1625 = vpop.permute.xlu0 %1624
        %1626 = vrot.lane.b32.xlu0 %v972, 2
        %v1627 = vpop.permute.xlu0 %1626
        %1628 = vrot.lane.b32.xlu0 %v979, 2
        %v1629 = vpop.permute.xlu0 %1628
        %1630 = vrot.lane.b32.xlu0 %v986, 2
        %v1631 = vpop.permute.xlu0 %1630
        %1632 = vrot.lane.b32.xlu0 %v993, 2
        %v1633 = vpop.permute.xlu0 %1632
        %1634 = vrot.lane.b32.xlu0 %v1000, 2
        %v1635 = vpop.permute.xlu0 %1634
        %1636 = vrot.lane.b32.xlu0 %v1007, 2
        %v1637 = vpop.permute.xlu0 %1636
        %1638 = vrot.lane.b32.xlu0 %v1014, 2
        %v1639 = vpop.permute.xlu0 %1638
        %1640 = vrot.lane.b32.xlu0 %v1021, 2
        %v1641 = vpop.permute.xlu0 %1640
        %1642 = vrot.lane.b32.xlu0 %v1028, 2
        %v1643 = vpop.permute.xlu0 %1642
        %1644 = vrot.lane.b32.xlu0 %v1035, 2
        %v1645 = vpop.permute.xlu0 %1644
        %1646 = vrot.lane.b32.xlu0 %v1042, 2
        %v1647 = vpop.permute.xlu0 %1646
        %1648 = vrot.lane.b32.xlu0 %v1049, 2
        %v1649 = vpop.permute.xlu0 %1648
        %1650 = vrot.lane.b32.xlu0 %v1056, 2
        %v1651 = vpop.permute.xlu0 %1650
        %1652 = vrot.lane.b32.xlu0 %v1063, 2
        %v1653 = vpop.permute.xlu0 %1652
        %1654 = vrot.lane.b32.xlu0 %v1070, 2
        %v1655 = vpop.permute.xlu0 %1654
        %1656 = vrot.lane.b32.xlu0 %v1077, 2
        %v1657 = vpop.permute.xlu0 %1656
        %1658 = vrot.lane.b32.xlu0 %v1084, 2
        %v1659 = vpop.permute.xlu0 %1658
        %1660 = vrot.lane.b32.xlu0 %v1091, 2
        %v1661 = vpop.permute.xlu0 %1660
        %1662 = vrot.lane.b32.xlu0 %v1098, 2
        %v1663 = vpop.permute.xlu0 %1662
        %1664 = vrot.lane.b32.xlu0 %v1105, 2
        %v1665 = vpop.permute.xlu0 %1664
        %1666 = vrot.lane.b32.xlu0 %v1112, 2
        %v1667 = vpop.permute.xlu0 %1666
        %1668 = vrot.lane.b32.xlu0 %v1119, 2
        %v1669 = vpop.permute.xlu0 %1668
        %1670 = vrot.lane.b32.xlu0 %v1126, 2
        %v1671 = vpop.permute.xlu0 %1670
        %1672 = vrot.lane.b32.xlu0 %v1133, 2
        %v1673 = vpop.permute.xlu0 %1672
        %1674 = vrot.lane.b32.xlu0 %v1140, 2
        %v1675 = vpop.permute.xlu0 %1674
        %1676 = vrot.lane.b32.xlu0 %v1147, 2
        %v1677 = vpop.permute.xlu0 %1676
        %1678 = vrot.lane.b32.xlu0 %v1154, 2
        %v1679 = vpop.permute.xlu0 %1678
        %1680 = vrot.lane.b32.xlu0 %v1161, 2
        %v1681 = vpop.permute.xlu0 %1680
        %1682 = vrot.lane.b32.xlu0 %v1168, 2
        %v1683 = vpop.permute.xlu0 %1682
        %1684 = vrot.lane.b32.xlu0 %v1175, 2
        %v1685 = vpop.permute.xlu0 %1684
        %1686 = vrot.lane.b32.xlu0 %v1182, 2
        %v1687 = vpop.permute.xlu0 %1686
        %1688 = vrot.lane.b32.xlu0 %v1189, 2
        %v1689 = vpop.permute.xlu0 %1688
        %1690 = vrot.lane.b32.xlu0 %v1196, 2
        %v1691 = vpop.permute.xlu0 %1690
        %1692 = vrot.lane.b32.xlu0 %v1203, 2
        %v1693 = vpop.permute.xlu0 %1692
        %1694 = vrot.lane.b32.xlu0 %v1210, 2
        %v1695 = vpop.permute.xlu0 %1694
        %1696 = vrot.lane.b32.xlu0 %v1217, 2
        %v1697 = vpop.permute.xlu0 %1696
        %1698 = vrot.lane.b32.xlu0 %v1224, 2
        %v1699 = vpop.permute.xlu0 %1698
        %1700 = vrot.lane.b32.xlu0 %v1231, 2
        %v1701 = vpop.permute.xlu0 %1700
        %1702 = vrot.lane.b32.xlu0 %v1238, 2
        %v1703 = vpop.permute.xlu0 %1702
        %1704 = vrot.lane.b32.xlu0 %v1245, 2
        %v1705 = vpop.permute.xlu0 %1704
        %1706 = vrot.lane.b32.xlu0 %v1252, 2
        %v1707 = vpop.permute.xlu0 %1706
        %1708 = vrot.lane.b32.xlu0 %v1259, 2
        %v1709 = vpop.permute.xlu0 %1708
        %1710 = vrot.lane.b32.xlu0 %v1266, 2
        %v1711 = vpop.permute.xlu0 %1710
        %1712 = vrot.lane.b32.xlu0 %v1273, 2
        %v1713 = vpop.permute.xlu0 %1712
        %1714 = vrot.lane.b32.xlu0 %v1280, 2
        %v1715 = vpop.permute.xlu0 %1714
        %1716 = vrot.lane.b32.xlu0 %v1287, 2
        %v1717 = vpop.permute.xlu0 %1716
        %1718 = vrot.lane.b32.xlu0 %v1294, 2
        %v1719 = vpop.permute.xlu0 %1718
        %1720 = vrot.lane.b32.xlu0 %v1301, 2
        %v1721 = vpop.permute.xlu0 %1720
        %1722 = vrot.lane.b32.xlu0 %v1308, 2
        %v1723 = vpop.permute.xlu0 %1722
        %1724 = vrot.lane.b32.xlu0 %v1315, 2
        %v1725 = vpop.permute.xlu0 %1724
        %1726 = vrot.lane.b32.xlu0 %v1322, 2
        %v1727 = vpop.permute.xlu0 %1726
        %1728 = vrot.lane.b32.xlu0 %v1329, 2
        %v1729 = vpop.permute.xlu0 %1728
        %1730 = vrot.lane.b32.xlu0 %v1336, 2
        %v1731 = vpop.permute.xlu0 %1730
        %1732 = vrot.lane.b32.xlu0 %v1343, 2
        %v1733 = vpop.permute.xlu0 %1732
        %1734 = vrot.lane.b32.xlu0 %v1350, 2
        %v1735 = vpop.permute.xlu0 %1734
        %1736 = vrot.lane.b32.xlu0 %v1357, 2
        %v1737 = vpop.permute.xlu0 %1736
        %1738 = vrot.lane.b32.xlu0 %v1364, 2
        %v1739 = vpop.permute.xlu0 %1738
        %1740 = vrot.lane.b32.xlu0 %v1371, 2
        %v1741 = vpop.permute.xlu0 %1740
        %1742 = vrot.lane.b32.xlu0 %v1378, 2
        %v1743 = vpop.permute.xlu0 %1742
        %1744 = vrot.lane.b32.xlu0 %v1385, 2
        %v1745 = vpop.permute.xlu0 %1744
        %1746 = vrot.lane.b32.xlu0 %v1392, 2
        %v1747 = vpop.permute.xlu0 %1746
        %1748 = vrot.lane.b32.xlu0 %v1399, 2
        %v1749 = vpop.permute.xlu0 %1748
        %1750 = vrot.lane.b32.xlu0 %v1406, 2
        %v1751 = vpop.permute.xlu0 %1750
        %1752 = vrot.lane.b32.xlu0 %v1413, 2
        %v1753 = vpop.permute.xlu0 %1752
        %1754 = vrot.lane.b32.xlu0 %v1420, 2
        %v1755 = vpop.permute.xlu0 %1754
        %1756 = vrot.lane.b32.xlu0 %v1427, 2
        %v1757 = vpop.permute.xlu0 %1756
        %1758 = vrot.lane.b32.xlu0 %v1434, 2
        %v1759 = vpop.permute.xlu0 %1758
        %1760 = vrot.lane.b32.xlu0 %v1441, 2
        %v1761 = vpop.permute.xlu0 %1760
        %1762 = vrot.lane.b32.xlu0 %v1448, 2
        %v1763 = vpop.permute.xlu0 %1762
        %1764 = vrot.lane.b32.xlu0 %v1455, 2
        %v1765 = vpop.permute.xlu0 %1764
        %1766 = vrot.lane.b32.xlu0 %v1462, 2
        %v1767 = vpop.permute.xlu0 %1766
        %1768 = vrot.lane.b32.xlu0 %v1469, 2
        %v1769 = vpop.permute.xlu0 %1768
        %1770 = vrot.lane.b32.xlu0 %v1476, 2
        %v1771 = vpop.permute.xlu0 %1770
        %1772 = vrot.lane.b32.xlu0 %v1483, 2
        %v1773 = vpop.permute.xlu0 %1772
        %1774 = vrot.lane.b32.xlu0 %v1490, 2
        %v1775 = vpop.permute.xlu0 %1774
        %1776 = vrot.lane.b32.xlu0 %v1497, 2
        %v1777 = vpop.permute.xlu0 %1776
        %1778 = vrot.lane.b32.xlu0 %v1504, 2
        %v1779 = vpop.permute.xlu0 %1778
        %1780 = vrot.lane.b32.xlu0 %v1511, 2
        %v1781 = vpop.permute.xlu0 %1780
        %1782 = vrot.lane.b32.xlu0 %v1518, 2
        %v1783 = vpop.permute.xlu0 %1782
        %1784 = vrot.lane.b32.xlu0 %v1525, 2
        %v1785 = vpop.permute.xlu0 %1784
        %1786 = vrot.lane.b32.xlu0 %v1532, 2
        %v1787 = vpop.permute.xlu0 %1786
        %1788 = vrot.lane.b32.xlu0 %v1539, 2
        %v1789 = vpop.permute.xlu0 %1788
        %1790 = vrot.lane.b32.xlu0 %v1546, 2
        %v1791 = vpop.permute.xlu0 %1790
        %1792 = vrot.lane.b32.xlu0 %v1553, 2
        %v1793 = vpop.permute.xlu0 %1792
        %1794 = vrot.lane.b32.xlu0 %v1560, 2
        %v1795 = vpop.permute.xlu0 %1794
        %1796 = vrot.lane.b32.xlu0 %v1567, 2
        %v1797 = vpop.permute.xlu0 %1796
        %1798 = vrot.lane.b32.xlu0 %v1574, 2
        %v1799 = vpop.permute.xlu0 %1798
        %1800 = vrot.lane.b32.xlu0 %v1581, 2
        %v1801 = vpop.permute.xlu0 %1800
        %1802 = vrot.lane.b32.xlu0 %v1588, 2
        %v1803 = vpop.permute.xlu0 %1802
        %1804 = vrot.lane.b32.xlu0 %v1595, 2
        %v1805 = vpop.permute.xlu0 %1804
        %1806 = vrot.lane.b32.xlu0 %v1602, 2
        %v1807 = vpop.permute.xlu0 %1806
        %1808 = vrot.lane.b32.xlu0 %v1609, 2
        %v1809 = vpop.permute.xlu0 %1808
        %v1810 = vrot.slane %v810, 1
        %v1811 = vrot.slane %v811, 1
        %v1812 = vrot.slane %v812, 1
        %v1813 = vrot.slane %v813, 1
        %v1814 = vrot.slane %v814, 1
        %v1815 = vrot.slane %v815, 1
        %v1816 = vrot.slane %v816, 1
        %v1817 = vrot.slane %v817, 1
        %v1818 = vrot.slane %v818, 1
        %v1819 = vrot.slane %v819, 1
        %v1820 = vrot.slane %v820, 1
        %v1821 = vrot.slane %v821, 1
        %v1822 = vrot.slane %v822, 1
        %v1823 = vrot.slane %v823, 1
        %v1824 = vrot.slane %v824, 1
        %v1825 = vrot.slane %v825, 1
        %v1826 = vrot.slane %v826, 1
        %v1827 = vrot.slane %v827, 1
        %v1828 = vrot.slane %v828, 1
        %v1829 = vrot.slane %v829, 1
        %v1830 = vrot.slane %v830, 1
        %v1831 = vrot.slane %v831, 1
        %v1832 = vrot.slane %v832, 1
        %v1833 = vrot.slane %v833, 1
        %v1834 = vrot.slane %v834, 1
        %v1835 = vrot.slane %v835, 1
        %v1836 = vrot.slane %v836, 1
        %v1837 = vrot.slane %v837, 1
        %v1838 = vrot.slane %v838, 1
        %v1839 = vrot.slane %v839, 1
        %v1840 = vrot.slane %v840, 1
        %v1841 = vrot.slane %v841, 1
        %v1842 = vrot.slane %v842, 1
        %v1843 = vrot.slane %v843, 1
        %v1844 = vrot.slane %v844, 1
        %v1845 = vrot.slane %v845, 1
        %v1846 = vrot.slane %v846, 1
        %v1847 = vrot.slane %v847, 1
        %v1848 = vrot.slane %v848, 1
        %v1849 = vrot.slane %v849, 1
        %v1850 = vrot.slane %v850, 1
        %v1851 = vrot.slane %v851, 1
        %v1852 = vrot.slane %v852, 1
        %v1853 = vrot.slane %v853, 1
        %v1854 = vrot.slane %v854, 1
        %v1855 = vrot.slane %v855, 1
        %v1856 = vrot.slane %v856, 1
        %v1857 = vrot.slane %v857, 1
        %v1858 = vrot.slane %v858, 1
        %v1859 = vrot.slane %v859, 1
        %v1860 = vrot.slane %v860, 1
        %v1861 = vrot.slane %v861, 1
        %v1862 = vrot.slane %v862, 1
        %v1863 = vrot.slane %v863, 1
        %v1864 = vrot.slane %v864, 1
        %v1865 = vrot.slane %v865, 1
        %v1866 = vrot.slane %v866, 1
        %v1867 = vrot.slane %v867, 1
        %v1868 = vrot.slane %v868, 1
        %v1869 = vrot.slane %v869, 1
        %v1870 = vrot.slane %v870, 1
        %v1871 = vrot.slane %v871, 1
        %v1872 = vrot.slane %v872, 1
        %v1873 = vrot.slane %v873, 1
        %v1874 = vrot.slane %v874, 1
        %v1875 = vrot.slane %v875, 1
        %v1876 = vrot.slane %v876, 1
        %v1877 = vrot.slane %v877, 1
        %v1878 = vrot.slane %v878, 1
        %v1879 = vrot.slane %v879, 1
        %v1880 = vrot.slane %v880, 1
        %v1881 = vrot.slane %v881, 1
        %v1882 = vrot.slane %v882, 1
        %v1883 = vrot.slane %v883, 1
        %v1884 = vrot.slane %v884, 1
        %v1885 = vrot.slane %v885, 1
        %v1886 = vrot.slane %v886, 1
        %v1887 = vrot.slane %v887, 1
        %v1888 = vrot.slane %v888, 1
        %v1889 = vrot.slane %v889, 1
        %v1890 = vrot.slane %v890, 1
        %v1891 = vrot.slane %v891, 1
        %v1892 = vrot.slane %v892, 1
        %v1893 = vrot.slane %v893, 1
        %v1894 = vrot.slane %v894, 1
        %v1895 = vrot.slane %v895, 1
        %v1896 = vrot.slane %v896, 1
        %v1897 = vrot.slane %v897, 1
        %v1898 = vrot.slane %v898, 1
        %v1899 = vrot.slane %v899, 1
        %v1900 = vrot.slane %v900, 1
        %v1901 = vrot.slane %v901, 1
        %v1902 = vrot.slane %v902, 1
        %v1903 = vrot.slane %v903, 1
        %v1904 = vrot.slane %v904, 1
        %v1905 = vrot.slane %v905, 1
        %v1906 = vrot.slane %v906, 1
        %v1907 = vrot.slane %v907, 1
        %v1908 = vrot.slane %v908, 1
        %v1909 = vrot.slane %v909, 1
        %1910 = vrot.lane.b32.xlu0 %v1810, 4
        %v1911 = vpop.permute.xlu0 %1910
        %1912 = vrot.lane.b32.xlu0 %v1811, 4
        %v1913 = vpop.permute.xlu0 %1912
        %1914 = vrot.lane.b32.xlu0 %v1812, 4
        %v1915 = vpop.permute.xlu0 %1914
        %1916 = vrot.lane.b32.xlu0 %v1813, 4
        %v1917 = vpop.permute.xlu0 %1916
        %1918 = vrot.lane.b32.xlu0 %v1814, 4
        %v1919 = vpop.permute.xlu0 %1918
        %1920 = vrot.lane.b32.xlu0 %v1815, 4
        %v1921 = vpop.permute.xlu0 %1920
        %1922 = vrot.lane.b32.xlu0 %v1816, 4
        %v1923 = vpop.permute.xlu0 %1922
        %1924 = vrot.lane.b32.xlu0 %v1817, 4
        %v1925 = vpop.permute.xlu0 %1924
        %1926 = vrot.lane.b32.xlu0 %v1818, 4
        %v1927 = vpop.permute.xlu0 %1926
        %1928 = vrot.lane.b32.xlu0 %v1819, 4
        %v1929 = vpop.permute.xlu0 %1928
        %1930 = vrot.lane.b32.xlu0 %v1820, 4
        %v1931 = vpop.permute.xlu0 %1930
        %1932 = vrot.lane.b32.xlu0 %v1821, 4
        %v1933 = vpop.permute.xlu0 %1932
        %1934 = vrot.lane.b32.xlu0 %v1822, 4
        %v1935 = vpop.permute.xlu0 %1934
        %1936 = vrot.lane.b32.xlu0 %v1823, 4
        %v1937 = vpop.permute.xlu0 %1936
        %1938 = vrot.lane.b32.xlu0 %v1824, 4
        %v1939 = vpop.permute.xlu0 %1938
        %1940 = vrot.lane.b32.xlu0 %v1825, 4
        %v1941 = vpop.permute.xlu0 %1940
        %1942 = vrot.lane.b32.xlu0 %v1826, 4
        %v1943 = vpop.permute.xlu0 %1942
        %1944 = vrot.lane.b32.xlu0 %v1827, 4
        %v1945 = vpop.permute.xlu0 %1944
        %1946 = vrot.lane.b32.xlu0 %v1828, 4
        %v1947 = vpop.permute.xlu0 %1946
        %1948 = vrot.lane.b32.xlu0 %v1829, 4
        %v1949 = vpop.permute.xlu0 %1948
        %1950 = vrot.lane.b32.xlu0 %v1830, 4
        %v1951 = vpop.permute.xlu0 %1950
        %1952 = vrot.lane.b32.xlu0 %v1831, 4
        %v1953 = vpop.permute.xlu0 %1952
        %1954 = vrot.lane.b32.xlu0 %v1832, 4
        %v1955 = vpop.permute.xlu0 %1954
        %1956 = vrot.lane.b32.xlu0 %v1833, 4
        %v1957 = vpop.permute.xlu0 %1956
        %1958 = vrot.lane.b32.xlu0 %v1834, 4
        %v1959 = vpop.permute.xlu0 %1958
        %1960 = vrot.lane.b32.xlu0 %v1835, 4
        %v1961 = vpop.permute.xlu0 %1960
        %1962 = vrot.lane.b32.xlu0 %v1836, 4
        %v1963 = vpop.permute.xlu0 %1962
        %1964 = vrot.lane.b32.xlu0 %v1837, 4
        %v1965 = vpop.permute.xlu0 %1964
        %1966 = vrot.lane.b32.xlu0 %v1838, 4
        %v1967 = vpop.permute.xlu0 %1966
        %1968 = vrot.lane.b32.xlu0 %v1839, 4
        %v1969 = vpop.permute.xlu0 %1968
        %1970 = vrot.lane.b32.xlu0 %v1840, 4
        %v1971 = vpop.permute.xlu0 %1970
        %1972 = vrot.lane.b32.xlu0 %v1841, 4
        %v1973 = vpop.permute.xlu0 %1972
        %1974 = vrot.lane.b32.xlu0 %v1842, 4
        %v1975 = vpop.permute.xlu0 %1974
        %1976 = vrot.lane.b32.xlu0 %v1843, 4
        %v1977 = vpop.permute.xlu0 %1976
        %1978 = vrot.lane.b32.xlu0 %v1844, 4
        %v1979 = vpop.permute.xlu0 %1978
        %1980 = vrot.lane.b32.xlu0 %v1845, 4
        %v1981 = vpop.permute.xlu0 %1980
        %1982 = vrot.lane.b32.xlu0 %v1846, 4
        %v1983 = vpop.permute.xlu0 %1982
        %1984 = vrot.lane.b32.xlu0 %v1847, 4
        %v1985 = vpop.permute.xlu0 %1984
        %1986 = vrot.lane.b32.xlu0 %v1848, 4
        %v1987 = vpop.permute.xlu0 %1986
        %1988 = vrot.lane.b32.xlu0 %v1849, 4
        %v1989 = vpop.permute.xlu0 %1988
        %1990 = vrot.lane.b32.xlu0 %v1850, 4
        %v1991 = vpop.permute.xlu0 %1990
        %1992 = vrot.lane.b32.xlu0 %v1851, 4
        %v1993 = vpop.permute.xlu0 %1992
        %1994 = vrot.lane.b32.xlu0 %v1852, 4
        %v1995 = vpop.permute.xlu0 %1994
        %1996 = vrot.lane.b32.xlu0 %v1853, 4
        %v1997 = vpop.permute.xlu0 %1996
        %1998 = vrot.lane.b32.xlu0 %v1854, 4
        %v1999 = vpop.permute.xlu0 %1998
        %2000 = vrot.lane.b32.xlu0 %v1855, 4
        %v2001 = vpop.permute.xlu0 %2000
        %2002 = vrot.lane.b32.xlu0 %v1856, 4
        %v2003 = vpop.permute.xlu0 %2002
        %2004 = vrot.lane.b32.xlu0 %v1857, 4
        %v2005 = vpop.permute.xlu0 %2004
        %2006 = vrot.lane.b32.xlu0 %v1858, 4
        %v2007 = vpop.permute.xlu0 %2006
        %2008 = vrot.lane.b32.xlu0 %v1859, 4
        %v2009 = vpop.permute.xlu0 %2008
        %2010 = vrot.lane.b32.xlu0 %v1860, 4
        %v2011 = vpop.permute.xlu0 %2010
        %2012 = vrot.lane.b32.xlu0 %v1861, 4
        %v2013 = vpop.permute.xlu0 %2012
        %2014 = vrot.lane.b32.xlu0 %v1862, 4
        %v2015 = vpop.permute.xlu0 %2014
        %2016 = vrot.lane.b32.xlu0 %v1863, 4
        %v2017 = vpop.permute.xlu0 %2016
        %2018 = vrot.lane.b32.xlu0 %v1864, 4
        %v2019 = vpop.permute.xlu0 %2018
        %2020 = vrot.lane.b32.xlu0 %v1865, 4
        %v2021 = vpop.permute.xlu0 %2020
        %2022 = vrot.lane.b32.xlu0 %v1866, 4
        %v2023 = vpop.permute.xlu0 %2022
        %2024 = vrot.lane.b32.xlu0 %v1867, 4
        %v2025 = vpop.permute.xlu0 %2024
        %2026 = vrot.lane.b32.xlu0 %v1868, 4
        %v2027 = vpop.permute.xlu0 %2026
        %2028 = vrot.lane.b32.xlu0 %v1869, 4
        %v2029 = vpop.permute.xlu0 %2028
        %2030 = vrot.lane.b32.xlu0 %v1870, 4
        %v2031 = vpop.permute.xlu0 %2030
        %2032 = vrot.lane.b32.xlu0 %v1871, 4
        %v2033 = vpop.permute.xlu0 %2032
        %2034 = vrot.lane.b32.xlu0 %v1872, 4
        %v2035 = vpop.permute.xlu0 %2034
        %2036 = vrot.lane.b32.xlu0 %v1873, 4
        %v2037 = vpop.permute.xlu0 %2036
        %2038 = vrot.lane.b32.xlu0 %v1874, 4
        %v2039 = vpop.permute.xlu0 %2038
        %2040 = vrot.lane.b32.xlu0 %v1875, 4
        %v2041 = vpop.permute.xlu0 %2040
        %2042 = vrot.lane.b32.xlu0 %v1876, 4
        %v2043 = vpop.permute.xlu0 %2042
        %2044 = vrot.lane.b32.xlu0 %v1877, 4
        %v2045 = vpop.permute.xlu0 %2044
        %2046 = vrot.lane.b32.xlu0 %v1878, 4
        %v2047 = vpop.permute.xlu0 %2046
        %2048 = vrot.lane.b32.xlu0 %v1879, 4
        %v2049 = vpop.permute.xlu0 %2048
        %2050 = vrot.lane.b32.xlu0 %v1880, 4
        %v2051 = vpop.permute.xlu0 %2050
        %2052 = vrot.lane.b32.xlu0 %v1881, 4
        %v2053 = vpop.permute.xlu0 %2052
        %2054 = vrot.lane.b32.xlu0 %v1882, 4
        %v2055 = vpop.permute.xlu0 %2054
        %2056 = vrot.lane.b32.xlu0 %v1883, 4
        %v2057 = vpop.permute.xlu0 %2056
        %2058 = vrot.lane.b32.xlu0 %v1884, 4
        %v2059 = vpop.permute.xlu0 %2058
        %2060 = vrot.lane.b32.xlu0 %v1885, 4
        %v2061 = vpop.permute.xlu0 %2060
        %2062 = vrot.lane.b32.xlu0 %v1886, 4
        %v2063 = vpop.permute.xlu0 %2062
        %2064 = vrot.lane.b32.xlu0 %v1887, 4
        %v2065 = vpop.permute.xlu0 %2064
        %2066 = vrot.lane.b32.xlu0 %v1888, 4
        %v2067 = vpop.permute.xlu0 %2066
        %2068 = vrot.lane.b32.xlu0 %v1889, 4
        %v2069 = vpop.permute.xlu0 %2068
        %2070 = vrot.lane.b32.xlu0 %v1890, 4
        %v2071 = vpop.permute.xlu0 %2070
        %2072 = vrot.lane.b32.xlu0 %v1891, 4
        %v2073 = vpop.permute.xlu0 %2072
        %2074 = vrot.lane.b32.xlu0 %v1892, 4
        %v2075 = vpop.permute.xlu0 %2074
        %2076 = vrot.lane.b32.xlu0 %v1893, 4
        %v2077 = vpop.permute.xlu0 %2076
        %2078 = vrot.lane.b32.xlu0 %v1894, 4
        %v2079 = vpop.permute.xlu0 %2078
        %2080 = vrot.lane.b32.xlu0 %v1895, 4
        %v2081 = vpop.permute.xlu0 %2080
        %2082 = vrot.lane.b32.xlu0 %v1896, 4
        %v2083 = vpop.permute.xlu0 %2082
        %2084 = vrot.lane.b32.xlu0 %v1897, 4
        %v2085 = vpop.permute.xlu0 %2084
        %2086 = vrot.lane.b32.xlu0 %v1898, 4
        %v2087 = vpop.permute.xlu0 %2086
        %2088 = vrot.lane.b32.xlu0 %v1899, 4
        %v2089 = vpop.permute.xlu0 %2088
        %2090 = vrot.lane.b32.xlu0 %v1900, 4
        %v2091 = vpop.permute.xlu0 %2090
        %2092 = vrot.lane.b32.xlu0 %v1901, 4
        %v2093 = vpop.permute.xlu0 %2092
        %2094 = vrot.lane.b32.xlu0 %v1902, 4
        %v2095 = vpop.permute.xlu0 %2094
        %2096 = vrot.lane.b32.xlu0 %v1903, 4
        %v2097 = vpop.permute.xlu0 %2096
        %2098 = vrot.lane.b32.xlu0 %v1904, 4
        %v2099 = vpop.permute.xlu0 %2098
        %2100 = vrot.lane.b32.xlu0 %v1905, 4
        %v2101 = vpop.permute.xlu0 %2100
        %2102 = vrot.lane.b32.xlu0 %v1906, 4
        %v2103 = vpop.permute.xlu0 %2102
        %2104 = vrot.lane.b32.xlu0 %v1907, 4
        %v2105 = vpop.permute.xlu0 %2104
        %2106 = vrot.lane.b32.xlu0 %v1908, 4
        %v2107 = vpop.permute.xlu0 %2106
        %2108 = vrot.lane.b32.xlu0 %v1909, 4
        %v2109 = vpop.permute.xlu0 %2108
        %vm2110 = vcmask 15360
        %v2113 = vsel %vm2110, %v210, %v1611
        %v2116 = vsel %vm2110, %v212, %v1613
        %v2119 = vsel %vm2110, %v214, %v1615
        %v2122 = vsel %vm2110, %v216, %v1617
        %v2125 = vsel %vm2110, %v218, %v1619
        %v2128 = vsel %vm2110, %v220, %v1621
        %v2131 = vsel %vm2110, %v222, %v1623
        %v2134 = vsel %vm2110, %v224, %v1625
        %v2137 = vsel %vm2110, %v226, %v1627
        %v2140 = vsel %vm2110, %v228, %v1629
        %v2143 = vsel %vm2110, %v230, %v1631
        %v2146 = vsel %vm2110, %v232, %v1633
        %v2149 = vsel %vm2110, %v234, %v1635
        %v2152 = vsel %vm2110, %v236, %v1637
        %v2155 = vsel %vm2110, %v238, %v1639
        %v2158 = vsel %vm2110, %v240, %v1641
        %v2161 = vsel %vm2110, %v242, %v1643
        %v2164 = vsel %vm2110, %v244, %v1645
        %v2167 = vsel %vm2110, %v246, %v1647
        %v2170 = vsel %vm2110, %v248, %v1649
        %v2173 = vsel %vm2110, %v250, %v1651
        %v2176 = vsel %vm2110, %v252, %v1653
        %v2179 = vsel %vm2110, %v254, %v1655
        %v2182 = vsel %vm2110, %v256, %v1657
        %v2185 = vsel %vm2110, %v258, %v1659
        %v2188 = vsel %vm2110, %v260, %v1661
        %v2191 = vsel %vm2110, %v262, %v1663
        %v2194 = vsel %vm2110, %v264, %v1665
        %v2197 = vsel %vm2110, %v266, %v1667
        %v2200 = vsel %vm2110, %v268, %v1669
        %v2203 = vsel %vm2110, %v270, %v1671
        %v2206 = vsel %vm2110, %v272, %v1673
        %v2209 = vsel %vm2110, %v274, %v1675
        %v2212 = vsel %vm2110, %v276, %v1677
        %v2215 = vsel %vm2110, %v278, %v1679
        %v2218 = vsel %vm2110, %v280, %v1681
        %v2221 = vsel %vm2110, %v282, %v1683
        %v2224 = vsel %vm2110, %v284, %v1685
        %v2227 = vsel %vm2110, %v286, %v1687
        %v2230 = vsel %vm2110, %v288, %v1689
        %v2233 = vsel %vm2110, %v290, %v1691
        %v2236 = vsel %vm2110, %v292, %v1693
        %v2239 = vsel %vm2110, %v294, %v1695
        %v2242 = vsel %vm2110, %v296, %v1697
        %v2245 = vsel %vm2110, %v298, %v1699
        %v2248 = vsel %vm2110, %v300, %v1701
        %v2251 = vsel %vm2110, %v302, %v1703
        %v2254 = vsel %vm2110, %v304, %v1705
        %v2257 = vsel %vm2110, %v306, %v1707
        %v2260 = vsel %vm2110, %v308, %v1709
        %v2263 = vsel %vm2110, %v310, %v1711
        %v2266 = vsel %vm2110, %v312, %v1713
        %v2269 = vsel %vm2110, %v314, %v1715
        %v2272 = vsel %vm2110, %v316, %v1717
        %v2275 = vsel %vm2110, %v318, %v1719
        %v2278 = vsel %vm2110, %v320, %v1721
        %v2281 = vsel %vm2110, %v322, %v1723
        %v2284 = vsel %vm2110, %v324, %v1725
        %v2287 = vsel %vm2110, %v326, %v1727
        %v2290 = vsel %vm2110, %v328, %v1729
        %v2293 = vsel %vm2110, %v330, %v1731
        %v2296 = vsel %vm2110, %v332, %v1733
        %v2299 = vsel %vm2110, %v334, %v1735
        %v2302 = vsel %vm2110, %v336, %v1737
        %v2305 = vsel %vm2110, %v338, %v1739
        %v2308 = vsel %vm2110, %v340, %v1741
        %v2311 = vsel %vm2110, %v342, %v1743
        %v2314 = vsel %vm2110, %v344, %v1745
        %v2317 = vsel %vm2110, %v346, %v1747
        %v2320 = vsel %vm2110, %v348, %v1749
        %v2323 = vsel %vm2110, %v350, %v1751
        %v2326 = vsel %vm2110, %v352, %v1753
        %v2329 = vsel %vm2110, %v354, %v1755
        %v2332 = vsel %vm2110, %v356, %v1757
        %v2335 = vsel %vm2110, %v358, %v1759
        %v2338 = vsel %vm2110, %v360, %v1761
        %v2341 = vsel %vm2110, %v362, %v1763
        %v2344 = vsel %vm2110, %v364, %v1765
        %v2347 = vsel %vm2110, %v366, %v1767
        %v2350 = vsel %vm2110, %v368, %v1769
        %v2353 = vsel %vm2110, %v370, %v1771
        %v2356 = vsel %vm2110, %v372, %v1773
        %v2359 = vsel %vm2110, %v374, %v1775
        %v2362 = vsel %vm2110, %v376, %v1777
        %v2365 = vsel %vm2110, %v378, %v1779
        %v2368 = vsel %vm2110, %v380, %v1781
        %v2371 = vsel %vm2110, %v382, %v1783
        %v2374 = vsel %vm2110, %v384, %v1785
        %v2377 = vsel %vm2110, %v386, %v1787
        %v2380 = vsel %vm2110, %v388, %v1789
        %v2383 = vsel %vm2110, %v390, %v1791
        %v2386 = vsel %vm2110, %v392, %v1793
        %v2389 = vsel %vm2110, %v394, %v1795
        %v2392 = vsel %vm2110, %v396, %v1797
        %v2395 = vsel %vm2110, %v398, %v1799
        %v2398 = vsel %vm2110, %v400, %v1801
        %v2401 = vsel %vm2110, %v402, %v1803
        %v2404 = vsel %vm2110, %v404, %v1805
        %v2407 = vsel %vm2110, %v406, %v1807
        %v2410 = vsel %vm2110, %v408, %v1809
        %vm2411 = vcmask 31744
        %v2413 = vsel %vm2411, %v2113, %v1911
        %v2415 = vsel %vm2411, %v2116, %v1913
        %v2417 = vsel %vm2411, %v2119, %v1915
        %v2419 = vsel %vm2411, %v2122, %v1917
        %v2421 = vsel %vm2411, %v2125, %v1919
        %v2423 = vsel %vm2411, %v2128, %v1921
        %v2425 = vsel %vm2411, %v2131, %v1923
        %v2427 = vsel %vm2411, %v2134, %v1925
        %v2429 = vsel %vm2411, %v2137, %v1927
        %v2431 = vsel %vm2411, %v2140, %v1929
        %v2433 = vsel %vm2411, %v2143, %v1931
        %v2435 = vsel %vm2411, %v2146, %v1933
        %v2437 = vsel %vm2411, %v2149, %v1935
        %v2439 = vsel %vm2411, %v2152, %v1937
        %v2441 = vsel %vm2411, %v2155, %v1939
        %v2443 = vsel %vm2411, %v2158, %v1941
        %v2445 = vsel %vm2411, %v2161, %v1943
        %v2447 = vsel %vm2411, %v2164, %v1945
        %v2449 = vsel %vm2411, %v2167, %v1947
        %v2451 = vsel %vm2411, %v2170, %v1949
        %v2453 = vsel %vm2411, %v2173, %v1951
        %v2455 = vsel %vm2411, %v2176, %v1953
        %v2457 = vsel %vm2411, %v2179, %v1955
        %v2459 = vsel %vm2411, %v2182, %v1957
        %v2461 = vsel %vm2411, %v2185, %v1959
        %v2463 = vsel %vm2411, %v2188, %v1961
        %v2465 = vsel %vm2411, %v2191, %v1963
        %v2467 = vsel %vm2411, %v2194, %v1965
        %v2469 = vsel %vm2411, %v2197, %v1967
        %v2471 = vsel %vm2411, %v2200, %v1969
        %v2473 = vsel %vm2411, %v2203, %v1971
        %v2475 = vsel %vm2411, %v2206, %v1973
        %v2477 = vsel %vm2411, %v2209, %v1975
        %v2479 = vsel %vm2411, %v2212, %v1977
        %v2481 = vsel %vm2411, %v2215, %v1979
        %v2483 = vsel %vm2411, %v2218, %v1981
        %v2485 = vsel %vm2411, %v2221, %v1983
        %v2487 = vsel %vm2411, %v2224, %v1985
        %v2489 = vsel %vm2411, %v2227, %v1987
        %v2491 = vsel %vm2411, %v2230, %v1989
        %v2493 = vsel %vm2411, %v2233, %v1991
        %v2495 = vsel %vm2411, %v2236, %v1993
        %v2497 = vsel %vm2411, %v2239, %v1995
        %v2499 = vsel %vm2411, %v2242, %v1997
        %v2501 = vsel %vm2411, %v2245, %v1999
        %v2503 = vsel %vm2411, %v2248, %v2001
        %v2505 = vsel %vm2411, %v2251, %v2003
        %v2507 = vsel %vm2411, %v2254, %v2005
        %v2509 = vsel %vm2411, %v2257, %v2007
        %v2511 = vsel %vm2411, %v2260, %v2009
        %v2513 = vsel %vm2411, %v2263, %v2011
        %v2515 = vsel %vm2411, %v2266, %v2013
        %v2517 = vsel %vm2411, %v2269, %v2015
        %v2519 = vsel %vm2411, %v2272, %v2017
        %v2521 = vsel %vm2411, %v2275, %v2019
        %v2523 = vsel %vm2411, %v2278, %v2021
        %v2525 = vsel %vm2411, %v2281, %v2023
        %v2527 = vsel %vm2411, %v2284, %v2025
        %v2529 = vsel %vm2411, %v2287, %v2027
        %v2531 = vsel %vm2411, %v2290, %v2029
        %v2533 = vsel %vm2411, %v2293, %v2031
        %v2535 = vsel %vm2411, %v2296, %v2033
        %v2537 = vsel %vm2411, %v2299, %v2035
        %v2539 = vsel %vm2411, %v2302, %v2037
        %v2541 = vsel %vm2411, %v2305, %v2039
        %v2543 = vsel %vm2411, %v2308, %v2041
        %v2545 = vsel %vm2411, %v2311, %v2043
        %v2547 = vsel %vm2411, %v2314, %v2045
        %v2549 = vsel %vm2411, %v2317, %v2047
        %v2551 = vsel %vm2411, %v2320, %v2049
        %v2553 = vsel %vm2411, %v2323, %v2051
        %v2555 = vsel %vm2411, %v2326, %v2053
        %v2557 = vsel %vm2411, %v2329, %v2055
        %v2559 = vsel %vm2411, %v2332, %v2057
        %v2561 = vsel %vm2411, %v2335, %v2059
        %v2563 = vsel %vm2411, %v2338, %v2061
        %v2565 = vsel %vm2411, %v2341, %v2063
        %v2567 = vsel %vm2411, %v2344, %v2065
        %v2569 = vsel %vm2411, %v2347, %v2067
        %v2571 = vsel %vm2411, %v2350, %v2069
        %v2573 = vsel %vm2411, %v2353, %v2071
        %v2575 = vsel %vm2411, %v2356, %v2073
        %v2577 = vsel %vm2411, %v2359, %v2075
        %v2579 = vsel %vm2411, %v2362, %v2077
        %v2581 = vsel %vm2411, %v2365, %v2079
        %v2583 = vsel %vm2411, %v2368, %v2081
        %v2585 = vsel %vm2411, %v2371, %v2083
        %v2587 = vsel %vm2411, %v2374, %v2085
        %v2589 = vsel %vm2411, %v2377, %v2087
        %v2591 = vsel %vm2411, %v2380, %v2089
        %v2593 = vsel %vm2411, %v2383, %v2091
        %v2595 = vsel %vm2411, %v2386, %v2093
        %v2597 = vsel %vm2411, %v2389, %v2095
        %v2599 = vsel %vm2411, %v2392, %v2097
        %v2601 = vsel %vm2411, %v2395, %v2099
        %v2603 = vsel %vm2411, %v2398, %v2101
        %v2605 = vsel %vm2411, %v2401, %v2103
        %v2607 = vsel %vm2411, %v2404, %v2105
        %v2609 = vsel %vm2411, %v2407, %v2107
        %v2611 = vsel %vm2411, %v2410, %v2109
        %2692 = vrot.lane.b32.xlu0 %v2415, 6
        %v2693 = vpop.permute.xlu0 %2692
        %2694 = vrot.lane.b32.xlu0 %v2417, 6
        %v2695 = vpop.permute.xlu0 %2694
        %2696 = vrot.lane.b32.xlu0 %v2419, 6
        %v2697 = vpop.permute.xlu0 %2696
        %2698 = vrot.lane.b32.xlu0 %v2421, 6
        %v2699 = vpop.permute.xlu0 %2698
        %2700 = vrot.lane.b32.xlu0 %v2423, 6
        %v2701 = vpop.permute.xlu0 %2700
        %2702 = vrot.lane.b32.xlu0 %v2425, 6
        %v2703 = vpop.permute.xlu0 %2702
        %2704 = vrot.lane.b32.xlu0 %v2427, 6
        %v2705 = vpop.permute.xlu0 %2704
        %2706 = vrot.lane.b32.xlu0 %v2429, 6
        %v2707 = vpop.permute.xlu0 %2706
        %2708 = vrot.lane.b32.xlu0 %v2435, 6
        %v2709 = vpop.permute.xlu0 %2708
        %2710 = vrot.lane.b32.xlu0 %v2437, 6
        %v2711 = vpop.permute.xlu0 %2710
        %2712 = vrot.lane.b32.xlu0 %v2439, 6
        %v2713 = vpop.permute.xlu0 %2712
        %2714 = vrot.lane.b32.xlu0 %v2441, 6
        %v2715 = vpop.permute.xlu0 %2714
        %2716 = vrot.lane.b32.xlu0 %v2443, 6
        %v2717 = vpop.permute.xlu0 %2716
        %2718 = vrot.lane.b32.xlu0 %v2445, 6
        %v2719 = vpop.permute.xlu0 %2718
        %2720 = vrot.lane.b32.xlu0 %v2447, 6
        %v2721 = vpop.permute.xlu0 %2720
        %2722 = vrot.lane.b32.xlu0 %v2449, 6
        %v2723 = vpop.permute.xlu0 %2722
        %2724 = vrot.lane.b32.xlu0 %v2455, 6
        %v2725 = vpop.permute.xlu0 %2724
        %2726 = vrot.lane.b32.xlu0 %v2457, 6
        %v2727 = vpop.permute.xlu0 %2726
        %2728 = vrot.lane.b32.xlu0 %v2459, 6
        %v2729 = vpop.permute.xlu0 %2728
        %2730 = vrot.lane.b32.xlu0 %v2461, 6
        %v2731 = vpop.permute.xlu0 %2730
        %2732 = vrot.lane.b32.xlu0 %v2463, 6
        %v2733 = vpop.permute.xlu0 %2732
        %2734 = vrot.lane.b32.xlu0 %v2465, 6
        %v2735 = vpop.permute.xlu0 %2734
        %2736 = vrot.lane.b32.xlu0 %v2467, 6
        %v2737 = vpop.permute.xlu0 %2736
        %2738 = vrot.lane.b32.xlu0 %v2469, 6
        %v2739 = vpop.permute.xlu0 %2738
        %2740 = vrot.lane.b32.xlu0 %v2475, 6
        %v2741 = vpop.permute.xlu0 %2740
        %2742 = vrot.lane.b32.xlu0 %v2477, 6
        %v2743 = vpop.permute.xlu0 %2742
        %2744 = vrot.lane.b32.xlu0 %v2479, 6
        %v2745 = vpop.permute.xlu0 %2744
        %2746 = vrot.lane.b32.xlu0 %v2481, 6
        %v2747 = vpop.permute.xlu0 %2746
        %2748 = vrot.lane.b32.xlu0 %v2483, 6
        %v2749 = vpop.permute.xlu0 %2748
        %2750 = vrot.lane.b32.xlu0 %v2485, 6
        %v2751 = vpop.permute.xlu0 %2750
        %2752 = vrot.lane.b32.xlu0 %v2487, 6
        %v2753 = vpop.permute.xlu0 %2752
        %2754 = vrot.lane.b32.xlu0 %v2489, 6
        %v2755 = vpop.permute.xlu0 %2754
        %2756 = vrot.lane.b32.xlu0 %v2495, 6
        %v2757 = vpop.permute.xlu0 %2756
        %2758 = vrot.lane.b32.xlu0 %v2497, 6
        %v2759 = vpop.permute.xlu0 %2758
        %2760 = vrot.lane.b32.xlu0 %v2499, 6
        %v2761 = vpop.permute.xlu0 %2760
        %2762 = vrot.lane.b32.xlu0 %v2501, 6
        %v2763 = vpop.permute.xlu0 %2762
        %2764 = vrot.lane.b32.xlu0 %v2503, 6
        %v2765 = vpop.permute.xlu0 %2764
        %2766 = vrot.lane.b32.xlu0 %v2505, 6
        %v2767 = vpop.permute.xlu0 %2766
        %2768 = vrot.lane.b32.xlu0 %v2507, 6
        %v2769 = vpop.permute.xlu0 %2768
        %2770 = vrot.lane.b32.xlu0 %v2509, 6
        %v2771 = vpop.permute.xlu0 %2770
        %2772 = vrot.lane.b32.xlu0 %v2515, 6
        %v2773 = vpop.permute.xlu0 %2772
        %2774 = vrot.lane.b32.xlu0 %v2517, 6
        %v2775 = vpop.permute.xlu0 %2774
        %2776 = vrot.lane.b32.xlu0 %v2519, 6
        %v2777 = vpop.permute.xlu0 %2776
        %2778 = vrot.lane.b32.xlu0 %v2521, 6
        %v2779 = vpop.permute.xlu0 %2778
        %2780 = vrot.lane.b32.xlu0 %v2523, 6
        %v2781 = vpop.permute.xlu0 %2780
        %2782 = vrot.lane.b32.xlu0 %v2525, 6
        %v2783 = vpop.permute.xlu0 %2782
        %2784 = vrot.lane.b32.xlu0 %v2527, 6
        %v2785 = vpop.permute.xlu0 %2784
        %2786 = vrot.lane.b32.xlu0 %v2529, 6
        %v2787 = vpop.permute.xlu0 %2786
        %2788 = vrot.lane.b32.xlu0 %v2535, 6
        %v2789 = vpop.permute.xlu0 %2788
        %2790 = vrot.lane.b32.xlu0 %v2537, 6
        %v2791 = vpop.permute.xlu0 %2790
        %2792 = vrot.lane.b32.xlu0 %v2539, 6
        %v2793 = vpop.permute.xlu0 %2792
        %2794 = vrot.lane.b32.xlu0 %v2541, 6
        %v2795 = vpop.permute.xlu0 %2794
        %2796 = vrot.lane.b32.xlu0 %v2543, 6
        %v2797 = vpop.permute.xlu0 %2796
        %2798 = vrot.lane.b32.xlu0 %v2545, 6
        %v2799 = vpop.permute.xlu0 %2798
        %2800 = vrot.lane.b32.xlu0 %v2547, 6
        %v2801 = vpop.permute.xlu0 %2800
        %2802 = vrot.lane.b32.xlu0 %v2549, 6
        %v2803 = vpop.permute.xlu0 %2802
        %2804 = vrot.lane.b32.xlu0 %v2555, 6
        %v2805 = vpop.permute.xlu0 %2804
        %2806 = vrot.lane.b32.xlu0 %v2557, 6
        %v2807 = vpop.permute.xlu0 %2806
        %2808 = vrot.lane.b32.xlu0 %v2559, 6
        %v2809 = vpop.permute.xlu0 %2808
        %2810 = vrot.lane.b32.xlu0 %v2561, 6
        %v2811 = vpop.permute.xlu0 %2810
        %2812 = vrot.lane.b32.xlu0 %v2563, 6
        %v2813 = vpop.permute.xlu0 %2812
        %2814 = vrot.lane.b32.xlu0 %v2565, 6
        %v2815 = vpop.permute.xlu0 %2814
        %2816 = vrot.lane.b32.xlu0 %v2567, 6
        %v2817 = vpop.permute.xlu0 %2816
        %2818 = vrot.lane.b32.xlu0 %v2569, 6
        %v2819 = vpop.permute.xlu0 %2818
        %2820 = vrot.lane.b32.xlu0 %v2575, 6
        %v2821 = vpop.permute.xlu0 %2820
        %2822 = vrot.lane.b32.xlu0 %v2577, 6
        %v2823 = vpop.permute.xlu0 %2822
        %2824 = vrot.lane.b32.xlu0 %v2579, 6
        %v2825 = vpop.permute.xlu0 %2824
        %2826 = vrot.lane.b32.xlu0 %v2581, 6
        %v2827 = vpop.permute.xlu0 %2826
        %2828 = vrot.lane.b32.xlu0 %v2583, 6
        %v2829 = vpop.permute.xlu0 %2828
        %2830 = vrot.lane.b32.xlu0 %v2585, 6
        %v2831 = vpop.permute.xlu0 %2830
        %2832 = vrot.lane.b32.xlu0 %v2587, 6
        %v2833 = vpop.permute.xlu0 %2832
        %2834 = vrot.lane.b32.xlu0 %v2589, 6
        %v2835 = vpop.permute.xlu0 %2834
        %2836 = vrot.lane.b32.xlu0 %v2595, 6
        %v2837 = vpop.permute.xlu0 %2836
        %2838 = vrot.lane.b32.xlu0 %v2597, 6
        %v2839 = vpop.permute.xlu0 %2838
        %2840 = vrot.lane.b32.xlu0 %v2599, 6
        %v2841 = vpop.permute.xlu0 %2840
        %2842 = vrot.lane.b32.xlu0 %v2601, 6
        %v2843 = vpop.permute.xlu0 %2842
        %2844 = vrot.lane.b32.xlu0 %v2603, 6
        %v2845 = vpop.permute.xlu0 %2844
        %2846 = vrot.lane.b32.xlu0 %v2605, 6
        %v2847 = vpop.permute.xlu0 %2846
        %2848 = vrot.lane.b32.xlu0 %v2607, 6
        %v2849 = vpop.permute.xlu0 %2848
        %2850 = vrot.lane.b32.xlu0 %v2609, 6
        %v2851 = vpop.permute.xlu0 %2850
        %2862 = vrot.lane.b32.xlu0 %v2417, 12
        %v2863 = vpop.permute.xlu0 %2862
        %2864 = vrot.lane.b32.xlu0 %v2419, 12
        %v2865 = vpop.permute.xlu0 %2864
        %2866 = vrot.lane.b32.xlu0 %v2421, 12
        %v2867 = vpop.permute.xlu0 %2866
        %2868 = vrot.lane.b32.xlu0 %v2423, 12
        %v2869 = vpop.permute.xlu0 %2868
        %2870 = vrot.lane.b32.xlu0 %v2425, 12
        %v2871 = vpop.permute.xlu0 %2870
        %2872 = vrot.lane.b32.xlu0 %v2427, 12
        %v2873 = vpop.permute.xlu0 %2872
        %2874 = vrot.lane.b32.xlu0 %v2429, 12
        %v2875 = vpop.permute.xlu0 %2874
        %2876 = vrot.lane.b32.xlu0 %v2431, 12
        %v2877 = vpop.permute.xlu0 %2876
        %2878 = vrot.lane.b32.xlu0 %v2437, 12
        %v2879 = vpop.permute.xlu0 %2878
        %2880 = vrot.lane.b32.xlu0 %v2439, 12
        %v2881 = vpop.permute.xlu0 %2880
        %2882 = vrot.lane.b32.xlu0 %v2441, 12
        %v2883 = vpop.permute.xlu0 %2882
        %2884 = vrot.lane.b32.xlu0 %v2443, 12
        %v2885 = vpop.permute.xlu0 %2884
        %2886 = vrot.lane.b32.xlu0 %v2445, 12
        %v2887 = vpop.permute.xlu0 %2886
        %2888 = vrot.lane.b32.xlu0 %v2447, 12
        %v2889 = vpop.permute.xlu0 %2888
        %2890 = vrot.lane.b32.xlu0 %v2449, 12
        %v2891 = vpop.permute.xlu0 %2890
        %2892 = vrot.lane.b32.xlu0 %v2451, 12
        %v2893 = vpop.permute.xlu0 %2892
        %2894 = vrot.lane.b32.xlu0 %v2457, 12
        %v2895 = vpop.permute.xlu0 %2894
        %2896 = vrot.lane.b32.xlu0 %v2459, 12
        %v2897 = vpop.permute.xlu0 %2896
        %2898 = vrot.lane.b32.xlu0 %v2461, 12
        %v2899 = vpop.permute.xlu0 %2898
        %2900 = vrot.lane.b32.xlu0 %v2463, 12
        %v2901 = vpop.permute.xlu0 %2900
        %2902 = vrot.lane.b32.xlu0 %v2465, 12
        %v2903 = vpop.permute.xlu0 %2902
        %2904 = vrot.lane.b32.xlu0 %v2467, 12
        %v2905 = vpop.permute.xlu0 %2904
        %2906 = vrot.lane.b32.xlu0 %v2469, 12
        %v2907 = vpop.permute.xlu0 %2906
        %2908 = vrot.lane.b32.xlu0 %v2471, 12
        %v2909 = vpop.permute.xlu0 %2908
        %2910 = vrot.lane.b32.xlu0 %v2477, 12
        %v2911 = vpop.permute.xlu0 %2910
        %2912 = vrot.lane.b32.xlu0 %v2479, 12
        %v2913 = vpop.permute.xlu0 %2912
        %2914 = vrot.lane.b32.xlu0 %v2481, 12
        %v2915 = vpop.permute.xlu0 %2914
        %2916 = vrot.lane.b32.xlu0 %v2483, 12
        %v2917 = vpop.permute.xlu0 %2916
        %2918 = vrot.lane.b32.xlu0 %v2485, 12
        %v2919 = vpop.permute.xlu0 %2918
        %2920 = vrot.lane.b32.xlu0 %v2487, 12
        %v2921 = vpop.permute.xlu0 %2920
        %2922 = vrot.lane.b32.xlu0 %v2489, 12
        %v2923 = vpop.permute.xlu0 %2922
        %2924 = vrot.lane.b32.xlu0 %v2491, 12
        %v2925 = vpop.permute.xlu0 %2924
        %2926 = vrot.lane.b32.xlu0 %v2497, 12
        %v2927 = vpop.permute.xlu0 %2926
        %2928 = vrot.lane.b32.xlu0 %v2499, 12
        %v2929 = vpop.permute.xlu0 %2928
        %2930 = vrot.lane.b32.xlu0 %v2501, 12
        %v2931 = vpop.permute.xlu0 %2930
        %2932 = vrot.lane.b32.xlu0 %v2503, 12
        %v2933 = vpop.permute.xlu0 %2932
        %2934 = vrot.lane.b32.xlu0 %v2505, 12
        %v2935 = vpop.permute.xlu0 %2934
        %2936 = vrot.lane.b32.xlu0 %v2507, 12
        %v2937 = vpop.permute.xlu0 %2936
        %2938 = vrot.lane.b32.xlu0 %v2509, 12
        %v2939 = vpop.permute.xlu0 %2938
        %2940 = vrot.lane.b32.xlu0 %v2511, 12
        %v2941 = vpop.permute.xlu0 %2940
        %2942 = vrot.lane.b32.xlu0 %v2517, 12
        %v2943 = vpop.permute.xlu0 %2942
        %2944 = vrot.lane.b32.xlu0 %v2519, 12
        %v2945 = vpop.permute.xlu0 %2944
        %2946 = vrot.lane.b32.xlu0 %v2521, 12
        %v2947 = vpop.permute.xlu0 %2946
        %2948 = vrot.lane.b32.xlu0 %v2523, 12
        %v2949 = vpop.permute.xlu0 %2948
        %2950 = vrot.lane.b32.xlu0 %v2525, 12
        %v2951 = vpop.permute.xlu0 %2950
        %2952 = vrot.lane.b32.xlu0 %v2527, 12
        %v2953 = vpop.permute.xlu0 %2952
        %2954 = vrot.lane.b32.xlu0 %v2529, 12
        %v2955 = vpop.permute.xlu0 %2954
        %2956 = vrot.lane.b32.xlu0 %v2531, 12
        %v2957 = vpop.permute.xlu0 %2956
        %2958 = vrot.lane.b32.xlu0 %v2537, 12
        %v2959 = vpop.permute.xlu0 %2958
        %2960 = vrot.lane.b32.xlu0 %v2539, 12
        %v2961 = vpop.permute.xlu0 %2960
        %2962 = vrot.lane.b32.xlu0 %v2541, 12
        %v2963 = vpop.permute.xlu0 %2962
        %2964 = vrot.lane.b32.xlu0 %v2543, 12
        %v2965 = vpop.permute.xlu0 %2964
        %2966 = vrot.lane.b32.xlu0 %v2545, 12
        %v2967 = vpop.permute.xlu0 %2966
        %2968 = vrot.lane.b32.xlu0 %v2547, 12
        %v2969 = vpop.permute.xlu0 %2968
        %2970 = vrot.lane.b32.xlu0 %v2549, 12
        %v2971 = vpop.permute.xlu0 %2970
        %2972 = vrot.lane.b32.xlu0 %v2551, 12
        %v2973 = vpop.permute.xlu0 %2972
        %2974 = vrot.lane.b32.xlu0 %v2557, 12
        %v2975 = vpop.permute.xlu0 %2974
        %2976 = vrot.lane.b32.xlu0 %v2559, 12
        %v2977 = vpop.permute.xlu0 %2976
        %2978 = vrot.lane.b32.xlu0 %v2561, 12
        %v2979 = vpop.permute.xlu0 %2978
        %2980 = vrot.lane.b32.xlu0 %v2563, 12
        %v2981 = vpop.permute.xlu0 %2980
        %2982 = vrot.lane.b32.xlu0 %v2565, 12
        %v2983 = vpop.permute.xlu0 %2982
        %2984 = vrot.lane.b32.xlu0 %v2567, 12
        %v2985 = vpop.permute.xlu0 %2984
        %2986 = vrot.lane.b32.xlu0 %v2569, 12
        %v2987 = vpop.permute.xlu0 %2986
        %2988 = vrot.lane.b32.xlu0 %v2571, 12
        %v2989 = vpop.permute.xlu0 %2988
        %2990 = vrot.lane.b32.xlu0 %v2577, 12
        %v2991 = vpop.permute.xlu0 %2990
        %2992 = vrot.lane.b32.xlu0 %v2579, 12
        %v2993 = vpop.permute.xlu0 %2992
        %2994 = vrot.lane.b32.xlu0 %v2581, 12
        %v2995 = vpop.permute.xlu0 %2994
        %2996 = vrot.lane.b32.xlu0 %v2583, 12
        %v2997 = vpop.permute.xlu0 %2996
        %2998 = vrot.lane.b32.xlu0 %v2585, 12
        %v2999 = vpop.permute.xlu0 %2998
        %3000 = vrot.lane.b32.xlu0 %v2587, 12
        %v3001 = vpop.permute.xlu0 %3000
        %3002 = vrot.lane.b32.xlu0 %v2589, 12
        %v3003 = vpop.permute.xlu0 %3002
        %3004 = vrot.lane.b32.xlu0 %v2591, 12
        %v3005 = vpop.permute.xlu0 %3004
        %3006 = vrot.lane.b32.xlu0 %v2597, 12
        %v3007 = vpop.permute.xlu0 %3006
        %3008 = vrot.lane.b32.xlu0 %v2599, 12
        %v3009 = vpop.permute.xlu0 %3008
        %3010 = vrot.lane.b32.xlu0 %v2601, 12
        %v3011 = vpop.permute.xlu0 %3010
        %3012 = vrot.lane.b32.xlu0 %v2603, 12
        %v3013 = vpop.permute.xlu0 %3012
        %3014 = vrot.lane.b32.xlu0 %v2605, 12
        %v3015 = vpop.permute.xlu0 %3014
        %3016 = vrot.lane.b32.xlu0 %v2607, 12
        %v3017 = vpop.permute.xlu0 %3016
        %3018 = vrot.lane.b32.xlu0 %v2609, 12
        %v3019 = vpop.permute.xlu0 %3018
        %3020 = vrot.lane.b32.xlu0 %v2611, 12
        %v3021 = vpop.permute.xlu0 %3020
        %vm3022 = vcmask 48128
        %v3024 = vsel %vm3022, %v2413, %v2693
        %v3026 = vsel %vm3022, %v2415, %v2695
        %v3028 = vsel %vm3022, %v2417, %v2697
        %v3030 = vsel %vm3022, %v2419, %v2699
        %v3032 = vsel %vm3022, %v2421, %v2701
        %v3034 = vsel %vm3022, %v2423, %v2703
        %v3036 = vsel %vm3022, %v2425, %v2705
        %v3038 = vsel %vm3022, %v2427, %v2707
        %v3040 = vsel %vm3022, %v2433, %v2709
        %v3042 = vsel %vm3022, %v2435, %v2711
        %v3044 = vsel %vm3022, %v2437, %v2713
        %v3046 = vsel %vm3022, %v2439, %v2715
        %v3048 = vsel %vm3022, %v2441, %v2717
        %v3050 = vsel %vm3022, %v2443, %v2719
        %v3052 = vsel %vm3022, %v2445, %v2721
        %v3054 = vsel %vm3022, %v2447, %v2723
        %v3056 = vsel %vm3022, %v2453, %v2725
        %v3058 = vsel %vm3022, %v2455, %v2727
        %v3060 = vsel %vm3022, %v2457, %v2729
        %v3062 = vsel %vm3022, %v2459, %v2731
        %v3064 = vsel %vm3022, %v2461, %v2733
        %v3066 = vsel %vm3022, %v2463, %v2735
        %v3068 = vsel %vm3022, %v2465, %v2737
        %v3070 = vsel %vm3022, %v2467, %v2739
        %v3072 = vsel %vm3022, %v2473, %v2741
        %v3074 = vsel %vm3022, %v2475, %v2743
        %v3076 = vsel %vm3022, %v2477, %v2745
        %v3078 = vsel %vm3022, %v2479, %v2747
        %v3080 = vsel %vm3022, %v2481, %v2749
        %v3082 = vsel %vm3022, %v2483, %v2751
        %v3084 = vsel %vm3022, %v2485, %v2753
        %v3086 = vsel %vm3022, %v2487, %v2755
        %v3088 = vsel %vm3022, %v2493, %v2757
        %v3090 = vsel %vm3022, %v2495, %v2759
        %v3092 = vsel %vm3022, %v2497, %v2761
        %v3094 = vsel %vm3022, %v2499, %v2763
        %v3096 = vsel %vm3022, %v2501, %v2765
        %v3098 = vsel %vm3022, %v2503, %v2767
        %v3100 = vsel %vm3022, %v2505, %v2769
        %v3102 = vsel %vm3022, %v2507, %v2771
        %v3104 = vsel %vm3022, %v2513, %v2773
        %v3106 = vsel %vm3022, %v2515, %v2775
        %v3108 = vsel %vm3022, %v2517, %v2777
        %v3110 = vsel %vm3022, %v2519, %v2779
        %v3112 = vsel %vm3022, %v2521, %v2781
        %v3114 = vsel %vm3022, %v2523, %v2783
        %v3116 = vsel %vm3022, %v2525, %v2785
        %v3118 = vsel %vm3022, %v2527, %v2787
        %v3120 = vsel %vm3022, %v2533, %v2789
        %v3122 = vsel %vm3022, %v2535, %v2791
        %v3124 = vsel %vm3022, %v2537, %v2793
        %v3126 = vsel %vm3022, %v2539, %v2795
        %v3128 = vsel %vm3022, %v2541, %v2797
        %v3130 = vsel %vm3022, %v2543, %v2799
        %v3132 = vsel %vm3022, %v2545, %v2801
        %v3134 = vsel %vm3022, %v2547, %v2803
        %v3136 = vsel %vm3022, %v2553, %v2805
        %v3138 = vsel %vm3022, %v2555, %v2807
        %v3140 = vsel %vm3022, %v2557, %v2809
        %v3142 = vsel %vm3022, %v2559, %v2811
        %v3144 = vsel %vm3022, %v2561, %v2813
        %v3146 = vsel %vm3022, %v2563, %v2815
        %v3148 = vsel %vm3022, %v2565, %v2817
        %v3150 = vsel %vm3022, %v2567, %v2819
        %v3152 = vsel %vm3022, %v2573, %v2821
        %v3154 = vsel %vm3022, %v2575, %v2823
        %v3156 = vsel %vm3022, %v2577, %v2825
        %v3158 = vsel %vm3022, %v2579, %v2827
        %v3160 = vsel %vm3022, %v2581, %v2829
        %v3162 = vsel %vm3022, %v2583, %v2831
        %v3164 = vsel %vm3022, %v2585, %v2833
        %v3166 = vsel %vm3022, %v2587, %v2835
        %v3168 = vsel %vm3022, %v2593, %v2837
        %v3170 = vsel %vm3022, %v2595, %v2839
        %v3172 = vsel %vm3022, %v2597, %v2841
        %v3174 = vsel %vm3022, %v2599, %v2843
        %v3176 = vsel %vm3022, %v2601, %v2845
        %v3178 = vsel %vm3022, %v2603, %v2847
        %v3180 = vsel %vm3022, %v2605, %v2849
        %v3182 = vsel %vm3022, %v2607, %v2851
        %vm3183 = vcmask 97280
        %v3185 = vsel %vm3183, %v3024, %v2863
        %v3187 = vsel %vm3183, %v3026, %v2865
        %v3189 = vsel %vm3183, %v3028, %v2867
        %v3191 = vsel %vm3183, %v3030, %v2869
        %v3193 = vsel %vm3183, %v3032, %v2871
        %v3195 = vsel %vm3183, %v3034, %v2873
        %v3197 = vsel %vm3183, %v3036, %v2875
        %v3199 = vsel %vm3183, %v3038, %v2877
        %v3201 = vsel %vm3183, %v3040, %v2879
        %v3203 = vsel %vm3183, %v3042, %v2881
        %v3205 = vsel %vm3183, %v3044, %v2883
        %v3207 = vsel %vm3183, %v3046, %v2885
        %v3209 = vsel %vm3183, %v3048, %v2887
        %v3211 = vsel %vm3183, %v3050, %v2889
        %v3213 = vsel %vm3183, %v3052, %v2891
        %v3215 = vsel %vm3183, %v3054, %v2893
        %v3217 = vsel %vm3183, %v3056, %v2895
        %v3219 = vsel %vm3183, %v3058, %v2897
        %v3221 = vsel %vm3183, %v3060, %v2899
        %v3223 = vsel %vm3183, %v3062, %v2901
        %v3225 = vsel %vm3183, %v3064, %v2903
        %v3227 = vsel %vm3183, %v3066, %v2905
        %v3229 = vsel %vm3183, %v3068, %v2907
        %v3231 = vsel %vm3183, %v3070, %v2909
        %v3233 = vsel %vm3183, %v3072, %v2911
        %v3235 = vsel %vm3183, %v3074, %v2913
        %v3237 = vsel %vm3183, %v3076, %v2915
        %v3239 = vsel %vm3183, %v3078, %v2917
        %v3241 = vsel %vm3183, %v3080, %v2919
        %v3243 = vsel %vm3183, %v3082, %v2921
        %v3245 = vsel %vm3183, %v3084, %v2923
        %v3247 = vsel %vm3183, %v3086, %v2925
        %v3249 = vsel %vm3183, %v3088, %v2927
        %v3251 = vsel %vm3183, %v3090, %v2929
        %v3253 = vsel %vm3183, %v3092, %v2931
        %v3255 = vsel %vm3183, %v3094, %v2933
        %v3257 = vsel %vm3183, %v3096, %v2935
        %v3259 = vsel %vm3183, %v3098, %v2937
        %v3261 = vsel %vm3183, %v3100, %v2939
        %v3263 = vsel %vm3183, %v3102, %v2941
        %v3265 = vsel %vm3183, %v3104, %v2943
        %v3267 = vsel %vm3183, %v3106, %v2945
        %v3269 = vsel %vm3183, %v3108, %v2947
        %v3271 = vsel %vm3183, %v3110, %v2949
        %v3273 = vsel %vm3183, %v3112, %v2951
        %v3275 = vsel %vm3183, %v3114, %v2953
        %v3277 = vsel %vm3183, %v3116, %v2955
        %v3279 = vsel %vm3183, %v3118, %v2957
        %v3281 = vsel %vm3183, %v3120, %v2959
        %v3283 = vsel %vm3183, %v3122, %v2961
        %v3285 = vsel %vm3183, %v3124, %v2963
        %v3287 = vsel %vm3183, %v3126, %v2965
        %v3289 = vsel %vm3183, %v3128, %v2967
        %v3291 = vsel %vm3183, %v3130, %v2969
        %v3293 = vsel %vm3183, %v3132, %v2971
        %v3295 = vsel %vm3183, %v3134, %v2973
        %v3297 = vsel %vm3183, %v3136, %v2975
        %v3299 = vsel %vm3183, %v3138, %v2977
        %v3301 = vsel %vm3183, %v3140, %v2979
        %v3303 = vsel %vm3183, %v3142, %v2981
        %v3305 = vsel %vm3183, %v3144, %v2983
        %v3307 = vsel %vm3183, %v3146, %v2985
        %v3309 = vsel %vm3183, %v3148, %v2987
        %v3311 = vsel %vm3183, %v3150, %v2989
        %v3313 = vsel %vm3183, %v3152, %v2991
        %v3315 = vsel %vm3183, %v3154, %v2993
        %v3317 = vsel %vm3183, %v3156, %v2995
        %v3319 = vsel %vm3183, %v3158, %v2997
        %v3321 = vsel %vm3183, %v3160, %v2999
        %v3323 = vsel %vm3183, %v3162, %v3001
        %v3325 = vsel %vm3183, %v3164, %v3003
        %v3327 = vsel %vm3183, %v3166, %v3005
        %v3329 = vsel %vm3183, %v3168, %v3007
        %v3331 = vsel %vm3183, %v3170, %v3009
        %v3333 = vsel %vm3183, %v3172, %v3011
        %v3335 = vsel %vm3183, %v3174, %v3013
        %v3337 = vsel %vm3183, %v3176, %v3015
        %v3339 = vsel %vm3183, %v3178, %v3017
        %v3341 = vsel %vm3183, %v3180, %v3019
        %v3343 = vsel %vm3183, %v3182, %v3021
        %v3344 = vld [vmem:[%s1] sm:$0xf]
        %v3345 = vld [vmem:[%s1 + $0x4] sm:$0xf]
        %v3346 = vld [vmem:[%s1 + $0x8] sm:$0x1]
        %s3347 = scalar_lea.vmem %s1, 12
        %v3348 = vld [vmem:[%s3347] sm:$0xf]
        %v3349 = vld [vmem:[%s3347 + $0x4] sm:$0xf]
        %v3350 = vld [vmem:[%s3347 + $0x8] sm:$0x1]
        %v3415 = vunpack.c.l.b16 %v3201
        %v3416 = vunpack.c.l.b16 %v3203
        %v3417 = vunpack.c.l.b16 %v3205
        %v3418 = vunpack.c.l.b16 %v3207
        %v3419 = vunpack.c.l.b16 %v3209
        %v3420 = vunpack.c.l.b16 %v3211
        %v3421 = vunpack.c.l.b16 %v3213
        %v3422 = vunpack.c.l.b16 %v3215
        %v3423 = vunpack.c.l.b16 %v3217
        %v3424 = vunpack.c.l.b16 %v3219
        %v3425 = vunpack.c.l.b16 %v3221
        %v3426 = vunpack.c.l.b16 %v3223
        %v3427 = vunpack.c.l.b16 %v3225
        %v3428 = vunpack.c.l.b16 %v3227
        %v3429 = vunpack.c.l.b16 %v3229
        %v3430 = vunpack.c.l.b16 %v3231
        %v3431 = vunpack.c.l.b16 %v3233
        %v3432 = vunpack.c.l.b16 %v3235
        %v3433 = vunpack.c.l.b16 %v3237
        %v3434 = vunpack.c.l.b16 %v3239
        %v3435 = vunpack.c.l.b16 %v3241
        %v3436 = vunpack.c.l.b16 %v3243
        %v3437 = vunpack.c.l.b16 %v3245
        %v3438 = vunpack.c.l.b16 %v3247
        %v3439 = vunpack.c.l.b16 %v3249
        %v3440 = vunpack.c.l.b16 %v3251
        %v3441 = vunpack.c.l.b16 %v3253
        %v3442 = vunpack.c.l.b16 %v3255
        %v3443 = vunpack.c.l.b16 %v3257
        %v3444 = vunpack.c.l.b16 %v3259
        %v3445 = vunpack.c.l.b16 %v3261
        %v3446 = vunpack.c.l.b16 %v3263
        %v3447 = vunpack.c.l.b16 %v3265
        %v3448 = vunpack.c.l.b16 %v3267
        %v3449 = vunpack.c.l.b16 %v3269
        %v3450 = vunpack.c.l.b16 %v3271
        %v3451 = vunpack.c.l.b16 %v3273
        %v3452 = vunpack.c.l.b16 %v3275
        %v3453 = vunpack.c.l.b16 %v3277
        %v3454 = vunpack.c.l.b16 %v3279
        %v3455 = vunpack.c.l.b16 %v3281
        %v3456 = vunpack.c.l.b16 %v3283
        %v3457 = vunpack.c.l.b16 %v3285
        %v3458 = vunpack.c.l.b16 %v3287
        %v3459 = vunpack.c.l.b16 %v3289
        %v3460 = vunpack.c.l.b16 %v3291
        %v3461 = vunpack.c.l.b16 %v3293
        %v3462 = vunpack.c.l.b16 %v3295
        %v3463 = vunpack.c.l.b16 %v3297
        %v3464 = vunpack.c.l.b16 %v3299
        %v3465 = vunpack.c.l.b16 %v3301
        %v3466 = vunpack.c.l.b16 %v3303
        %v3467 = vunpack.c.l.b16 %v3305
        %v3468 = vunpack.c.l.b16 %v3307
        %v3469 = vunpack.c.l.b16 %v3309
        %v3470 = vunpack.c.l.b16 %v3311
        %v3471 = vunpack.c.l.b16 %v3313
        %v3472 = vunpack.c.l.b16 %v3315
        %v3473 = vunpack.c.l.b16 %v3317
        %v3474 = vunpack.c.l.b16 %v3319
        %v3475 = vunpack.c.l.b16 %v3321
        %v3476 = vunpack.c.l.b16 %v3323
        %v3477 = vunpack.c.l.b16 %v3325
        %v3478 = vunpack.c.l.b16 %v3327
        %v3479 = vpack.c.b16 %v3416, %v3415
        %v3480 = vpack.c.b16 %v3418, %v3417
        %v3481 = vpack.c.b16 %v3420, %v3419
        %v3482 = vpack.c.b16 %v3422, %v3421
        %v3483 = vpack.c.b16 %v3424, %v3423
        %v3484 = vpack.c.b16 %v3426, %v3425
        %v3485 = vpack.c.b16 %v3428, %v3427
        %v3486 = vpack.c.b16 %v3430, %v3429
        %v3487 = vpack.c.b16 %v3432, %v3431
        %v3488 = vpack.c.b16 %v3434, %v3433
        %v3489 = vpack.c.b16 %v3436, %v3435
        %v3490 = vpack.c.b16 %v3438, %v3437
        %v3491 = vpack.c.b16 %v3440, %v3439
        %v3492 = vpack.c.b16 %v3442, %v3441
        %v3493 = vpack.c.b16 %v3444, %v3443
        %v3494 = vpack.c.b16 %v3446, %v3445
        %v3495 = vpack.c.b16 %v3448, %v3447
        %v3496 = vpack.c.b16 %v3450, %v3449
        %v3497 = vpack.c.b16 %v3452, %v3451
        %v3498 = vpack.c.b16 %v3454, %v3453
        %v3499 = vpack.c.b16 %v3456, %v3455
        %v3500 = vpack.c.b16 %v3458, %v3457
        %v3501 = vpack.c.b16 %v3460, %v3459
        %v3502 = vpack.c.b16 %v3462, %v3461
        %v3503 = vpack.c.b16 %v3464, %v3463
        %v3504 = vpack.c.b16 %v3466, %v3465
        %v3505 = vpack.c.b16 %v3468, %v3467
        %v3506 = vpack.c.b16 %v3470, %v3469
        %v3507 = vpack.c.b16 %v3472, %v3471
        %v3508 = vpack.c.b16 %v3474, %v3473
        %v3509 = vpack.c.b16 %v3476, %v3475
        %v3510 = vpack.c.b16 %v3478, %v3477
        %v3514 = vunpack.c.l.b16 %v3348
        %v3515 = vunpack.c.l.b16 %v3349
        %v3516 = vunpack.c.l.b16 %v3350
        %v3517 = vpack.c.b16 %v3515, %v3514
        %v3518 = vpack.c.b16 %v3516, %v3516
        %vm3520 = vcmask 146432
        %v3522 = vsel %vm3520, %v3479, 0
        %v3525 = vsel %vm3520, %v3480, 0
        %v3528 = vsel %vm3520, %v3481, 0
        %v3531 = vsel %vm3520, %v3482, 0
        %v3534 = vsel %vm3520, %v3483, 0
        %v3537 = vsel %vm3520, %v3484, 0
        %v3540 = vsel %vm3520, %v3485, 0
        %v3543 = vsel %vm3520, %v3486, 0
        %v3546 = vsel %vm3520, %v3487, 0
        %v3549 = vsel %vm3520, %v3488, 0
        %v3552 = vsel %vm3520, %v3489, 0
        %v3555 = vsel %vm3520, %v3490, 0
        %v3558 = vsel %vm3520, %v3491, 0
        %v3561 = vsel %vm3520, %v3492, 0
        %v3564 = vsel %vm3520, %v3493, 0
        %v3567 = vsel %vm3520, %v3494, 0
        %v3570 = vsel %vm3520, %v3495, 0
        %v3573 = vsel %vm3520, %v3496, 0
        %v3576 = vsel %vm3520, %v3497, 0
        %v3579 = vsel %vm3520, %v3498, 0
        %v3582 = vsel %vm3520, %v3499, 0
        %v3585 = vsel %vm3520, %v3500, 0
        %v3588 = vsel %vm3520, %v3501, 0
        %v3591 = vsel %vm3520, %v3502, 0
        %v3594 = vsel %vm3520, %v3503, 0
        %v3597 = vsel %vm3520, %v3504, 0
        %v3600 = vsel %vm3520, %v3505, 0
        %v3603 = vsel %vm3520, %v3506, 0
        %v3606 = vsel %vm3520, %v3507, 0
        %v3609 = vsel %vm3520, %v3508, 0
        %v3612 = vsel %vm3520, %v3509, 0
        %v3615 = vsel %vm3520, %v3510, 0
        %vm3617 = vcmask 1040384
        %v3619 = vsel %vm3617, %v3518, 0
        %3621 = vmatprep.subr.bf16.mxu0 0
        %3622 = vmatpush1.bf16.msra.mxu0 0
        %3623 = vmatprep.subr.bf16.mxu0 0
        %3624 = vmatpush1.bf16.msra.mxu0 0
        %3625 = vmatprep.subr.bf16.mxu0 0
        %3626 = vmatpush1.bf16.msra.mxu0 0
        %3627 = vmatprep.subr.bf16.mxu0 0
        %3628 = vmatpush1.bf16.msra.mxu0 0
        %3629 = vmatprep.subr.bf16.mxu0 0
        %3630 = vmatpush1.bf16.msra.mxu0 0
        %3631 = vmatprep.subr.bf16.mxu0 0
        %3632 = vmatpush1.bf16.msra.mxu0 0
        %3633 = vmatprep.subr.bf16.mxu0 0
        %3634 = vmatpush1.bf16.msra.mxu0 %v3619
        %3635 = vmatprep.subr.bf16.mxu0 0
        %3636 = vmatpush1.bf16.msra.mxu0 %v3517
        %3637 = vmatprep.subr.bf16.mxu0 0
        %3638 = vmatpush2.bf16.msra.mxu0 0
        %3639 = vmatprep.subr.bf16.mxu0 0
        %3640 = vmatpush2.bf16.msra.mxu0 0
        %3641 = vmatprep.subr.bf16.mxu0 0
        %3642 = vmatpush2.bf16.msra.mxu0 0
        %3643 = vmatprep.subr.bf16.mxu0 0
        %3644 = vmatpush2.bf16.msra.mxu0 0
        %3645 = vmatprep.subr.bf16.mxu0 0
        %3646 = vmatpush2.bf16.msra.mxu0 0
        %3647 = vmatprep.subr.bf16.mxu0 0
        %3648 = vmatpush2.bf16.msra.mxu0 0
        %3649 = vmatprep.subr.bf16.mxu0 0
        %3650 = vmatpush2.bf16.msra.mxu0 0
        %3651 = vmatprep.subr.bf16.mxu0 0
        %3652 = vmatpush2.bf16.msra.mxu0 0
        %3653 = vmatprep.mubr.bf16.mxu0 0
        %3654 = vmatmul.mubr.bf16.gmra.mxu0 %v3522
        %v3655 = vpop.f32.mrf.mxu0
        %v3656 = vadd.f32 0.0, %v3655
        %v3657 = vpop.f32.mrf.mxu0
        %v3658 = vpop.f32.mrf.mxu0
        %v3659 = vadd.f32 0.0, %v3658
        %v3660 = vpop.f32.mrf.mxu0
        %3661 = vmatprep.mubr.bf16.mxu0 0
        %3662 = vmatmul.mubr.bf16.gmra.mxu0 %v3525
        %v3663 = vpop.f32.mrf.mxu0
        %v3664 = vadd.f32 0.0, %v3663
        %v3665 = vpop.f32.mrf.mxu0
        %v3666 = vpop.f32.mrf.mxu0
        %v3667 = vadd.f32 0.0, %v3666
        %v3668 = vpop.f32.mrf.mxu0
        %3669 = vmatprep.mubr.bf16.mxu0 0
        %3670 = vmatmul.mubr.bf16.gmra.mxu0 %v3528
        %v3671 = vpop.f32.mrf.mxu0
        %v3672 = vadd.f32 0.0, %v3671
        %v3673 = vpop.f32.mrf.mxu0
        %v3674 = vpop.f32.mrf.mxu0
        %v3675 = vadd.f32 0.0, %v3674
        %v3676 = vpop.f32.mrf.mxu0
        %3677 = vmatprep.mubr.bf16.mxu0 0
        %3678 = vmatmul.mubr.bf16.gmra.mxu0 %v3531
        %v3679 = vpop.f32.mrf.mxu0
        %v3680 = vadd.f32 0.0, %v3679
        %v3681 = vpop.f32.mrf.mxu0
        %v3682 = vpop.f32.mrf.mxu0
        %v3683 = vadd.f32 0.0, %v3682
        %v3684 = vpop.f32.mrf.mxu0
        %3685 = vmatprep.mubr.bf16.mxu0 0
        %3686 = vmatmul.mubr.bf16.gmra.mxu0 %v3534
        %v3687 = vpop.f32.mrf.mxu0
        %v3688 = vadd.f32 0.0, %v3687
        %v3689 = vpop.f32.mrf.mxu0
        %v3690 = vpop.f32.mrf.mxu0
        %v3691 = vadd.f32 0.0, %v3690
        %v3692 = vpop.f32.mrf.mxu0
        %3693 = vmatprep.mubr.bf16.mxu0 0
        %3694 = vmatmul.mubr.bf16.gmra.mxu0 %v3537
        %v3695 = vpop.f32.mrf.mxu0
        %v3696 = vadd.f32 0.0, %v3695
        %v3697 = vpop.f32.mrf.mxu0
        %v3698 = vpop.f32.mrf.mxu0
        %v3699 = vadd.f32 0.0, %v3698
        %v3700 = vpop.f32.mrf.mxu0
        %3701 = vmatprep.mubr.bf16.mxu0 0
        %3702 = vmatmul.mubr.bf16.gmra.mxu0 %v3540
        %v3703 = vpop.f32.mrf.mxu0
        %v3704 = vadd.f32 0.0, %v3703
        %v3705 = vpop.f32.mrf.mxu0
        %v3706 = vpop.f32.mrf.mxu0
        %v3707 = vadd.f32 0.0, %v3706
        %v3708 = vpop.f32.mrf.mxu0
        %3709 = vmatprep.mubr.bf16.mxu0 0
        %3710 = vmatmul.mubr.bf16.gmra.mxu0 %v3543
        %v3711 = vpop.f32.mrf.mxu0
        %v3712 = vadd.f32 0.0, %v3711
        %v3713 = vpop.f32.mrf.mxu0
        %v3714 = vpop.f32.mrf.mxu0
        %v3715 = vadd.f32 0.0, %v3714
        %v3716 = vpop.f32.mrf.mxu0
        %3717 = vmatprep.mubr.bf16.mxu0 0
        %3718 = vmatmul.mubr.bf16.gmra.mxu0 %v3546
        %v3719 = vpop.f32.mrf.mxu0
        %v3720 = vadd.f32 0.0, %v3719
        %v3721 = vpop.f32.mrf.mxu0
        %v3722 = vpop.f32.mrf.mxu0
        %v3723 = vadd.f32 0.0, %v3722
        %v3724 = vpop.f32.mrf.mxu0
        %3725 = vmatprep.mubr.bf16.mxu0 0
        %3726 = vmatmul.mubr.bf16.gmra.mxu0 %v3549
        %v3727 = vpop.f32.mrf.mxu0
        %v3728 = vadd.f32 0.0, %v3727
        %v3729 = vpop.f32.mrf.mxu0
        %v3730 = vpop.f32.mrf.mxu0
        %v3731 = vadd.f32 0.0, %v3730
        %v3732 = vpop.f32.mrf.mxu0
        %3733 = vmatprep.mubr.bf16.mxu0 0
        %3734 = vmatmul.mubr.bf16.gmra.mxu0 %v3552
        %v3735 = vpop.f32.mrf.mxu0
        %v3736 = vadd.f32 0.0, %v3735
        %v3737 = vpop.f32.mrf.mxu0
        %v3738 = vpop.f32.mrf.mxu0
        %v3739 = vadd.f32 0.0, %v3738
        %v3740 = vpop.f32.mrf.mxu0
        %3741 = vmatprep.mubr.bf16.mxu0 0
        %3742 = vmatmul.mubr.bf16.gmra.mxu0 %v3555
        %v3743 = vpop.f32.mrf.mxu0
        %v3744 = vadd.f32 0.0, %v3743
        %v3745 = vpop.f32.mrf.mxu0
        %v3746 = vpop.f32.mrf.mxu0
        %v3747 = vadd.f32 0.0, %v3746
        %v3748 = vpop.f32.mrf.mxu0
        %3749 = vmatprep.mubr.bf16.mxu0 0
        %3750 = vmatmul.mubr.bf16.gmra.mxu0 %v3558
        %v3751 = vpop.f32.mrf.mxu0
        %v3752 = vadd.f32 0.0, %v3751
        %v3753 = vpop.f32.mrf.mxu0
        %v3754 = vpop.f32.mrf.mxu0
        %v3755 = vadd.f32 0.0, %v3754
        %v3756 = vpop.f32.mrf.mxu0
        %3757 = vmatprep.mubr.bf16.mxu0 0
        %3758 = vmatmul.mubr.bf16.gmra.mxu0 %v3561
        %v3759 = vpop.f32.mrf.mxu0
        %v3760 = vadd.f32 0.0, %v3759
        %v3761 = vpop.f32.mrf.mxu0
        %v3762 = vpop.f32.mrf.mxu0
        %v3763 = vadd.f32 0.0, %v3762
        %v3764 = vpop.f32.mrf.mxu0
        %3765 = vmatprep.mubr.bf16.mxu0 0
        %3766 = vmatmul.mubr.bf16.gmra.mxu0 %v3564
        %v3767 = vpop.f32.mrf.mxu0
        %v3768 = vadd.f32 0.0, %v3767
        %v3769 = vpop.f32.mrf.mxu0
        %v3770 = vpop.f32.mrf.mxu0
        %v3771 = vadd.f32 0.0, %v3770
        %v3772 = vpop.f32.mrf.mxu0
        %3773 = vmatprep.mubr.bf16.mxu0 0
        %3774 = vmatmul.mubr.bf16.gmra.mxu0 %v3567
        %v3775 = vpop.f32.mrf.mxu0
        %v3776 = vadd.f32 0.0, %v3775
        %v3777 = vpop.f32.mrf.mxu0
        %v3778 = vpop.f32.mrf.mxu0
        %v3779 = vadd.f32 0.0, %v3778
        %v3780 = vpop.f32.mrf.mxu0
        %3781 = vmatprep.mubr.bf16.mxu0 0
        %3782 = vmatmul.mubr.bf16.gmra.mxu0 %v3570
        %v3783 = vpop.f32.mrf.mxu0
        %v3784 = vadd.f32 0.0, %v3783
        %v3785 = vpop.f32.mrf.mxu0
        %v3786 = vpop.f32.mrf.mxu0
        %v3787 = vadd.f32 0.0, %v3786
        %v3788 = vpop.f32.mrf.mxu0
        %3789 = vmatprep.mubr.bf16.mxu0 0
        %3790 = vmatmul.mubr.bf16.gmra.mxu0 %v3573
        %v3791 = vpop.f32.mrf.mxu0
        %v3792 = vadd.f32 0.0, %v3791
        %v3793 = vpop.f32.mrf.mxu0
        %v3794 = vpop.f32.mrf.mxu0
        %v3795 = vadd.f32 0.0, %v3794
        %v3796 = vpop.f32.mrf.mxu0
        %3797 = vmatprep.mubr.bf16.mxu0 0
        %3798 = vmatmul.mubr.bf16.gmra.mxu0 %v3576
        %v3799 = vpop.f32.mrf.mxu0
        %v3800 = vadd.f32 0.0, %v3799
        %v3801 = vpop.f32.mrf.mxu0
        %v3802 = vpop.f32.mrf.mxu0
        %v3803 = vadd.f32 0.0, %v3802
        %v3804 = vpop.f32.mrf.mxu0
        %3805 = vmatprep.mubr.bf16.mxu0 0
        %3806 = vmatmul.mubr.bf16.gmra.mxu0 %v3579
        %v3807 = vpop.f32.mrf.mxu0
        %v3808 = vadd.f32 0.0, %v3807
        %v3809 = vpop.f32.mrf.mxu0
        %v3810 = vpop.f32.mrf.mxu0
        %v3811 = vadd.f32 0.0, %v3810
        %v3812 = vpop.f32.mrf.mxu0
        %3813 = vmatprep.mubr.bf16.mxu0 0
        %3814 = vmatmul.mubr.bf16.gmra.mxu0 %v3582
        %v3815 = vpop.f32.mrf.mxu0
        %v3816 = vadd.f32 0.0, %v3815
        %v3817 = vpop.f32.mrf.mxu0
        %v3818 = vpop.f32.mrf.mxu0
        %v3819 = vadd.f32 0.0, %v3818
        %v3820 = vpop.f32.mrf.mxu0
        %3821 = vmatprep.mubr.bf16.mxu0 0
        %3822 = vmatmul.mubr.bf16.gmra.mxu0 %v3585
        %v3823 = vpop.f32.mrf.mxu0
        %v3824 = vadd.f32 0.0, %v3823
        %v3825 = vpop.f32.mrf.mxu0
        %v3826 = vpop.f32.mrf.mxu0
        %v3827 = vadd.f32 0.0, %v3826
        %v3828 = vpop.f32.mrf.mxu0
        %3829 = vmatprep.mubr.bf16.mxu0 0
        %3830 = vmatmul.mubr.bf16.gmra.mxu0 %v3588
        %v3831 = vpop.f32.mrf.mxu0
        %v3832 = vadd.f32 0.0, %v3831
        %v3833 = vpop.f32.mrf.mxu0
        %v3834 = vpop.f32.mrf.mxu0
        %v3835 = vadd.f32 0.0, %v3834
        %v3836 = vpop.f32.mrf.mxu0
        %3837 = vmatprep.mubr.bf16.mxu0 0
        %3838 = vmatmul.mubr.bf16.gmra.mxu0 %v3591
        %v3839 = vpop.f32.mrf.mxu0
        %v3840 = vadd.f32 0.0, %v3839
        %v3841 = vpop.f32.mrf.mxu0
        %v3842 = vpop.f32.mrf.mxu0
        %v3843 = vadd.f32 0.0, %v3842
        %v3844 = vpop.f32.mrf.mxu0
        %3845 = vmatprep.mubr.bf16.mxu0 0
        %3846 = vmatmul.mubr.bf16.gmra.mxu0 %v3594
        %v3847 = vpop.f32.mrf.mxu0
        %v3848 = vadd.f32 0.0, %v3847
        %v3849 = vpop.f32.mrf.mxu0
        %v3850 = vpop.f32.mrf.mxu0
        %v3851 = vadd.f32 0.0, %v3850
        %v3852 = vpop.f32.mrf.mxu0
        %3853 = vmatprep.mubr.bf16.mxu0 0
        %3854 = vmatmul.mubr.bf16.gmra.mxu0 %v3597
        %v3855 = vpop.f32.mrf.mxu0
        %v3856 = vadd.f32 0.0, %v3855
        %v3857 = vpop.f32.mrf.mxu0
        %v3858 = vpop.f32.mrf.mxu0
        %v3859 = vadd.f32 0.0, %v3858
        %v3860 = vpop.f32.mrf.mxu0
        %3861 = vmatprep.mubr.bf16.mxu0 0
        %3862 = vmatmul.mubr.bf16.gmra.mxu0 %v3600
        %v3863 = vpop.f32.mrf.mxu0
        %v3864 = vadd.f32 0.0, %v3863
        %v3865 = vpop.f32.mrf.mxu0
        %v3866 = vpop.f32.mrf.mxu0
        %v3867 = vadd.f32 0.0, %v3866
        %v3868 = vpop.f32.mrf.mxu0
        %3869 = vmatprep.mubr.bf16.mxu0 0
        %3870 = vmatmul.mubr.bf16.gmra.mxu0 %v3603
        %v3871 = vpop.f32.mrf.mxu0
        %v3872 = vadd.f32 0.0, %v3871
        %v3873 = vpop.f32.mrf.mxu0
        %v3874 = vpop.f32.mrf.mxu0
        %v3875 = vadd.f32 0.0, %v3874
        %v3876 = vpop.f32.mrf.mxu0
        %3877 = vmatprep.mubr.bf16.mxu0 0
        %3878 = vmatmul.mubr.bf16.gmra.mxu0 %v3606
        %v3879 = vpop.f32.mrf.mxu0
        %v3880 = vadd.f32 0.0, %v3879
        %v3881 = vpop.f32.mrf.mxu0
        %v3882 = vpop.f32.mrf.mxu0
        %v3883 = vadd.f32 0.0, %v3882
        %v3884 = vpop.f32.mrf.mxu0
        %3885 = vmatprep.mubr.bf16.mxu0 0
        %3886 = vmatmul.mubr.bf16.gmra.mxu0 %v3609
        %v3887 = vpop.f32.mrf.mxu0
        %v3888 = vadd.f32 0.0, %v3887
        %v3889 = vpop.f32.mrf.mxu0
        %v3890 = vpop.f32.mrf.mxu0
        %v3891 = vadd.f32 0.0, %v3890
        %v3892 = vpop.f32.mrf.mxu0
        %3893 = vmatprep.mubr.bf16.mxu0 0
        %3894 = vmatmul.mubr.bf16.gmra.mxu0 %v3612
        %v3895 = vpop.f32.mrf.mxu0
        %v3896 = vadd.f32 0.0, %v3895
        %v3897 = vpop.f32.mrf.mxu0
        %v3898 = vpop.f32.mrf.mxu0
        %v3899 = vadd.f32 0.0, %v3898
        %v3900 = vpop.f32.mrf.mxu0
        %3901 = vmatprep.mubr.bf16.mxu0 0
        %3902 = vmatmul.mubr.bf16.gmra.mxu0 %v3615
        %v3903 = vpop.f32.mrf.mxu0
        %v3904 = vadd.f32 0.0, %v3903
        %v3905 = vpop.f32.mrf.mxu0
        %v3906 = vpop.f32.mrf.mxu0
        %v3907 = vadd.f32 0.0, %v3906
        %v3908 = vpop.f32.mrf.mxu0
        %3909 = vdwg.mxu0
        %v3918 = vunpack.c.l.b16 %v3185
        %v3919 = vunpack.c.l.b16 %v3187
        %v3920 = vunpack.c.l.b16 %v3189
        %v3921 = vunpack.c.l.b16 %v3191
        %v3922 = vunpack.c.l.b16 %v3193
        %v3923 = vunpack.c.l.b16 %v3195
        %v3924 = vunpack.c.l.b16 %v3197
        %v3925 = vunpack.c.l.b16 %v3199
        %v3926 = vpack.c.b16 %v3919, %v3918
        %v3927 = vpack.c.b16 %v3921, %v3920
        %v3928 = vpack.c.b16 %v3923, %v3922
        %v3929 = vpack.c.b16 %v3925, %v3924
        %v3933 = vunpack.c.l.b16 %v3344
        %v3934 = vunpack.c.l.b16 %v3345
        %v3935 = vunpack.c.l.b16 %v3346
        %v3936 = vpack.c.b16 %v3934, %v3933
        %v3937 = vpack.c.b16 %v3935, %v3935
        %v3940 = vsel %vm3520, %v3926, 0
        %v3943 = vsel %vm3520, %v3927, 0
        %v3946 = vsel %vm3520, %v3928, 0
        %v3949 = vsel %vm3520, %v3929, 0
        %v3952 = vsel %vm3617, %v3937, 0
        %3954 = vmatprep.subr.bf16.mxu0 0
        %3955 = vmatpush1.bf16.msra.mxu0 0
        %3956 = vmatprep.subr.bf16.mxu0 0
        %3957 = vmatpush1.bf16.msra.mxu0 0
        %3958 = vmatprep.subr.bf16.mxu0 0
        %3959 = vmatpush1.bf16.msra.mxu0 0
        %3960 = vmatprep.subr.bf16.mxu0 0
        %3961 = vmatpush1.bf16.msra.mxu0 0
        %3962 = vmatprep.subr.bf16.mxu0 0
        %3963 = vmatpush1.bf16.msra.mxu0 0
        %3964 = vmatprep.subr.bf16.mxu0 0
        %3965 = vmatpush1.bf16.msra.mxu0 0
        %3966 = vmatprep.subr.bf16.mxu0 0
        %3967 = vmatpush1.bf16.msra.mxu0 %v3952
        %3968 = vmatprep.subr.bf16.mxu0 0
        %3969 = vmatpush1.bf16.msra.mxu0 %v3936
        %3970 = vmatprep.subr.bf16.mxu0 0
        %3971 = vmatpush2.bf16.msra.mxu0 0
        %3972 = vmatprep.subr.bf16.mxu0 0
        %3973 = vmatpush2.bf16.msra.mxu0 0
        %3974 = vmatprep.subr.bf16.mxu0 0
        %3975 = vmatpush2.bf16.msra.mxu0 0
        %3976 = vmatprep.subr.bf16.mxu0 0
        %3977 = vmatpush2.bf16.msra.mxu0 0
        %3978 = vmatprep.subr.bf16.mxu0 0
        %3979 = vmatpush2.bf16.msra.mxu0 0
        %3980 = vmatprep.subr.bf16.mxu0 0
        %3981 = vmatpush2.bf16.msra.mxu0 0
        %3982 = vmatprep.subr.bf16.mxu0 0
        %3983 = vmatpush2.bf16.msra.mxu0 0
        %3984 = vmatprep.subr.bf16.mxu0 0
        %3985 = vmatpush2.bf16.msra.mxu0 0
        %3986 = vmatprep.mubr.bf16.mxu0 0
        %3987 = vmatmul.mubr.bf16.gmra.mxu0 %v3940
        %v3988 = vpop.f32.mrf.mxu0
        %v3989 = vadd.f32 %v3656, %v3988
        %v3990 = vpop.f32.mrf.mxu0
        %v3991 = vpop.f32.mrf.mxu0
        %v3992 = vadd.f32 %v3659, %v3991
        %v3993 = vpop.f32.mrf.mxu0
        %3994 = vmatprep.mubr.bf16.mxu0 0
        %3995 = vmatmul.mubr.bf16.gmra.mxu0 %v3943
        %v3996 = vpop.f32.mrf.mxu0
        %v3997 = vadd.f32 %v3664, %v3996
        %v3998 = vpop.f32.mrf.mxu0
        %v3999 = vpop.f32.mrf.mxu0
        %v4000 = vadd.f32 %v3667, %v3999
        %v4001 = vpop.f32.mrf.mxu0
        %4002 = vmatprep.mubr.bf16.mxu0 0
        %4003 = vmatmul.mubr.bf16.gmra.mxu0 %v3946
        %v4004 = vpop.f32.mrf.mxu0
        %v4005 = vadd.f32 %v3672, %v4004
        %v4006 = vpop.f32.mrf.mxu0
        %v4007 = vpop.f32.mrf.mxu0
        %v4008 = vadd.f32 %v3675, %v4007
        %v4009 = vpop.f32.mrf.mxu0
        %4010 = vmatprep.mubr.bf16.mxu0 0
        %4011 = vmatmul.mubr.bf16.gmra.mxu0 %v3949
        %v4012 = vpop.f32.mrf.mxu0
        %v4013 = vadd.f32 %v3680, %v4012
        %v4014 = vpop.f32.mrf.mxu0
        %v4015 = vpop.f32.mrf.mxu0
        %v4016 = vadd.f32 %v3683, %v4015
        %v4017 = vpop.f32.mrf.mxu0
        %4018 = vmatprep.mubr.bf16.mxu0 0
        %4019 = vmatmul.mubr.bf16.gmra.mxu0 %v3522
        %v4020 = vpop.f32.mrf.mxu0
        %v4021 = vadd.f32 %v3688, %v4020
        %v4022 = vpop.f32.mrf.mxu0
        %v4023 = vpop.f32.mrf.mxu0
        %v4024 = vadd.f32 %v3691, %v4023
        %v4025 = vpop.f32.mrf.mxu0
        %4026 = vmatprep.mubr.bf16.mxu0 0
        %4027 = vmatmul.mubr.bf16.gmra.mxu0 %v3525
        %v4028 = vpop.f32.mrf.mxu0
        %v4029 = vadd.f32 %v3696, %v4028
        %v4030 = vpop.f32.mrf.mxu0
        %v4031 = vpop.f32.mrf.mxu0
        %v4032 = vadd.f32 %v3699, %v4031
        %v4033 = vpop.f32.mrf.mxu0
        %4034 = vmatprep.mubr.bf16.mxu0 0
        %4035 = vmatmul.mubr.bf16.gmra.mxu0 %v3528
        %v4036 = vpop.f32.mrf.mxu0
        %v4037 = vadd.f32 %v3704, %v4036
        %v4038 = vpop.f32.mrf.mxu0
        %v4039 = vpop.f32.mrf.mxu0
        %v4040 = vadd.f32 %v3707, %v4039
        %v4041 = vpop.f32.mrf.mxu0
        %4042 = vmatprep.mubr.bf16.mxu0 0
        %4043 = vmatmul.mubr.bf16.gmra.mxu0 %v3531
        %v4044 = vpop.f32.mrf.mxu0
        %v4045 = vadd.f32 %v3712, %v4044
        %v4046 = vpop.f32.mrf.mxu0
        %v4047 = vpop.f32.mrf.mxu0
        %v4048 = vadd.f32 %v3715, %v4047
        %v4049 = vpop.f32.mrf.mxu0
        %4050 = vmatprep.mubr.bf16.mxu0 0
        %4051 = vmatmul.mubr.bf16.gmra.mxu0 %v3534
        %v4052 = vpop.f32.mrf.mxu0
        %v4053 = vadd.f32 %v3720, %v4052
        %v4054 = vpop.f32.mrf.mxu0
        %v4055 = vpop.f32.mrf.mxu0
        %v4056 = vadd.f32 %v3723, %v4055
        %v4057 = vpop.f32.mrf.mxu0
        %4058 = vmatprep.mubr.bf16.mxu0 0
        %4059 = vmatmul.mubr.bf16.gmra.mxu0 %v3537
        %v4060 = vpop.f32.mrf.mxu0
        %v4061 = vadd.f32 %v3728, %v4060
        %v4062 = vpop.f32.mrf.mxu0
        %v4063 = vpop.f32.mrf.mxu0
        %v4064 = vadd.f32 %v3731, %v4063
        %v4065 = vpop.f32.mrf.mxu0
        %4066 = vmatprep.mubr.bf16.mxu0 0
        %4067 = vmatmul.mubr.bf16.gmra.mxu0 %v3540
        %v4068 = vpop.f32.mrf.mxu0
        %v4069 = vadd.f32 %v3736, %v4068
        %v4070 = vpop.f32.mrf.mxu0
        %v4071 = vpop.f32.mrf.mxu0
        %v4072 = vadd.f32 %v3739, %v4071
        %v4073 = vpop.f32.mrf.mxu0
        %4074 = vmatprep.mubr.bf16.mxu0 0
        %4075 = vmatmul.mubr.bf16.gmra.mxu0 %v3543
        %v4076 = vpop.f32.mrf.mxu0
        %v4077 = vadd.f32 %v3744, %v4076
        %v4078 = vpop.f32.mrf.mxu0
        %v4079 = vpop.f32.mrf.mxu0
        %v4080 = vadd.f32 %v3747, %v4079
        %v4081 = vpop.f32.mrf.mxu0
        %4082 = vmatprep.mubr.bf16.mxu0 0
        %4083 = vmatmul.mubr.bf16.gmra.mxu0 %v3546
        %v4084 = vpop.f32.mrf.mxu0
        %v4085 = vadd.f32 %v3752, %v4084
        %v4086 = vpop.f32.mrf.mxu0
        %v4087 = vpop.f32.mrf.mxu0
        %v4088 = vadd.f32 %v3755, %v4087
        %v4089 = vpop.f32.mrf.mxu0
        %4090 = vmatprep.mubr.bf16.mxu0 0
        %4091 = vmatmul.mubr.bf16.gmra.mxu0 %v3549
        %v4092 = vpop.f32.mrf.mxu0
        %v4093 = vadd.f32 %v3760, %v4092
        %v4094 = vpop.f32.mrf.mxu0
        %v4095 = vpop.f32.mrf.mxu0
        %v4096 = vadd.f32 %v3763, %v4095
        %v4097 = vpop.f32.mrf.mxu0
        %4098 = vmatprep.mubr.bf16.mxu0 0
        %4099 = vmatmul.mubr.bf16.gmra.mxu0 %v3552
        %v4100 = vpop.f32.mrf.mxu0
        %v4101 = vadd.f32 %v3768, %v4100
        %v4102 = vpop.f32.mrf.mxu0
        %v4103 = vpop.f32.mrf.mxu0
        %v4104 = vadd.f32 %v3771, %v4103
        %v4105 = vpop.f32.mrf.mxu0
        %4106 = vmatprep.mubr.bf16.mxu0 0
        %4107 = vmatmul.mubr.bf16.gmra.mxu0 %v3555
        %v4108 = vpop.f32.mrf.mxu0
        %v4109 = vadd.f32 %v3776, %v4108
        %v4110 = vpop.f32.mrf.mxu0
        %v4111 = vpop.f32.mrf.mxu0
        %v4112 = vadd.f32 %v3779, %v4111
        %v4113 = vpop.f32.mrf.mxu0
        %4114 = vmatprep.mubr.bf16.mxu0 0
        %4115 = vmatmul.mubr.bf16.gmra.mxu0 %v3558
        %v4116 = vpop.f32.mrf.mxu0
        %v4117 = vadd.f32 %v3784, %v4116
        %v4118 = vpop.f32.mrf.mxu0
        %v4119 = vpop.f32.mrf.mxu0
        %v4120 = vadd.f32 %v3787, %v4119
        %v4121 = vpop.f32.mrf.mxu0
        %4122 = vmatprep.mubr.bf16.mxu0 0
        %4123 = vmatmul.mubr.bf16.gmra.mxu0 %v3561
        %v4124 = vpop.f32.mrf.mxu0
        %v4125 = vadd.f32 %v3792, %v4124
        %v4126 = vpop.f32.mrf.mxu0
        %v4127 = vpop.f32.mrf.mxu0
        %v4128 = vadd.f32 %v3795, %v4127
        %v4129 = vpop.f32.mrf.mxu0
        %4130 = vmatprep.mubr.bf16.mxu0 0
        %4131 = vmatmul.mubr.bf16.gmra.mxu0 %v3564
        %v4132 = vpop.f32.mrf.mxu0
        %v4133 = vadd.f32 %v3800, %v4132
        %v4134 = vpop.f32.mrf.mxu0
        %v4135 = vpop.f32.mrf.mxu0
        %v4136 = vadd.f32 %v3803, %v4135
        %v4137 = vpop.f32.mrf.mxu0
        %4138 = vmatprep.mubr.bf16.mxu0 0
        %4139 = vmatmul.mubr.bf16.gmra.mxu0 %v3567
        %v4140 = vpop.f32.mrf.mxu0
        %v4141 = vadd.f32 %v3808, %v4140
        %v4142 = vpop.f32.mrf.mxu0
        %v4143 = vpop.f32.mrf.mxu0
        %v4144 = vadd.f32 %v3811, %v4143
        %v4145 = vpop.f32.mrf.mxu0
        %4146 = vmatprep.mubr.bf16.mxu0 0
        %4147 = vmatmul.mubr.bf16.gmra.mxu0 %v3570
        %v4148 = vpop.f32.mrf.mxu0
        %v4149 = vadd.f32 %v3816, %v4148
        %v4150 = vpop.f32.mrf.mxu0
        %v4151 = vpop.f32.mrf.mxu0
        %v4152 = vadd.f32 %v3819, %v4151
        %v4153 = vpop.f32.mrf.mxu0
        %4154 = vmatprep.mubr.bf16.mxu0 0
        %4155 = vmatmul.mubr.bf16.gmra.mxu0 %v3573
        %v4156 = vpop.f32.mrf.mxu0
        %v4157 = vadd.f32 %v3824, %v4156
        %v4158 = vpop.f32.mrf.mxu0
        %v4159 = vpop.f32.mrf.mxu0
        %v4160 = vadd.f32 %v3827, %v4159
        %v4161 = vpop.f32.mrf.mxu0
        %4162 = vmatprep.mubr.bf16.mxu0 0
        %4163 = vmatmul.mubr.bf16.gmra.mxu0 %v3576
        %v4164 = vpop.f32.mrf.mxu0
        %v4165 = vadd.f32 %v3832, %v4164
        %v4166 = vpop.f32.mrf.mxu0
        %v4167 = vpop.f32.mrf.mxu0
        %v4168 = vadd.f32 %v3835, %v4167
        %v4169 = vpop.f32.mrf.mxu0
        %4170 = vmatprep.mubr.bf16.mxu0 0
        %4171 = vmatmul.mubr.bf16.gmra.mxu0 %v3579
        %v4172 = vpop.f32.mrf.mxu0
        %v4173 = vadd.f32 %v3840, %v4172
        %v4174 = vpop.f32.mrf.mxu0
        %v4175 = vpop.f32.mrf.mxu0
        %v4176 = vadd.f32 %v3843, %v4175
        %v4177 = vpop.f32.mrf.mxu0
        %4178 = vmatprep.mubr.bf16.mxu0 0
        %4179 = vmatmul.mubr.bf16.gmra.mxu0 %v3582
        %v4180 = vpop.f32.mrf.mxu0
        %v4181 = vadd.f32 %v3848, %v4180
        %v4182 = vpop.f32.mrf.mxu0
        %v4183 = vpop.f32.mrf.mxu0
        %v4184 = vadd.f32 %v3851, %v4183
        %v4185 = vpop.f32.mrf.mxu0
        %4186 = vmatprep.mubr.bf16.mxu0 0
        %4187 = vmatmul.mubr.bf16.gmra.mxu0 %v3585
        %v4188 = vpop.f32.mrf.mxu0
        %v4189 = vadd.f32 %v3856, %v4188
        %v4190 = vpop.f32.mrf.mxu0
        %v4191 = vpop.f32.mrf.mxu0
        %v4192 = vadd.f32 %v3859, %v4191
        %v4193 = vpop.f32.mrf.mxu0
        %4194 = vmatprep.mubr.bf16.mxu0 0
        %4195 = vmatmul.mubr.bf16.gmra.mxu0 %v3588
        %v4196 = vpop.f32.mrf.mxu0
        %v4197 = vadd.f32 %v3864, %v4196
        %v4198 = vpop.f32.mrf.mxu0
        %v4199 = vpop.f32.mrf.mxu0
        %v4200 = vadd.f32 %v3867, %v4199
        %v4201 = vpop.f32.mrf.mxu0
        %4202 = vmatprep.mubr.bf16.mxu0 0
        %4203 = vmatmul.mubr.bf16.gmra.mxu0 %v3591
        %v4204 = vpop.f32.mrf.mxu0
        %v4205 = vadd.f32 %v3872, %v4204
        %v4206 = vpop.f32.mrf.mxu0
        %v4207 = vpop.f32.mrf.mxu0
        %v4208 = vadd.f32 %v3875, %v4207
        %v4209 = vpop.f32.mrf.mxu0
        %4210 = vmatprep.mubr.bf16.mxu0 0
        %4211 = vmatmul.mubr.bf16.gmra.mxu0 %v3594
        %v4212 = vpop.f32.mrf.mxu0
        %v4213 = vadd.f32 %v3880, %v4212
        %v4214 = vpop.f32.mrf.mxu0
        %v4215 = vpop.f32.mrf.mxu0
        %v4216 = vadd.f32 %v3883, %v4215
        %v4217 = vpop.f32.mrf.mxu0
        %4218 = vmatprep.mubr.bf16.mxu0 0
        %4219 = vmatmul.mubr.bf16.gmra.mxu0 %v3597
        %v4220 = vpop.f32.mrf.mxu0
        %v4221 = vadd.f32 %v3888, %v4220
        %v4222 = vpop.f32.mrf.mxu0
        %v4223 = vpop.f32.mrf.mxu0
        %v4224 = vadd.f32 %v3891, %v4223
        %v4225 = vpop.f32.mrf.mxu0
        %4226 = vmatprep.mubr.bf16.mxu0 0
        %4227 = vmatmul.mubr.bf16.gmra.mxu0 %v3600
        %v4228 = vpop.f32.mrf.mxu0
        %v4229 = vadd.f32 %v3896, %v4228
        %v4230 = vpop.f32.mrf.mxu0
        %v4231 = vpop.f32.mrf.mxu0
        %v4232 = vadd.f32 %v3899, %v4231
        %v4233 = vpop.f32.mrf.mxu0
        %4234 = vmatprep.mubr.bf16.mxu0 0
        %4235 = vmatmul.mubr.bf16.gmra.mxu0 %v3603
        %v4236 = vpop.f32.mrf.mxu0
        %v4237 = vadd.f32 %v3904, %v4236
        %v4238 = vpop.f32.mrf.mxu0
        %v4239 = vpop.f32.mrf.mxu0
        %v4240 = vadd.f32 %v3907, %v4239
        %v4241 = vpop.f32.mrf.mxu0
        %4242 = vdwg.mxu0
        %s4243 = scalar_lea.vmem %s1, 24
        %v4244 = vld [vmem:[%s4243] sm:$0xf]
        %v4245 = vld [vmem:[%s4243 + $0x4] sm:$0xf]
        %v4246 = vld [vmem:[%s4243 + $0x8] sm:$0x1]
        %v4255 = vunpack.c.l.b16 %v3329
        %v4256 = vunpack.c.l.b16 %v3331
        %v4257 = vunpack.c.l.b16 %v3333
        %v4258 = vunpack.c.l.b16 %v3335
        %v4259 = vunpack.c.l.b16 %v3337
        %v4260 = vunpack.c.l.b16 %v3339
        %v4261 = vunpack.c.l.b16 %v3341
        %v4262 = vunpack.c.l.b16 %v3343
        %v4263 = vpack.c.b16 %v4256, %v4255
        %v4264 = vpack.c.b16 %v4258, %v4257
        %v4265 = vpack.c.b16 %v4260, %v4259
        %v4266 = vpack.c.b16 %v4262, %v4261
        %v4270 = vunpack.c.l.b16 %v4244
        %v4271 = vunpack.c.l.b16 %v4245
        %v4272 = vunpack.c.l.b16 %v4246
        %v4273 = vpack.c.b16 %v4271, %v4270
        %v4274 = vpack.c.b16 %v4272, %v4272
        %v4277 = vsel %vm3520, %v4263, 0
        %v4280 = vsel %vm3520, %v4264, 0
        %v4283 = vsel %vm3520, %v4265, 0
        %v4286 = vsel %vm3520, %v4266, 0
        %v4289 = vsel %vm3617, %v4274, 0
        %4291 = vmatprep.subr.bf16.mxu0 0
        %4292 = vmatpush1.bf16.msra.mxu0 0
        %4293 = vmatprep.subr.bf16.mxu0 0
        %4294 = vmatpush1.bf16.msra.mxu0 0
        %4295 = vmatprep.subr.bf16.mxu0 0
        %4296 = vmatpush1.bf16.msra.mxu0 0
        %4297 = vmatprep.subr.bf16.mxu0 0
        %4298 = vmatpush1.bf16.msra.mxu0 0
        %4299 = vmatprep.subr.bf16.mxu0 0
        %4300 = vmatpush1.bf16.msra.mxu0 0
        %4301 = vmatprep.subr.bf16.mxu0 0
        %4302 = vmatpush1.bf16.msra.mxu0 0
        %4303 = vmatprep.subr.bf16.mxu0 0
        %4304 = vmatpush1.bf16.msra.mxu0 %v4289
        %4305 = vmatprep.subr.bf16.mxu0 0
        %4306 = vmatpush1.bf16.msra.mxu0 %v4273
        %4307 = vmatprep.subr.bf16.mxu0 0
        %4308 = vmatpush2.bf16.msra.mxu0 0
        %4309 = vmatprep.subr.bf16.mxu0 0
        %4310 = vmatpush2.bf16.msra.mxu0 0
        %4311 = vmatprep.subr.bf16.mxu0 0
        %4312 = vmatpush2.bf16.msra.mxu0 0
        %4313 = vmatprep.subr.bf16.mxu0 0
        %4314 = vmatpush2.bf16.msra.mxu0 0
        %4315 = vmatprep.subr.bf16.mxu0 0
        %4316 = vmatpush2.bf16.msra.mxu0 0
        %4317 = vmatprep.subr.bf16.mxu0 0
        %4318 = vmatpush2.bf16.msra.mxu0 0
        %4319 = vmatprep.subr.bf16.mxu0 0
        %4320 = vmatpush2.bf16.msra.mxu0 0
        %4321 = vmatprep.subr.bf16.mxu0 0
        %4322 = vmatpush2.bf16.msra.mxu0 0
        %4323 = vmatprep.mubr.bf16.mxu0 0
        %4324 = vmatmul.mubr.bf16.gmra.mxu0 %v3534
        %v4325 = vpop.f32.mrf.mxu0
        %v4326 = vadd.f32 0.0, %v4325
        %v4327 = vpop.f32.mrf.mxu0
        %v4328 = vpop.f32.mrf.mxu0
        %v4329 = vadd.f32 0.0, %v4328
        %v4330 = vpop.f32.mrf.mxu0
        %4331 = vmatprep.mubr.bf16.mxu0 0
        %4332 = vmatmul.mubr.bf16.gmra.mxu0 %v3537
        %v4333 = vpop.f32.mrf.mxu0
        %v4334 = vadd.f32 0.0, %v4333
        %v4335 = vpop.f32.mrf.mxu0
        %v4336 = vpop.f32.mrf.mxu0
        %v4337 = vadd.f32 0.0, %v4336
        %v4338 = vpop.f32.mrf.mxu0
        %4339 = vmatprep.mubr.bf16.mxu0 0
        %4340 = vmatmul.mubr.bf16.gmra.mxu0 %v3540
        %v4341 = vpop.f32.mrf.mxu0
        %v4342 = vadd.f32 0.0, %v4341
        %v4343 = vpop.f32.mrf.mxu0
        %v4344 = vpop.f32.mrf.mxu0
        %v4345 = vadd.f32 0.0, %v4344
        %v4346 = vpop.f32.mrf.mxu0
        %4347 = vmatprep.mubr.bf16.mxu0 0
        %4348 = vmatmul.mubr.bf16.gmra.mxu0 %v3543
        %v4349 = vpop.f32.mrf.mxu0
        %v4350 = vadd.f32 0.0, %v4349
        %v4351 = vpop.f32.mrf.mxu0
        %v4352 = vpop.f32.mrf.mxu0
        %v4353 = vadd.f32 0.0, %v4352
        %v4354 = vpop.f32.mrf.mxu0
        %4355 = vmatprep.mubr.bf16.mxu0 0
        %4356 = vmatmul.mubr.bf16.gmra.mxu0 %v3546
        %v4357 = vpop.f32.mrf.mxu0
        %v4358 = vadd.f32 0.0, %v4357
        %v4359 = vpop.f32.mrf.mxu0
        %v4360 = vpop.f32.mrf.mxu0
        %v4361 = vadd.f32 0.0, %v4360
        %v4362 = vpop.f32.mrf.mxu0
        %4363 = vmatprep.mubr.bf16.mxu0 0
        %4364 = vmatmul.mubr.bf16.gmra.mxu0 %v3549
        %v4365 = vpop.f32.mrf.mxu0
        %v4366 = vadd.f32 0.0, %v4365
        %v4367 = vpop.f32.mrf.mxu0
        %v4368 = vpop.f32.mrf.mxu0
        %v4369 = vadd.f32 0.0, %v4368
        %v4370 = vpop.f32.mrf.mxu0
        %4371 = vmatprep.mubr.bf16.mxu0 0
        %4372 = vmatmul.mubr.bf16.gmra.mxu0 %v3552
        %v4373 = vpop.f32.mrf.mxu0
        %v4374 = vadd.f32 0.0, %v4373
        %v4375 = vpop.f32.mrf.mxu0
        %v4376 = vpop.f32.mrf.mxu0
        %v4377 = vadd.f32 0.0, %v4376
        %v4378 = vpop.f32.mrf.mxu0
        %4379 = vmatprep.mubr.bf16.mxu0 0
        %4380 = vmatmul.mubr.bf16.gmra.mxu0 %v3555
        %v4381 = vpop.f32.mrf.mxu0
        %v4382 = vadd.f32 0.0, %v4381
        %v4383 = vpop.f32.mrf.mxu0
        %v4384 = vpop.f32.mrf.mxu0
        %v4385 = vadd.f32 0.0, %v4384
        %v4386 = vpop.f32.mrf.mxu0
        %4387 = vmatprep.mubr.bf16.mxu0 0
        %4388 = vmatmul.mubr.bf16.gmra.mxu0 %v3558
        %v4389 = vpop.f32.mrf.mxu0
        %v4390 = vadd.f32 0.0, %v4389
        %v4391 = vpop.f32.mrf.mxu0
        %v4392 = vpop.f32.mrf.mxu0
        %v4393 = vadd.f32 0.0, %v4392
        %v4394 = vpop.f32.mrf.mxu0
        %4395 = vmatprep.mubr.bf16.mxu0 0
        %4396 = vmatmul.mubr.bf16.gmra.mxu0 %v3561
        %v4397 = vpop.f32.mrf.mxu0
        %v4398 = vadd.f32 0.0, %v4397
        %v4399 = vpop.f32.mrf.mxu0
        %v4400 = vpop.f32.mrf.mxu0
        %v4401 = vadd.f32 0.0, %v4400
        %v4402 = vpop.f32.mrf.mxu0
        %4403 = vmatprep.mubr.bf16.mxu0 0
        %4404 = vmatmul.mubr.bf16.gmra.mxu0 %v3564
        %v4405 = vpop.f32.mrf.mxu0
        %v4406 = vadd.f32 0.0, %v4405
        %v4407 = vpop.f32.mrf.mxu0
        %v4408 = vpop.f32.mrf.mxu0
        %v4409 = vadd.f32 0.0, %v4408
        %v4410 = vpop.f32.mrf.mxu0
        %4411 = vmatprep.mubr.bf16.mxu0 0
        %4412 = vmatmul.mubr.bf16.gmra.mxu0 %v3567
        %v4413 = vpop.f32.mrf.mxu0
        %v4414 = vadd.f32 0.0, %v4413
        %v4415 = vpop.f32.mrf.mxu0
        %v4416 = vpop.f32.mrf.mxu0
        %v4417 = vadd.f32 0.0, %v4416
        %v4418 = vpop.f32.mrf.mxu0
        %4419 = vmatprep.mubr.bf16.mxu0 0
        %4420 = vmatmul.mubr.bf16.gmra.mxu0 %v3570
        %v4421 = vpop.f32.mrf.mxu0
        %v4422 = vadd.f32 0.0, %v4421
        %v4423 = vpop.f32.mrf.mxu0
        %v4424 = vpop.f32.mrf.mxu0
        %v4425 = vadd.f32 0.0, %v4424
        %v4426 = vpop.f32.mrf.mxu0
        %4427 = vmatprep.mubr.bf16.mxu0 0
        %4428 = vmatmul.mubr.bf16.gmra.mxu0 %v3573
        %v4429 = vpop.f32.mrf.mxu0
        %v4430 = vadd.f32 0.0, %v4429
        %v4431 = vpop.f32.mrf.mxu0
        %v4432 = vpop.f32.mrf.mxu0
        %v4433 = vadd.f32 0.0, %v4432
        %v4434 = vpop.f32.mrf.mxu0
        %4435 = vmatprep.mubr.bf16.mxu0 0
        %4436 = vmatmul.mubr.bf16.gmra.mxu0 %v3576
        %v4437 = vpop.f32.mrf.mxu0
        %v4438 = vadd.f32 0.0, %v4437
        %v4439 = vpop.f32.mrf.mxu0
        %v4440 = vpop.f32.mrf.mxu0
        %v4441 = vadd.f32 0.0, %v4440
        %v4442 = vpop.f32.mrf.mxu0
        %4443 = vmatprep.mubr.bf16.mxu0 0
        %4444 = vmatmul.mubr.bf16.gmra.mxu0 %v3579
        %v4445 = vpop.f32.mrf.mxu0
        %v4446 = vadd.f32 0.0, %v4445
        %v4447 = vpop.f32.mrf.mxu0
        %v4448 = vpop.f32.mrf.mxu0
        %v4449 = vadd.f32 0.0, %v4448
        %v4450 = vpop.f32.mrf.mxu0
        %4451 = vmatprep.mubr.bf16.mxu0 0
        %4452 = vmatmul.mubr.bf16.gmra.mxu0 %v3582
        %v4453 = vpop.f32.mrf.mxu0
        %v4454 = vadd.f32 0.0, %v4453
        %v4455 = vpop.f32.mrf.mxu0
        %v4456 = vpop.f32.mrf.mxu0
        %v4457 = vadd.f32 0.0, %v4456
        %v4458 = vpop.f32.mrf.mxu0
        %4459 = vmatprep.mubr.bf16.mxu0 0
        %4460 = vmatmul.mubr.bf16.gmra.mxu0 %v3585
        %v4461 = vpop.f32.mrf.mxu0
        %v4462 = vadd.f32 0.0, %v4461
        %v4463 = vpop.f32.mrf.mxu0
        %v4464 = vpop.f32.mrf.mxu0
        %v4465 = vadd.f32 0.0, %v4464
        %v4466 = vpop.f32.mrf.mxu0
        %4467 = vmatprep.mubr.bf16.mxu0 0
        %4468 = vmatmul.mubr.bf16.gmra.mxu0 %v3588
        %v4469 = vpop.f32.mrf.mxu0
        %v4470 = vadd.f32 0.0, %v4469
        %v4471 = vpop.f32.mrf.mxu0
        %v4472 = vpop.f32.mrf.mxu0
        %v4473 = vadd.f32 0.0, %v4472
        %v4474 = vpop.f32.mrf.mxu0
        %4475 = vmatprep.mubr.bf16.mxu0 0
        %4476 = vmatmul.mubr.bf16.gmra.mxu0 %v3591
        %v4477 = vpop.f32.mrf.mxu0
        %v4478 = vadd.f32 0.0, %v4477
        %v4479 = vpop.f32.mrf.mxu0
        %v4480 = vpop.f32.mrf.mxu0
        %v4481 = vadd.f32 0.0, %v4480
        %v4482 = vpop.f32.mrf.mxu0
        %4483 = vmatprep.mubr.bf16.mxu0 0
        %4484 = vmatmul.mubr.bf16.gmra.mxu0 %v3594
        %v4485 = vpop.f32.mrf.mxu0
        %v4486 = vadd.f32 0.0, %v4485
        %v4487 = vpop.f32.mrf.mxu0
        %v4488 = vpop.f32.mrf.mxu0
        %v4489 = vadd.f32 0.0, %v4488
        %v4490 = vpop.f32.mrf.mxu0
        %4491 = vmatprep.mubr.bf16.mxu0 0
        %4492 = vmatmul.mubr.bf16.gmra.mxu0 %v3597
        %v4493 = vpop.f32.mrf.mxu0
        %v4494 = vadd.f32 0.0, %v4493
        %v4495 = vpop.f32.mrf.mxu0
        %v4496 = vpop.f32.mrf.mxu0
        %v4497 = vadd.f32 0.0, %v4496
        %v4498 = vpop.f32.mrf.mxu0
        %4499 = vmatprep.mubr.bf16.mxu0 0
        %4500 = vmatmul.mubr.bf16.gmra.mxu0 %v3600
        %v4501 = vpop.f32.mrf.mxu0
        %v4502 = vadd.f32 0.0, %v4501
        %v4503 = vpop.f32.mrf.mxu0
        %v4504 = vpop.f32.mrf.mxu0
        %v4505 = vadd.f32 0.0, %v4504
        %v4506 = vpop.f32.mrf.mxu0
        %4507 = vmatprep.mubr.bf16.mxu0 0
        %4508 = vmatmul.mubr.bf16.gmra.mxu0 %v3603
        %v4509 = vpop.f32.mrf.mxu0
        %v4510 = vadd.f32 0.0, %v4509
        %v4511 = vpop.f32.mrf.mxu0
        %v4512 = vpop.f32.mrf.mxu0
        %v4513 = vadd.f32 0.0, %v4512
        %v4514 = vpop.f32.mrf.mxu0
        %4515 = vmatprep.mubr.bf16.mxu0 0
        %4516 = vmatmul.mubr.bf16.gmra.mxu0 %v3606
        %v4517 = vpop.f32.mrf.mxu0
        %v4518 = vadd.f32 0.0, %v4517
        %v4519 = vpop.f32.mrf.mxu0
        %v4520 = vpop.f32.mrf.mxu0
        %v4521 = vadd.f32 0.0, %v4520
        %v4522 = vpop.f32.mrf.mxu0
        %4523 = vmatprep.mubr.bf16.mxu0 0
        %4524 = vmatmul.mubr.bf16.gmra.mxu0 %v3609
        %v4525 = vpop.f32.mrf.mxu0
        %v4526 = vadd.f32 0.0, %v4525
        %v4527 = vpop.f32.mrf.mxu0
        %v4528 = vpop.f32.mrf.mxu0
        %v4529 = vadd.f32 0.0, %v4528
        %v4530 = vpop.f32.mrf.mxu0
        %4531 = vmatprep.mubr.bf16.mxu0 0
        %4532 = vmatmul.mubr.bf16.gmra.mxu0 %v3612
        %v4533 = vpop.f32.mrf.mxu0
        %v4534 = vadd.f32 0.0, %v4533
        %v4535 = vpop.f32.mrf.mxu0
        %v4536 = vpop.f32.mrf.mxu0
        %v4537 = vadd.f32 0.0, %v4536
        %v4538 = vpop.f32.mrf.mxu0
        %4539 = vmatprep.mubr.bf16.mxu0 0
        %4540 = vmatmul.mubr.bf16.gmra.mxu0 %v3615
        %v4541 = vpop.f32.mrf.mxu0
        %v4542 = vadd.f32 0.0, %v4541
        %v4543 = vpop.f32.mrf.mxu0
        %v4544 = vpop.f32.mrf.mxu0
        %v4545 = vadd.f32 0.0, %v4544
        %v4546 = vpop.f32.mrf.mxu0
        %4547 = vmatprep.mubr.bf16.mxu0 0
        %4548 = vmatmul.mubr.bf16.gmra.mxu0 %v4277
        %v4549 = vpop.f32.mrf.mxu0
        %v4550 = vadd.f32 0.0, %v4549
        %v4551 = vpop.f32.mrf.mxu0
        %v4552 = vpop.f32.mrf.mxu0
        %v4553 = vadd.f32 0.0, %v4552
        %v4554 = vpop.f32.mrf.mxu0
        %4555 = vmatprep.mubr.bf16.mxu0 0
        %4556 = vmatmul.mubr.bf16.gmra.mxu0 %v4280
        %v4557 = vpop.f32.mrf.mxu0
        %v4558 = vadd.f32 0.0, %v4557
        %v4559 = vpop.f32.mrf.mxu0
        %v4560 = vpop.f32.mrf.mxu0
        %v4561 = vadd.f32 0.0, %v4560
        %v4562 = vpop.f32.mrf.mxu0
        %4563 = vmatprep.mubr.bf16.mxu0 0
        %4564 = vmatmul.mubr.bf16.gmra.mxu0 %v4283
        %v4565 = vpop.f32.mrf.mxu0
        %v4566 = vadd.f32 0.0, %v4565
        %v4567 = vpop.f32.mrf.mxu0
        %v4568 = vpop.f32.mrf.mxu0
        %v4569 = vadd.f32 0.0, %v4568
        %v4570 = vpop.f32.mrf.mxu0
        %4571 = vmatprep.mubr.bf16.mxu0 0
        %4572 = vmatmul.mubr.bf16.gmra.mxu0 %v4286
        %v4573 = vpop.f32.mrf.mxu0
        %v4574 = vadd.f32 0.0, %v4573
        %v4575 = vpop.f32.mrf.mxu0
        %v4576 = vpop.f32.mrf.mxu0
        %v4577 = vadd.f32 0.0, %v4576
        %v4578 = vpop.f32.mrf.mxu0
        %4579 = vdwg.mxu0
        %v4580 = vadd.f32 %v3989, %v4326
        %v4581 = vadd.f32 %v3992, %v4329
        %v4582 = vadd.f32 %v3997, %v4334
        %v4583 = vadd.f32 %v4000, %v4337
        %v4584 = vadd.f32 %v4005, %v4342
        %v4585 = vadd.f32 %v4008, %v4345
        %v4586 = vadd.f32 %v4013, %v4350
        %v4587 = vadd.f32 %v4016, %v4353
        %v4588 = vadd.f32 %v4021, %v4358
        %v4589 = vadd.f32 %v4024, %v4361
        %v4590 = vadd.f32 %v4029, %v4366
        %v4591 = vadd.f32 %v4032, %v4369
        %v4592 = vadd.f32 %v4037, %v4374
        %v4593 = vadd.f32 %v4040, %v4377
        %v4594 = vadd.f32 %v4045, %v4382
        %v4595 = vadd.f32 %v4048, %v4385
        %v4596 = vadd.f32 %v4053, %v4390
        %v4597 = vadd.f32 %v4056, %v4393
        %v4598 = vadd.f32 %v4061, %v4398
        %v4599 = vadd.f32 %v4064, %v4401
        %v4600 = vadd.f32 %v4069, %v4406
        %v4601 = vadd.f32 %v4072, %v4409
        %v4602 = vadd.f32 %v4077, %v4414
        %v4603 = vadd.f32 %v4080, %v4417
        %v4604 = vadd.f32 %v4085, %v4422
        %v4605 = vadd.f32 %v4088, %v4425
        %v4606 = vadd.f32 %v4093, %v4430
        %v4607 = vadd.f32 %v4096, %v4433
        %v4608 = vadd.f32 %v4101, %v4438
        %v4609 = vadd.f32 %v4104, %v4441
        %v4610 = vadd.f32 %v4109, %v4446
        %v4611 = vadd.f32 %v4112, %v4449
        %v4612 = vadd.f32 %v4117, %v4454
        %v4613 = vadd.f32 %v4120, %v4457
        %v4614 = vadd.f32 %v4125, %v4462
        %v4615 = vadd.f32 %v4128, %v4465
        %v4616 = vadd.f32 %v4133, %v4470
        %v4617 = vadd.f32 %v4136, %v4473
        %v4618 = vadd.f32 %v4141, %v4478
        %v4619 = vadd.f32 %v4144, %v4481
        %v4620 = vadd.f32 %v4149, %v4486
        %v4621 = vadd.f32 %v4152, %v4489
        %v4622 = vadd.f32 %v4157, %v4494
        %v4623 = vadd.f32 %v4160, %v4497
        %v4624 = vadd.f32 %v4165, %v4502
        %v4625 = vadd.f32 %v4168, %v4505
        %v4626 = vadd.f32 %v4173, %v4510
        %v4627 = vadd.f32 %v4176, %v4513
        %v4628 = vadd.f32 %v4181, %v4518
        %v4629 = vadd.f32 %v4184, %v4521
        %v4630 = vadd.f32 %v4189, %v4526
        %v4631 = vadd.f32 %v4192, %v4529
        %v4632 = vadd.f32 %v4197, %v4534
        %v4633 = vadd.f32 %v4200, %v4537
        %v4634 = vadd.f32 %v4205, %v4542
        %v4635 = vadd.f32 %v4208, %v4545
        %v4636 = vadd.f32 %v4213, %v4550
        %v4637 = vadd.f32 %v4216, %v4553
        %v4638 = vadd.f32 %v4221, %v4558
        %v4639 = vadd.f32 %v4224, %v4561
        %v4640 = vadd.f32 %v4229, %v4566
        %v4641 = vadd.f32 %v4232, %v4569
        %v4642 = vadd.f32 %v4237, %v4574
        %v4643 = vadd.f32 %v4240, %v4577
        %v4644 = vld [vmem:[%s2] sm:$0x1]
        %v4646 = vlaneseq
        %v4647 = vshrl.u32 %v4646, 7
        %v4648 = vsub.s32 0, %v4647
        %v4649 = vrot.slane %v4644, %v4648
        %v4651 = vadd.f32 %v4580, %v4649
        %v4652 = vadd.f32 %v4581, %v4649
        %v4653 = vadd.f32 %v4582, %v4649
        %v4654 = vadd.f32 %v4583, %v4649
        %v4655 = vadd.f32 %v4584, %v4649
        %v4656 = vadd.f32 %v4585, %v4649
        %v4657 = vadd.f32 %v4586, %v4649
        %v4658 = vadd.f32 %v4587, %v4649
        %v4659 = vadd.f32 %v4588, %v4649
        %v4660 = vadd.f32 %v4589, %v4649
        %v4661 = vadd.f32 %v4590, %v4649
        %v4662 = vadd.f32 %v4591, %v4649
        %v4663 = vadd.f32 %v4592, %v4649
        %v4664 = vadd.f32 %v4593, %v4649
        %v4665 = vadd.f32 %v4594, %v4649
        %v4666 = vadd.f32 %v4595, %v4649
        %v4667 = vadd.f32 %v4596, %v4649
        %v4668 = vadd.f32 %v4597, %v4649
        %v4669 = vadd.f32 %v4598, %v4649
        %v4670 = vadd.f32 %v4599, %v4649
        %v4671 = vadd.f32 %v4600, %v4649
        %v4672 = vadd.f32 %v4601, %v4649
        %v4673 = vadd.f32 %v4602, %v4649
        %v4674 = vadd.f32 %v4603, %v4649
        %v4675 = vadd.f32 %v4604, %v4649
        %v4676 = vadd.f32 %v4605, %v4649
        %v4677 = vadd.f32 %v4606, %v4649
        %v4678 = vadd.f32 %v4607, %v4649
        %v4679 = vadd.f32 %v4608, %v4649
        %v4680 = vadd.f32 %v4609, %v4649
        %v4681 = vadd.f32 %v4610, %v4649
        %v4682 = vadd.f32 %v4611, %v4649
        %v4683 = vadd.f32 %v4612, %v4649
        %v4684 = vadd.f32 %v4613, %v4649
        %v4685 = vadd.f32 %v4614, %v4649
        %v4686 = vadd.f32 %v4615, %v4649
        %v4687 = vadd.f32 %v4616, %v4649
        %v4688 = vadd.f32 %v4617, %v4649
        %v4689 = vadd.f32 %v4618, %v4649
        %v4690 = vadd.f32 %v4619, %v4649
        %v4691 = vadd.f32 %v4620, %v4649
        %v4692 = vadd.f32 %v4621, %v4649
        %v4693 = vadd.f32 %v4622, %v4649
        %v4694 = vadd.f32 %v4623, %v4649
        %v4695 = vadd.f32 %v4624, %v4649
        %v4696 = vadd.f32 %v4625, %v4649
        %v4697 = vadd.f32 %v4626, %v4649
        %v4698 = vadd.f32 %v4627, %v4649
        %v4699 = vadd.f32 %v4628, %v4649
        %v4700 = vadd.f32 %v4629, %v4649
        %v4701 = vadd.f32 %v4630, %v4649
        %v4702 = vadd.f32 %v4631, %v4649
        %v4703 = vadd.f32 %v4632, %v4649
        %v4704 = vadd.f32 %v4633, %v4649
        %v4705 = vadd.f32 %v4634, %v4649
        %v4706 = vadd.f32 %v4635, %v4649
        %v4707 = vadd.f32 %v4636, %v4649
        %v4708 = vadd.f32 %v4637, %v4649
        %v4709 = vadd.f32 %v4638, %v4649
        %v4710 = vadd.f32 %v4639, %v4649
        %v4711 = vadd.f32 %v4640, %v4649
        %v4712 = vadd.f32 %v4641, %v4649
        %v4713 = vadd.f32 %v4642, %v4649
        %v4714 = vadd.f32 %v4643, %v4649
        %v4715 = vpack.c.bf16 %v4652, %v4651
        %v4716 = vpack.c.bf16 %v4654, %v4653
        %v4717 = vpack.c.bf16 %v4656, %v4655
        %v4718 = vpack.c.bf16 %v4658, %v4657
        %v4719 = vpack.c.bf16 %v4660, %v4659
        %v4720 = vpack.c.bf16 %v4662, %v4661
        %v4721 = vpack.c.bf16 %v4664, %v4663
        %v4722 = vpack.c.bf16 %v4666, %v4665
        %v4723 = vpack.c.bf16 %v4668, %v4667
        %v4724 = vpack.c.bf16 %v4670, %v4669
        %v4725 = vpack.c.bf16 %v4672, %v4671
        %v4726 = vpack.c.bf16 %v4674, %v4673
        %v4727 = vpack.c.bf16 %v4676, %v4675
        %v4728 = vpack.c.bf16 %v4678, %v4677
        %v4729 = vpack.c.bf16 %v4680, %v4679
        %v4730 = vpack.c.bf16 %v4682, %v4681
        %v4731 = vpack.c.bf16 %v4684, %v4683
        %v4732 = vpack.c.bf16 %v4686, %v4685
        %v4733 = vpack.c.bf16 %v4688, %v4687
        %v4734 = vpack.c.bf16 %v4690, %v4689
        %v4735 = vpack.c.bf16 %v4692, %v4691
        %v4736 = vpack.c.bf16 %v4694, %v4693
        %v4737 = vpack.c.bf16 %v4696, %v4695
        %v4738 = vpack.c.bf16 %v4698, %v4697
        %v4739 = vpack.c.bf16 %v4700, %v4699
        %v4740 = vpack.c.bf16 %v4702, %v4701
        %v4741 = vpack.c.bf16 %v4704, %v4703
        %v4742 = vpack.c.bf16 %v4706, %v4705
        %v4743 = vpack.c.bf16 %v4708, %v4707
        %v4744 = vpack.c.bf16 %v4710, %v4709
        %v4745 = vpack.c.bf16 %v4712, %v4711
        %v4746 = vpack.c.bf16 %v4714, %v4713
        %v4779 = vunpack.c.l.b16 %v4715
        %v4780 = vunpack.c.h.b16 %v4715
        %v4781 = vunpack.c.l.b16 %v4716
        %v4782 = vunpack.c.h.b16 %v4716
        %v4783 = vunpack.c.l.b16 %v4717
        %v4784 = vunpack.c.h.b16 %v4717
        %v4785 = vunpack.c.l.b16 %v4718
        %v4786 = vunpack.c.h.b16 %v4718
        %v4787 = vunpack.c.l.b16 %v4719
        %v4788 = vunpack.c.h.b16 %v4719
        %v4789 = vunpack.c.l.b16 %v4720
        %v4790 = vunpack.c.h.b16 %v4720
        %v4791 = vunpack.c.l.b16 %v4721
        %v4792 = vunpack.c.h.b16 %v4721
        %v4793 = vunpack.c.l.b16 %v4722
        %v4794 = vunpack.c.h.b16 %v4722
        %v4795 = vunpack.c.l.b16 %v4723
        %v4796 = vunpack.c.h.b16 %v4723
        %v4797 = vunpack.c.l.b16 %v4724
        %v4798 = vunpack.c.h.b16 %v4724
        %v4799 = vunpack.c.l.b16 %v4725
        %v4800 = vunpack.c.h.b16 %v4725
        %v4801 = vunpack.c.l.b16 %v4726
        %v4802 = vunpack.c.h.b16 %v4726
        %v4803 = vunpack.c.l.b16 %v4727
        %v4804 = vunpack.c.h.b16 %v4727
        %v4805 = vunpack.c.l.b16 %v4728
        %v4806 = vunpack.c.h.b16 %v4728
        %v4807 = vunpack.c.l.b16 %v4729
        %v4808 = vunpack.c.h.b16 %v4729
        %v4809 = vunpack.c.l.b16 %v4730
        %v4810 = vunpack.c.h.b16 %v4730
        %v4811 = vunpack.c.l.b16 %v4731
        %v4812 = vunpack.c.h.b16 %v4731
        %v4813 = vunpack.c.l.b16 %v4732
        %v4814 = vunpack.c.h.b16 %v4732
        %v4815 = vunpack.c.l.b16 %v4733
        %v4816 = vunpack.c.h.b16 %v4733
        %v4817 = vunpack.c.l.b16 %v4734
        %v4818 = vunpack.c.h.b16 %v4734
        %v4819 = vunpack.c.l.b16 %v4735
        %v4820 = vunpack.c.h.b16 %v4735
        %v4821 = vunpack.c.l.b16 %v4736
        %v4822 = vunpack.c.h.b16 %v4736
        %v4823 = vunpack.c.l.b16 %v4737
        %v4824 = vunpack.c.h.b16 %v4737
        %v4825 = vunpack.c.l.b16 %v4738
        %v4826 = vunpack.c.h.b16 %v4738
        %v4827 = vunpack.c.l.b16 %v4739
        %v4828 = vunpack.c.h.b16 %v4739
        %v4829 = vunpack.c.l.b16 %v4740
        %v4830 = vunpack.c.h.b16 %v4740
        %v4831 = vunpack.c.l.b16 %v4741
        %v4832 = vunpack.c.h.b16 %v4741
        %v4833 = vunpack.c.l.b16 %v4742
        %v4834 = vunpack.c.h.b16 %v4742
        %v4835 = vunpack.c.l.b16 %v4743
        %v4836 = vunpack.c.h.b16 %v4743
        %v4837 = vunpack.c.l.b16 %v4744
        %v4838 = vunpack.c.h.b16 %v4744
        %v4839 = vunpack.c.l.b16 %v4745
        %v4840 = vunpack.c.h.b16 %v4745
        %v4841 = vunpack.c.l.b16 %v4746
        %v4842 = vunpack.c.h.b16 %v4746
        %v4843 = vpack.c.b16 %v4779, %v4779
        %v4844 = vpack.c.b16 %v4780, %v4780
        %v4845 = vpack.c.b16 %v4781, %v4781
        %v4846 = vpack.c.b16 %v4782, %v4782
        %v4847 = vpack.c.b16 %v4783, %v4783
        %v4848 = vpack.c.b16 %v4784, %v4784
        %v4849 = vpack.c.b16 %v4785, %v4785
        %v4850 = vpack.c.b16 %v4786, %v4786
        %v4851 = vpack.c.b16 %v4787, %v4787
        %v4852 = vpack.c.b16 %v4788, %v4788
        %v4853 = vpack.c.b16 %v4789, %v4789
        %v4854 = vpack.c.b16 %v4790, %v4790
        %v4855 = vpack.c.b16 %v4791, %v4791
        %v4856 = vpack.c.b16 %v4792, %v4792
        %v4857 = vpack.c.b16 %v4793, %v4793
        %v4858 = vpack.c.b16 %v4794, %v4794
        %v4859 = vpack.c.b16 %v4795, %v4795
        %v4860 = vpack.c.b16 %v4796, %v4796
        %v4861 = vpack.c.b16 %v4797, %v4797
        %v4862 = vpack.c.b16 %v4798, %v4798
        %v4863 = vpack.c.b16 %v4799, %v4799
        %v4864 = vpack.c.b16 %v4800, %v4800
        %v4865 = vpack.c.b16 %v4801, %v4801
        %v4866 = vpack.c.b16 %v4802, %v4802
        %v4867 = vpack.c.b16 %v4803, %v4803
        %v4868 = vpack.c.b16 %v4804, %v4804
        %v4869 = vpack.c.b16 %v4805, %v4805
        %v4870 = vpack.c.b16 %v4806, %v4806
        %v4871 = vpack.c.b16 %v4807, %v4807
        %v4872 = vpack.c.b16 %v4808, %v4808
        %v4873 = vpack.c.b16 %v4809, %v4809
        %v4874 = vpack.c.b16 %v4810, %v4810
        %v4875 = vpack.c.b16 %v4811, %v4811
        %v4876 = vpack.c.b16 %v4812, %v4812
        %v4877 = vpack.c.b16 %v4813, %v4813
        %v4878 = vpack.c.b16 %v4814, %v4814
        %v4879 = vpack.c.b16 %v4815, %v4815
        %v4880 = vpack.c.b16 %v4816, %v4816
        %v4881 = vpack.c.b16 %v4817, %v4817
        %v4882 = vpack.c.b16 %v4818, %v4818
        %v4883 = vpack.c.b16 %v4819, %v4819
        %v4884 = vpack.c.b16 %v4820, %v4820
        %v4885 = vpack.c.b16 %v4821, %v4821
        %v4886 = vpack.c.b16 %v4822, %v4822
        %v4887 = vpack.c.b16 %v4823, %v4823
        %v4888 = vpack.c.b16 %v4824, %v4824
        %v4889 = vpack.c.b16 %v4825, %v4825
        %v4890 = vpack.c.b16 %v4826, %v4826
        %v4891 = vpack.c.b16 %v4827, %v4827
        %v4892 = vpack.c.b16 %v4828, %v4828
        %v4893 = vpack.c.b16 %v4829, %v4829
        %v4894 = vpack.c.b16 %v4830, %v4830
        %v4895 = vpack.c.b16 %v4831, %v4831
        %v4896 = vpack.c.b16 %v4832, %v4832
        %v4897 = vpack.c.b16 %v4833, %v4833
        %v4898 = vpack.c.b16 %v4834, %v4834
        %v4899 = vpack.c.b16 %v4835, %v4835
        %v4900 = vpack.c.b16 %v4836, %v4836
        %v4901 = vpack.c.b16 %v4837, %v4837
        %v4902 = vpack.c.b16 %v4838, %v4838
        %v4903 = vpack.c.b16 %v4839, %v4839
        %v4904 = vpack.c.b16 %v4840, %v4840
        %v4905 = vpack.c.b16 %v4841, %v4841
        %v4906 = vpack.c.b16 %v4842, %v4842
        %vm4971 = vcmask 257024
        %4972 = vst.msk [vmem:[%s208] sm:$0xf] %vm4971, %v4843
        %4973 = vst.msk [vmem:[%s208 + $0x4] sm:$0xf] %vm4971, %v4844
        %4974 = vst.msk [vmem:[%s208 + $0x8] sm:$0xf] %vm4971, %v4845
        %4975 = vst.msk [vmem:[%s208 + $0xc] sm:$0xf] %vm4971, %v4846
        %4976 = vst.msk [vmem:[%s208 + $0x10] sm:$0xf] %vm4971, %v4847
        %4977 = vst.msk [vmem:[%s208 + $0x14] sm:$0xf] %vm4971, %v4848
        %4978 = vst.msk [vmem:[%s208 + $0x18] sm:$0xf] %vm4971, %v4849
        %4979 = vst.msk [vmem:[%s208 + $0x1c] sm:$0xf] %vm4971, %v4850
        %4980 = vst.msk [vmem:[%s208 + $0x20] sm:$0xf] %vm4971, %v4851
        %4981 = vst.msk [vmem:[%s208 + $0x24] sm:$0xf] %vm4971, %v4852
        %4982 = vst.msk [vmem:[%s208 + $0x28] sm:$0xf] %vm4971, %v4853
        %4983 = vst.msk [vmem:[%s208 + $0x2c] sm:$0xf] %vm4971, %v4854
        %4984 = vst.msk [vmem:[%s208 + $0x30] sm:$0xf] %vm4971, %v4855
        %4985 = vst.msk [vmem:[%s208 + $0x34] sm:$0xf] %vm4971, %v4856
        %4986 = vst.msk [vmem:[%s208 + $0x38] sm:$0xf] %vm4971, %v4857
        %4987 = vst.msk [vmem:[%s208 + $0x3c] sm:$0xf] %vm4971, %v4858
        %4988 = vst.msk [vmem:[%s208 + $0x40] sm:$0xf] %vm4971, %v4859
        %4989 = vst.msk [vmem:[%s208 + $0x44] sm:$0xf] %vm4971, %v4860
        %4990 = vst.msk [vmem:[%s208 + $0x48] sm:$0xf] %vm4971, %v4861
        %4991 = vst.msk [vmem:[%s208 + $0x4c] sm:$0xf] %vm4971, %v4862
        %4992 = vst.msk [vmem:[%s208 + $0x50] sm:$0xf] %vm4971, %v4863
        %4993 = vst.msk [vmem:[%s208 + $0x54] sm:$0xf] %vm4971, %v4864
        %4994 = vst.msk [vmem:[%s208 + $0x58] sm:$0xf] %vm4971, %v4865
        %4995 = vst.msk [vmem:[%s208 + $0x5c] sm:$0xf] %vm4971, %v4866
        %4996 = vst.msk [vmem:[%s208 + $0x60] sm:$0xf] %vm4971, %v4867
        %4997 = vst.msk [vmem:[%s208 + $0x64] sm:$0xf] %vm4971, %v4868
        %4998 = vst.msk [vmem:[%s208 + $0x68] sm:$0xf] %vm4971, %v4869
        %4999 = vst.msk [vmem:[%s208 + $0x6c] sm:$0xf] %vm4971, %v4870
        %5000 = vst.msk [vmem:[%s208 + $0x70] sm:$0xf] %vm4971, %v4871
        %5001 = vst.msk [vmem:[%s208 + $0x74] sm:$0xf] %vm4971, %v4872
        %5002 = vst.msk [vmem:[%s208 + $0x78] sm:$0xf] %vm4971, %v4873
        %5003 = vst.msk [vmem:[%s208 + $0x7c] sm:$0xf] %vm4971, %v4874
        %5004 = vst.msk [vmem:[%s208 + $0x80] sm:$0xf] %vm4971, %v4875
        %5005 = vst.msk [vmem:[%s208 + $0x84] sm:$0xf] %vm4971, %v4876
        %5006 = vst.msk [vmem:[%s208 + $0x88] sm:$0xf] %vm4971, %v4877
        %5007 = vst.msk [vmem:[%s208 + $0x8c] sm:$0xf] %vm4971, %v4878
        %5008 = vst.msk [vmem:[%s208 + $0x90] sm:$0xf] %vm4971, %v4879
        %5009 = vst.msk [vmem:[%s208 + $0x94] sm:$0xf] %vm4971, %v4880
        %5010 = vst.msk [vmem:[%s208 + $0x98] sm:$0xf] %vm4971, %v4881
        %5011 = vst.msk [vmem:[%s208 + $0x9c] sm:$0xf] %vm4971, %v4882
        %5012 = vst.msk [vmem:[%s208 + $0xa0] sm:$0xf] %vm4971, %v4883
        %5013 = vst.msk [vmem:[%s208 + $0xa4] sm:$0xf] %vm4971, %v4884
        %5014 = vst.msk [vmem:[%s208 + $0xa8] sm:$0xf] %vm4971, %v4885
        %5015 = vst.msk [vmem:[%s208 + $0xac] sm:$0xf] %vm4971, %v4886
        %5016 = vst.msk [vmem:[%s208 + $0xb0] sm:$0xf] %vm4971, %v4887
        %5017 = vst.msk [vmem:[%s208 + $0xb4] sm:$0xf] %vm4971, %v4888
        %5018 = vst.msk [vmem:[%s208 + $0xb8] sm:$0xf] %vm4971, %v4889
        %5019 = vst.msk [vmem:[%s208 + $0xbc] sm:$0xf] %vm4971, %v4890
        %5020 = vst.msk [vmem:[%s208 + $0xc0] sm:$0xf] %vm4971, %v4891
        %5021 = vst.msk [vmem:[%s208 + $0xc4] sm:$0xf] %vm4971, %v4892
        %5022 = vst.msk [vmem:[%s208 + $0xc8] sm:$0xf] %vm4971, %v4893
        %5023 = vst.msk [vmem:[%s208 + $0xcc] sm:$0xf] %vm4971, %v4894
        %5024 = vst.msk [vmem:[%s208 + $0xd0] sm:$0xf] %vm4971, %v4895
        %5025 = vst.msk [vmem:[%s208 + $0xd4] sm:$0xf] %vm4971, %v4896
        %5026 = vst.msk [vmem:[%s208 + $0xd8] sm:$0xf] %vm4971, %v4897
        %5027 = vst.msk [vmem:[%s208 + $0xdc] sm:$0xf] %vm4971, %v4898
        %5028 = vst.msk [vmem:[%s208 + $0xe0] sm:$0xf] %vm4971, %v4899
        %5029 = vst.msk [vmem:[%s208 + $0xe4] sm:$0xf] %vm4971, %v4900
        %5030 = vst.msk [vmem:[%s208 + $0xe8] sm:$0xf] %vm4971, %v4901
        %5031 = vst.msk [vmem:[%s208 + $0xec] sm:$0xf] %vm4971, %v4902
        %5032 = vst.msk [vmem:[%s208 + $0xf0] sm:$0xf] %vm4971, %v4903
        %5033 = vst.msk [vmem:[%s208 + $0xf4] sm:$0xf] %vm4971, %v4904
        %5034 = vst.msk [vmem:[%s208 + $0xf8] sm:$0xf] %vm4971, %v4905
        %5035 = vst.msk [vmem:[%s208 + $0xfc] sm:$0xf] %vm4971, %v4906
        %vm5036 = vcmask 261120
        %v5037 = vsel %vm5036, %v4651, 0.0
        %v5038 = vsel %vm5036, %v4652, 0.0
        %v5039 = vadd.f32 %v5037, %v5038
        %v5040 = vsel %vm5036, %v4653, 0.0
        %v5041 = vadd.f32 %v5039, %v5040
        %v5042 = vsel %vm5036, %v4654, 0.0
        %v5043 = vadd.f32 %v5041, %v5042
        %v5044 = vsel %vm5036, %v4655, 0.0
        %v5045 = vadd.f32 %v5043, %v5044
        %v5046 = vsel %vm5036, %v4656, 0.0
        %v5047 = vadd.f32 %v5045, %v5046
        %v5048 = vsel %vm5036, %v4657, 0.0
        %v5049 = vadd.f32 %v5047, %v5048
        %v5050 = vsel %vm5036, %v4658, 0.0
        %v5051 = vadd.f32 %v5049, %v5050
        %v5052 = vsel %vm5036, %v4659, 0.0
        %v5053 = vadd.f32 %v5051, %v5052
        %v5054 = vsel %vm5036, %v4660, 0.0
        %v5055 = vadd.f32 %v5053, %v5054
        %v5056 = vsel %vm5036, %v4661, 0.0
        %v5057 = vadd.f32 %v5055, %v5056
        %v5058 = vsel %vm5036, %v4662, 0.0
        %v5059 = vadd.f32 %v5057, %v5058
        %v5060 = vsel %vm5036, %v4663, 0.0
        %v5061 = vadd.f32 %v5059, %v5060
        %v5062 = vsel %vm5036, %v4664, 0.0
        %v5063 = vadd.f32 %v5061, %v5062
        %v5064 = vsel %vm5036, %v4665, 0.0
        %v5065 = vadd.f32 %v5063, %v5064
        %v5066 = vsel %vm5036, %v4666, 0.0
        %v5067 = vadd.f32 %v5065, %v5066
        %v5068 = vsel %vm5036, %v4667, 0.0
        %v5069 = vadd.f32 %v5067, %v5068
        %v5070 = vsel %vm5036, %v4668, 0.0
        %v5071 = vadd.f32 %v5069, %v5070
        %v5072 = vsel %vm5036, %v4669, 0.0
        %v5073 = vadd.f32 %v5071, %v5072
        %v5074 = vsel %vm5036, %v4670, 0.0
        %v5075 = vadd.f32 %v5073, %v5074
        %v5076 = vsel %vm5036, %v4671, 0.0
        %v5077 = vadd.f32 %v5075, %v5076
        %v5078 = vsel %vm5036, %v4672, 0.0
        %v5079 = vadd.f32 %v5077, %v5078
        %v5080 = vsel %vm5036, %v4673, 0.0
        %v5081 = vadd.f32 %v5079, %v5080
        %v5082 = vsel %vm5036, %v4674, 0.0
        %v5083 = vadd.f32 %v5081, %v5082
        %v5084 = vsel %vm5036, %v4675, 0.0
        %v5085 = vadd.f32 %v5083, %v5084
        %v5086 = vsel %vm5036, %v4676, 0.0
        %v5087 = vadd.f32 %v5085, %v5086
        %v5088 = vsel %vm5036, %v4677, 0.0
        %v5089 = vadd.f32 %v5087, %v5088
        %v5090 = vsel %vm5036, %v4678, 0.0
        %v5091 = vadd.f32 %v5089, %v5090
        %v5092 = vsel %vm5036, %v4679, 0.0
        %v5093 = vadd.f32 %v5091, %v5092
        %v5094 = vsel %vm5036, %v4680, 0.0
        %v5095 = vadd.f32 %v5093, %v5094
        %v5096 = vsel %vm5036, %v4681, 0.0
        %v5097 = vadd.f32 %v5095, %v5096
        %v5098 = vsel %vm5036, %v4682, 0.0
        %v5099 = vadd.f32 %v5097, %v5098
        %v5100 = vsel %vm5036, %v4683, 0.0
        %v5101 = vadd.f32 %v5099, %v5100
        %v5102 = vsel %vm5036, %v4684, 0.0
        %v5103 = vadd.f32 %v5101, %v5102
        %v5104 = vsel %vm5036, %v4685, 0.0
        %v5105 = vadd.f32 %v5103, %v5104
        %v5106 = vsel %vm5036, %v4686, 0.0
        %v5107 = vadd.f32 %v5105, %v5106
        %v5108 = vsel %vm5036, %v4687, 0.0
        %v5109 = vadd.f32 %v5107, %v5108
        %v5110 = vsel %vm5036, %v4688, 0.0
        %v5111 = vadd.f32 %v5109, %v5110
        %v5112 = vsel %vm5036, %v4689, 0.0
        %v5113 = vadd.f32 %v5111, %v5112
        %v5114 = vsel %vm5036, %v4690, 0.0
        %v5115 = vadd.f32 %v5113, %v5114
        %v5116 = vsel %vm5036, %v4691, 0.0
        %v5117 = vadd.f32 %v5115, %v5116
        %v5118 = vsel %vm5036, %v4692, 0.0
        %v5119 = vadd.f32 %v5117, %v5118
        %v5120 = vsel %vm5036, %v4693, 0.0
        %v5121 = vadd.f32 %v5119, %v5120
        %v5122 = vsel %vm5036, %v4694, 0.0
        %v5123 = vadd.f32 %v5121, %v5122
        %v5124 = vsel %vm5036, %v4695, 0.0
        %v5125 = vadd.f32 %v5123, %v5124
        %v5126 = vsel %vm5036, %v4696, 0.0
        %v5127 = vadd.f32 %v5125, %v5126
        %v5128 = vsel %vm5036, %v4697, 0.0
        %v5129 = vadd.f32 %v5127, %v5128
        %v5130 = vsel %vm5036, %v4698, 0.0
        %v5131 = vadd.f32 %v5129, %v5130
        %v5132 = vsel %vm5036, %v4699, 0.0
        %v5133 = vadd.f32 %v5131, %v5132
        %v5134 = vsel %vm5036, %v4700, 0.0
        %v5135 = vadd.f32 %v5133, %v5134
        %v5136 = vsel %vm5036, %v4701, 0.0
        %v5137 = vadd.f32 %v5135, %v5136
        %v5138 = vsel %vm5036, %v4702, 0.0
        %v5139 = vadd.f32 %v5137, %v5138
        %v5140 = vsel %vm5036, %v4703, 0.0
        %v5141 = vadd.f32 %v5139, %v5140
        %v5142 = vsel %vm5036, %v4704, 0.0
        %v5143 = vadd.f32 %v5141, %v5142
        %v5144 = vsel %vm5036, %v4705, 0.0
        %v5145 = vadd.f32 %v5143, %v5144
        %v5146 = vsel %vm5036, %v4706, 0.0
        %v5147 = vadd.f32 %v5145, %v5146
        %v5148 = vsel %vm5036, %v4707, 0.0
        %v5149 = vadd.f32 %v5147, %v5148
        %v5150 = vsel %vm5036, %v4708, 0.0
        %v5151 = vadd.f32 %v5149, %v5150
        %v5152 = vsel %vm5036, %v4709, 0.0
        %v5153 = vadd.f32 %v5151, %v5152
        %v5154 = vsel %vm5036, %v4710, 0.0
        %v5155 = vadd.f32 %v5153, %v5154
        %v5156 = vsel %vm5036, %v4711, 0.0
        %v5157 = vadd.f32 %v5155, %v5156
        %v5158 = vsel %vm5036, %v4712, 0.0
        %v5159 = vadd.f32 %v5157, %v5158
        %v5160 = vsel %vm5036, %v4713, 0.0
        %v5161 = vadd.f32 %v5159, %v5160
        %v5162 = vsel %vm5036, %v4714, 0.0
        %v5163 = vadd.f32 %v5161, %v5162
        %v5164 = vrot.slane %v5163, 4
        %v5165 = vadd.f32 %v5163, %v5164
        %v5166 = vrot.slane %v5165, 2
        %v5167 = vadd.f32 %v5165, %v5166
        %v5168 = vrot.slane %v5167, 1
        %v5169 = vadd.f32 %v5167, %v5168
        %vm5170 = vcmask 253952
        %5171 = vst.msk [vmem:[%s198] sm:$0x1] %vm5170, %v5169
        %v5172 = vmul.f32 %v4651, %v4651
        %v5173 = vmul.f32 %v4652, %v4652
        %v5174 = vmul.f32 %v4653, %v4653
        %v5175 = vmul.f32 %v4654, %v4654
        %v5176 = vmul.f32 %v4655, %v4655
        %v5177 = vmul.f32 %v4656, %v4656
        %v5178 = vmul.f32 %v4657, %v4657
        %v5179 = vmul.f32 %v4658, %v4658
        %v5180 = vmul.f32 %v4659, %v4659
        %v5181 = vmul.f32 %v4660, %v4660
        %v5182 = vmul.f32 %v4661, %v4661
        %v5183 = vmul.f32 %v4662, %v4662
        %v5184 = vmul.f32 %v4663, %v4663
        %v5185 = vmul.f32 %v4664, %v4664
        %v5186 = vmul.f32 %v4665, %v4665
        %v5187 = vmul.f32 %v4666, %v4666
        %v5188 = vmul.f32 %v4667, %v4667
        %v5189 = vmul.f32 %v4668, %v4668
        %v5190 = vmul.f32 %v4669, %v4669
        %v5191 = vmul.f32 %v4670, %v4670
        %v5192 = vmul.f32 %v4671, %v4671
        %v5193 = vmul.f32 %v4672, %v4672
        %v5194 = vmul.f32 %v4673, %v4673
        %v5195 = vmul.f32 %v4674, %v4674
        %v5196 = vmul.f32 %v4675, %v4675
        %v5197 = vmul.f32 %v4676, %v4676
        %v5198 = vmul.f32 %v4677, %v4677
        %v5199 = vmul.f32 %v4678, %v4678
        %v5200 = vmul.f32 %v4679, %v4679
        %v5201 = vmul.f32 %v4680, %v4680
        %v5202 = vmul.f32 %v4681, %v4681
        %v5203 = vmul.f32 %v4682, %v4682
        %v5204 = vmul.f32 %v4683, %v4683
        %v5205 = vmul.f32 %v4684, %v4684
        %v5206 = vmul.f32 %v4685, %v4685
        %v5207 = vmul.f32 %v4686, %v4686
        %v5208 = vmul.f32 %v4687, %v4687
        %v5209 = vmul.f32 %v4688, %v4688
        %v5210 = vmul.f32 %v4689, %v4689
        %v5211 = vmul.f32 %v4690, %v4690
        %v5212 = vmul.f32 %v4691, %v4691
        %v5213 = vmul.f32 %v4692, %v4692
        %v5214 = vmul.f32 %v4693, %v4693
        %v5215 = vmul.f32 %v4694, %v4694
        %v5216 = vmul.f32 %v4695, %v4695
        %v5217 = vmul.f32 %v4696, %v4696
        %v5218 = vmul.f32 %v4697, %v4697
        %v5219 = vmul.f32 %v4698, %v4698
        %v5220 = vmul.f32 %v4699, %v4699
        %v5221 = vmul.f32 %v4700, %v4700
        %v5222 = vmul.f32 %v4701, %v4701
        %v5223 = vmul.f32 %v4702, %v4702
        %v5224 = vmul.f32 %v4703, %v4703
        %v5225 = vmul.f32 %v4704, %v4704
        %v5226 = vmul.f32 %v4705, %v4705
        %v5227 = vmul.f32 %v4706, %v4706
        %v5228 = vmul.f32 %v4707, %v4707
        %v5229 = vmul.f32 %v4708, %v4708
        %v5230 = vmul.f32 %v4709, %v4709
        %v5231 = vmul.f32 %v4710, %v4710
        %v5232 = vmul.f32 %v4711, %v4711
        %v5233 = vmul.f32 %v4712, %v4712
        %v5234 = vmul.f32 %v4713, %v4713
        %v5235 = vmul.f32 %v4714, %v4714
        %v5236 = vsel %vm5036, %v5172, 0.0
        %v5237 = vsel %vm5036, %v5173, 0.0
        %v5238 = vadd.f32 %v5236, %v5237
        %v5239 = vsel %vm5036, %v5174, 0.0
        %v5240 = vadd.f32 %v5238, %v5239
        %v5241 = vsel %vm5036, %v5175, 0.0
        %v5242 = vadd.f32 %v5240, %v5241
        %v5243 = vsel %vm5036, %v5176, 0.0
        %v5244 = vadd.f32 %v5242, %v5243
        %v5245 = vsel %vm5036, %v5177, 0.0
        %v5246 = vadd.f32 %v5244, %v5245
        %v5247 = vsel %vm5036, %v5178, 0.0
        %v5248 = vadd.f32 %v5246, %v5247
        %v5249 = vsel %vm5036, %v5179, 0.0
        %v5250 = vadd.f32 %v5248, %v5249
        %v5251 = vsel %vm5036, %v5180, 0.0
        %v5252 = vadd.f32 %v5250, %v5251
        %v5253 = vsel %vm5036, %v5181, 0.0
        %v5254 = vadd.f32 %v5252, %v5253
        %v5255 = vsel %vm5036, %v5182, 0.0
        %v5256 = vadd.f32 %v5254, %v5255
        %v5257 = vsel %vm5036, %v5183, 0.0
        %v5258 = vadd.f32 %v5256, %v5257
        %v5259 = vsel %vm5036, %v5184, 0.0
        %v5260 = vadd.f32 %v5258, %v5259
        %v5261 = vsel %vm5036, %v5185, 0.0
        %v5262 = vadd.f32 %v5260, %v5261
        %v5263 = vsel %vm5036, %v5186, 0.0
        %v5264 = vadd.f32 %v5262, %v5263
        %v5265 = vsel %vm5036, %v5187, 0.0
        %v5266 = vadd.f32 %v5264, %v5265
        %v5267 = vsel %vm5036, %v5188, 0.0
        %v5268 = vadd.f32 %v5266, %v5267
        %v5269 = vsel %vm5036, %v5189, 0.0
        %v5270 = vadd.f32 %v5268, %v5269
        %v5271 = vsel %vm5036, %v5190, 0.0
        %v5272 = vadd.f32 %v5270, %v5271
        %v5273 = vsel %vm5036, %v5191, 0.0
        %v5274 = vadd.f32 %v5272, %v5273
        %v5275 = vsel %vm5036, %v5192, 0.0
        %v5276 = vadd.f32 %v5274, %v5275
        %v5277 = vsel %vm5036, %v5193, 0.0
        %v5278 = vadd.f32 %v5276, %v5277
        %v5279 = vsel %vm5036, %v5194, 0.0
        %v5280 = vadd.f32 %v5278, %v5279
        %v5281 = vsel %vm5036, %v5195, 0.0
        %v5282 = vadd.f32 %v5280, %v5281
        %v5283 = vsel %vm5036, %v5196, 0.0
        %v5284 = vadd.f32 %v5282, %v5283
        %v5285 = vsel %vm5036, %v5197, 0.0
        %v5286 = vadd.f32 %v5284, %v5285
        %v5287 = vsel %vm5036, %v5198, 0.0
        %v5288 = vadd.f32 %v5286, %v5287
        %v5289 = vsel %vm5036, %v5199, 0.0
        %v5290 = vadd.f32 %v5288, %v5289
        %v5291 = vsel %vm5036, %v5200, 0.0
        %v5292 = vadd.f32 %v5290, %v5291
        %v5293 = vsel %vm5036, %v5201, 0.0
        %v5294 = vadd.f32 %v5292, %v5293
        %v5295 = vsel %vm5036, %v5202, 0.0
        %v5296 = vadd.f32 %v5294, %v5295
        %v5297 = vsel %vm5036, %v5203, 0.0
        %v5298 = vadd.f32 %v5296, %v5297
        %v5299 = vsel %vm5036, %v5204, 0.0
        %v5300 = vadd.f32 %v5298, %v5299
        %v5301 = vsel %vm5036, %v5205, 0.0
        %v5302 = vadd.f32 %v5300, %v5301
        %v5303 = vsel %vm5036, %v5206, 0.0
        %v5304 = vadd.f32 %v5302, %v5303
        %v5305 = vsel %vm5036, %v5207, 0.0
        %v5306 = vadd.f32 %v5304, %v5305
        %v5307 = vsel %vm5036, %v5208, 0.0
        %v5308 = vadd.f32 %v5306, %v5307
        %v5309 = vsel %vm5036, %v5209, 0.0
        %v5310 = vadd.f32 %v5308, %v5309
        %v5311 = vsel %vm5036, %v5210, 0.0
        %v5312 = vadd.f32 %v5310, %v5311
        %v5313 = vsel %vm5036, %v5211, 0.0
        %v5314 = vadd.f32 %v5312, %v5313
        %v5315 = vsel %vm5036, %v5212, 0.0
        %v5316 = vadd.f32 %v5314, %v5315
        %v5317 = vsel %vm5036, %v5213, 0.0
        %v5318 = vadd.f32 %v5316, %v5317
        %v5319 = vsel %vm5036, %v5214, 0.0
        %v5320 = vadd.f32 %v5318, %v5319
        %v5321 = vsel %vm5036, %v5215, 0.0
        %v5322 = vadd.f32 %v5320, %v5321
        %v5323 = vsel %vm5036, %v5216, 0.0
        %v5324 = vadd.f32 %v5322, %v5323
        %v5325 = vsel %vm5036, %v5217, 0.0
        %v5326 = vadd.f32 %v5324, %v5325
        %v5327 = vsel %vm5036, %v5218, 0.0
        %v5328 = vadd.f32 %v5326, %v5327
        %v5329 = vsel %vm5036, %v5219, 0.0
        %v5330 = vadd.f32 %v5328, %v5329
        %v5331 = vsel %vm5036, %v5220, 0.0
        %v5332 = vadd.f32 %v5330, %v5331
        %v5333 = vsel %vm5036, %v5221, 0.0
        %v5334 = vadd.f32 %v5332, %v5333
        %v5335 = vsel %vm5036, %v5222, 0.0
        %v5336 = vadd.f32 %v5334, %v5335
        %v5337 = vsel %vm5036, %v5223, 0.0
        %v5338 = vadd.f32 %v5336, %v5337
        %v5339 = vsel %vm5036, %v5224, 0.0
        %v5340 = vadd.f32 %v5338, %v5339
        %v5341 = vsel %vm5036, %v5225, 0.0
        %v5342 = vadd.f32 %v5340, %v5341
        %v5343 = vsel %vm5036, %v5226, 0.0
        %v5344 = vadd.f32 %v5342, %v5343
        %v5345 = vsel %vm5036, %v5227, 0.0
        %v5346 = vadd.f32 %v5344, %v5345
        %v5347 = vsel %vm5036, %v5228, 0.0
        %v5348 = vadd.f32 %v5346, %v5347
        %v5349 = vsel %vm5036, %v5229, 0.0
        %v5350 = vadd.f32 %v5348, %v5349
        %v5351 = vsel %vm5036, %v5230, 0.0
        %v5352 = vadd.f32 %v5350, %v5351
        %v5353 = vsel %vm5036, %v5231, 0.0
        %v5354 = vadd.f32 %v5352, %v5353
        %v5355 = vsel %vm5036, %v5232, 0.0
        %v5356 = vadd.f32 %v5354, %v5355
        %v5357 = vsel %vm5036, %v5233, 0.0
        %v5358 = vadd.f32 %v5356, %v5357
        %v5359 = vsel %vm5036, %v5234, 0.0
        %v5360 = vadd.f32 %v5358, %v5359
        %v5361 = vsel %vm5036, %v5235, 0.0
        %v5362 = vadd.f32 %v5360, %v5361
        %v5363 = vrot.slane %v5362, 4
        %v5364 = vadd.f32 %v5362, %v5363
        %v5365 = vrot.slane %v5364, 2
        %v5366 = vadd.f32 %v5364, %v5365
        %v5367 = vrot.slane %v5366, 1
        %v5368 = vadd.f32 %v5366, %v5367
        %5369 = vst.msk [vmem:[%s198 + $0x1] sm:$0x1] %vm5170, %v5368
        %p5370 = scmp.lt.s32.totalorder %s19, 1
        %s5371 = scalar_select %p5370, %s19, 1
        %s5372 = smul.addr %s5371, 64
        %s5373 = smul.addr %s5372, 4
        %s5374 = scalar_lea.vmem %s3, %s5373
        %s5375 = sand.u32 %s121, 1
        %s5376 = scalar_lea.sflag [#allocation3], %s5375
        %s5377 = sand.u32 %s121, 1
        %s5378 = smul.addr %s5377, 2
        %s5379 = scalar_lea.vmem [#allocation2], %s5378
        // Predicated region
        $region33: #{tpu_custom_call.1} parent=31 // pred_check
          %p5380 = pneg %p105
        $region34: #{tpu_custom_call.1} parent=31 // pred_check_branch
          %5382 = sbr.rel (%p5380) target = $region36
        $region35: #{tpu_custom_call.1} parent=31 // pred_region
          _
        $region36: #{tpu_custom_call.1} parent=31 // pred_fallthru
          _
        // Predicated region
        $region37: #{tpu_custom_call.1} parent=31 // pred_check
          %p5383 = pneg %p131
        $region38: #{tpu_custom_call.1} parent=31 // pred_check_branch
          %5385 = sbr.rel (%p5383) target = $region40
        $region39: #{tpu_custom_call.1} parent=31 // pred_region
          %s5387 = ssub.s32 32, 32
          %5388 = vsyncadd %s5376, %s5387
          %s5389 = smul.addr %s19, 32
          %s5390 = scalar_lea.hbm %s4, %s5389
          %s5392 = sshll.u32 %s5379, 4
          %s5393 = int_to_ptr.vmem [resolvable:$true] %s5392
          %5395 = dma.vmem_to_hbm [thread:$0]  %s5393, 32, %s5390, %s5376
        $region40: #{tpu_custom_call.1} parent=31 // pred_fallthru
          _
      $region32: #{tpu_custom_call.1} parent=5 // pred_fallthru
        _
      %p5396 = scmp.le.s32.totalorder 2, %s14
      // Predicated region
      $region41: #{tpu_custom_call.1} parent=5 // pred_check
        %p5397 = pneg %p5396
      $region42: #{tpu_custom_call.1} parent=5 // pred_check_branch
        %5399 = sbr.rel (%p5397) target = $region44
      $region43: #{tpu_custom_call.1} parent=5 // pred_region
        %s5400 = ssub.s32 %s14, 2
        // Predicated region
        $region45: #{tpu_custom_call.1} parent=43 // pred_check
          %p5401 = pneg %p111
        $region46: #{tpu_custom_call.1} parent=43 // pred_check_branch
          %5403 = sbr.rel (%p5401) target = $region48
        $region47: #{tpu_custom_call.1} parent=43 // pred_region
          %p5404 = scmp.lt.s32.totalorder %s20, 1
          %s5405 = scalar_select %p5404, %s20, 1
          %s5406 = smul.addr %s5405, 64
          %s5407 = smul.addr %s5406, 4
          %s5408 = scalar_lea.vmem %s3, %s5407
        $region48: #{tpu_custom_call.1} parent=43 // pred_fallthru
          _
        // Predicated region
        $region49: #{tpu_custom_call.1} parent=43 // pred_check
          %p5409 = pneg %p137
        $region50: #{tpu_custom_call.1} parent=43 // pred_check_branch
          %5411 = sbr.rel (%p5409) target = $region52
        $region51: #{tpu_custom_call.1} parent=43 // pred_region
          %s5412 = sand.u32 %s122, 1
          %s5413 = scalar_lea.sflag [#allocation3], %s5412
          %s5414 = sand.u32 %s122, 1
          %s5415 = smul.addr %s5414, 2
          %s5416 = scalar_lea.vmem [#allocation2], %s5415
          %5417 = dma.done %s5413, 32
        $region52: #{tpu_custom_call.1} parent=43 // pred_fallthru
          _
      $region44: #{tpu_custom_call.1} parent=5 // pred_fallthru
        _
    $region6: #{tpu_custom_call.1} parent=1 // loop_footer
      %s18 = sadd.s32 1, %s14
    $region7: #{tpu_custom_call.1} parent=1 // loop_footer_branch
      %13 = sbr.rel target = $region3
    $region8: #{tpu_custom_call.1} parent=1 // loop_exit
      _
    %5418 = vsyncpa [#allocation3], 1
    %s5419 = scalar_lea.sflag [#allocation3], 1
    %5420 = vsyncpa %s5419, 1

</llo_original>
